<compile_context>
chip_gen: v7x
topology: tpu7x:2x2x1
jax: 0.10.0
libtpu: 0.0.40
codegen_flags: <defaults>
</compile_context>

<pallas_src>
import functools
import numpy as np
import jax
import jax.numpy as jnp
from jax.experimental import pallas as pl
from jax.experimental.pallas import tpu as pltpu


# ----------------------------- Pallas kernels -----------------------------

def _attn_block_kernel(x_ref, m_ref, wqkv_ref, bqkv_ref, wo_ref, bo_ref,
                       g_ref, beta_ref, o_ref, *, n_head, scale):
    """Fused attention block for ONE batch element.

    x   : (S, D) input (also the residual)
    m   : (S, S) float mask, 1.0 == masked key position
    out : LayerNorm(x + MHA(x) @ Wo + bo), shape (S, D)
    """
    S, D = x_ref.shape
    Dh = D // n_head
    x = x_ref[...].astype(jnp.float32)

    # fused Q/K/V projection against the concatenated (D, 3D) weight
    qkv = jnp.dot(x, wqkv_ref[...], preferred_element_type=jnp.float32)
    qkv = qkv + bqkv_ref[...].astype(jnp.float32)
    q = qkv[:, :D]
    k = qkv[:, D:2 * D]
    v = qkv[:, 2 * D:]

    masked = m_ref[...] > 0.5  # (S, S) bool

    ctxs = []
    for h in range(n_head):  # static unroll over heads (lane sub-slices)
        sl = slice(h * Dh, (h + 1) * Dh)
        qh, kh, vh = q[:, sl], k[:, sl], v[:, sl]
        # contract on last dims -> no explicit transpose of K
        s = jax.lax.dot_general(qh, kh, (((1,), (1,)), ((), ())),
                                preferred_element_type=jnp.float32) * scale
        # large finite negative: fully-masked rows give a uniform (finite) softmax
        s = jnp.where(masked, -1e30, s)
        s = s - jnp.max(s, axis=-1, keepdims=True)
        p = jnp.exp(s)
        p = p * pl.reciprocal(jnp.sum(p, axis=-1, keepdims=True), approx=True)
        ctxs.append(jnp.dot(p, vh, preferred_element_type=jnp.float32))
    ctx = jnp.concatenate(ctxs, axis=-1)  # (S, D) lane-dense, heads packed

    # output projection + residual + LayerNorm (dropout == identity)
    y = jnp.dot(ctx, wo_ref[...], preferred_element_type=jnp.float32)
    y = y + bo_ref[...].astype(jnp.float32)
    s_ = x + y
    mean = jnp.mean(s_, axis=-1, keepdims=True)
    var = jnp.mean((s_ - mean) ** 2, axis=-1, keepdims=True)
    norm = (s_ - mean) * jax.lax.rsqrt(var + 1e-5)
    o_ref[...] = (norm * g_ref[...] + beta_ref[...]).astype(o_ref.dtype)


def _ffn_kernel(x_ref, w1_ref, b1_ref, w2_ref, b2_ref, g_ref, beta_ref, o_ref):
    """Fused FFN: LayerNorm(x + (relu(x @ W1 + b1) @ W2 + b2)).

    The (tm, 4D) hidden activation lives only in VMEM/vregs.
    """
    x = x_ref[...].astype(jnp.float32)
    h = jnp.dot(x, w1_ref[...], preferred_element_type=jnp.float32)
    h = jnp.maximum(h + b1_ref[...].astype(jnp.float32), 0.0)
    y = jnp.dot(h, w2_ref[...], preferred_element_type=jnp.float32)
    y = y + b2_ref[...].astype(jnp.float32)
    s = x + y
    mean = jnp.mean(s, axis=-1, keepdims=True)
    var = jnp.mean((s - mean) ** 2, axis=-1, keepdims=True)
    norm = (s - mean) * jax.lax.rsqrt(var + 1e-5)
    o_ref[...] = (norm * g_ref[...] + beta_ref[...]).astype(o_ref.dtype)


# ----------------------------- kernel wrappers -----------------------------

def _pick_m_tile(M, target=256):
    """Row-tile size: multiple of 8 (sublane) that divides M, or M itself."""
    if M <= target:
        return M
    for t in (target, 128, 64, 32, 16, 8):
        if M % t == 0:
            return t
    return M


def attention_block(x, mask_f, mp, n_head):
    """x: (B, S, D); mask_f: (B, S, S) float; returns LayerNorm(x + MHA(x))."""
    B, S, D = x.shape
    Dh = D // n_head
    scale = 1.0 / (float(np.sqrt(Dh)) + 1e-8)  # matches torch: / (sqrt(dk)+1e-8)
    kern = functools.partial(_attn_block_kernel, n_head=n_head, scale=scale)
    return pl.pallas_call(
        kern,
        out_shape=jax.ShapeDtypeStruct((B, S, D), x.dtype),
        grid=(B,),
        in_specs=[
            pl.BlockSpec((None, S, D), lambda b: (b, 0, 0)),     # x (residual)
            pl.BlockSpec((None, S, S), lambda b: (b, 0, 0)),     # mask
            pl.BlockSpec((D, 3 * D), lambda b: (0, 0)),          # Wqkv
            pl.BlockSpec((1, 3 * D), lambda b: (0, 0)),          # bqkv
            pl.BlockSpec((D, D), lambda b: (0, 0)),              # Wo
            pl.BlockSpec((1, D), lambda b: (0, 0)),              # bo
            pl.BlockSpec((1, D), lambda b: (0, 0)),              # ln gamma
            pl.BlockSpec((1, D), lambda b: (0, 0)),              # ln beta
        ],
        out_specs=pl.BlockSpec((None, S, D), lambda b: (b, 0, 0)),
        compiler_params=pltpu.CompilerParams(
            dimension_semantics=("parallel",)),
    )(x, mask_f, mp["wqkv_w"], mp["wqkv_b"], mp["wo_w"], mp["wo_b"],
      mp["ln_g"], mp["ln_b"])


def ffn_block(x2d, p):
    """x2d: (B*S, D); returns LayerNorm(x + FFN(x))."""
    M, D = x2d.shape
    Dff = p["w1"].shape[1]
    tm = _pick_m_tile(M)
    return pl.pallas_call(
        _ffn_kernel,
        out_shape=jax.ShapeDtypeStruct((M, D), x2d.dtype),
        grid=(pl.cdiv(M, tm),),
        in_specs=[
            pl.BlockSpec((tm, D), lambda i: (i, 0)),
            pl.BlockSpec((D, Dff), lambda i: (0, 0)),
            pl.BlockSpec((1, Dff), lambda i: (0, 0)),
            pl.BlockSpec((Dff, D), lambda i: (0, 0)),
            pl.BlockSpec((1, D), lambda i: (0, 0)),
            pl.BlockSpec((1, D), lambda i: (0, 0)),
            pl.BlockSpec((1, D), lambda i: (0, 0)),
        ],
        out_specs=pl.BlockSpec((tm, D), lambda i: (i, 0)),
        compiler_params=pltpu.CompilerParams(
            dimension_semantics=("parallel",)),
    )(x2d, p["w1"], p["b1"], p["w2"], p["b2"], p["ln_g"], p["ln_b"])


# ----------------------------- model glue (plain JAX) -----------------------------

def encoder_layer_fwd(p, xz, mask_f, n_head):
    B, S, D = xz.shape
    attn_out = attention_block(xz, mask_f, p["mh"], n_head)         # (B, S, D)
    out = ffn_block(attn_out.reshape(B * S, D), p["ffn"])           # (B*S, D)
    return out.reshape(B, S, D)


def encoder_fwd(params, xz, mask, *, n_head, training=False):
    # `training` only controls dropout in the reference; dropout is identity here.
    B, S, D = xz.shape
    mask_f = mask.astype(jnp.float32).reshape(B, S, S)   # (B,1,S,S) bool -> (B,S,S) f32
    for lp in params["layers"]:
        xz = encoder_layer_fwd(lp, xz, mask_f, n_head)
    return xz


# ----------------------------- deterministic parameter init -----------------------------

def init_linear(key, din, dout):
    kw, kb = jax.random.split(key)
    lim = 1.0 / np.sqrt(din)
    w = jax.random.uniform(kw, (din, dout), jnp.float32, -lim, lim)
    b = jax.random.uniform(kb, (1, dout), jnp.float32, -lim, lim)
    return w, b


def init_layer(key, D):
    ks = jax.random.split(key, 6)
    wq, bq = init_linear(ks[0], D, D)
    wk, bk = init_linear(ks[1], D, D)
    wv, bv = init_linear(ks[2], D, D)
    wo, bo = init_linear(ks[3], D, D)
    w1, b1 = init_linear(ks[4], D, 4 * D)
    w2, b2 = init_linear(ks[5], 4 * D, D)
    return {
        "mh": {
            "wqkv_w": jnp.concatenate([wq, wk, wv], axis=1),   # (D, 3D)
            "wqkv_b": jnp.concatenate([bq, bk, bv], axis=1),   # (1, 3D)
            "wo_w": wo, "wo_b": bo,
            "ln_g": jnp.ones((1, D), jnp.float32),
            "ln_b": jnp.zeros((1, D), jnp.float32),
        },
        "ffn": {
            "w1": w1, "b1": b1, "w2": w2, "b2": b2,
            "ln_g": jnp.ones((1, D), jnp.float32),
            "ln_b": jnp.zeros((1, D), jnp.float32),
        },
    }


def init_params(key, n_layer, D):
    keys = jax.random.split(key, n_layer)
    return {"layers": [init_layer(k, D) for k in keys]}


# ----------------------------- main -----------------------------

if __name__ == "__main__":
    n_head, emb_dim, n_layer = 4, 32, 2
    B, S = 2, 8

    key = jax.random.PRNGKey(0)
    kp, kx = jax.random.split(key)
    params = init_params(kp, n_layer, emb_dim)

    xz = jax.random.normal(kx, (B, S, emb_dim), jnp.float32)

    # padding mask (True == masked key position), shape (B, 1, S, S) like torch
    lengths = jnp.array([S, S - 2], dtype=jnp.int32)
    key_is_pad = jnp.arange(S)[None, :] >= lengths[:, None]            # (B, S)
    mask = jnp.broadcast_to(key_is_pad[:, None, None, :], (B, 1, S, S))

    fwd = jax.jit(functools.partial(encoder_fwd, n_head=n_head, training=False))
    out = fwd(params, xz, mask)
    jax.block_until_ready(out)

    assert out.shape == (B, S, emb_dim)
    assert bool(jnp.all(jnp.isfinite(out)))
    print("KERNEL_OK")
</pallas_src>

<mosaic_0001>
module attributes {stable_mosaic.version = 11 : i64} {
  func.func @_ffn_kernel(%arg0: i32, %arg1: memref<16x32xf32, #tpu.memory_space<vmem>>, %arg2: memref<32x128xf32, #tpu.memory_space<vmem>>, %arg3: memref<1x128xf32, #tpu.memory_space<vmem>>, %arg4: memref<128x32xf32, #tpu.memory_space<vmem>>, %arg5: memref<1x32xf32, #tpu.memory_space<vmem>>, %arg6: memref<1x32xf32, #tpu.memory_space<vmem>>, %arg7: memref<1x32xf32, #tpu.memory_space<vmem>>, %arg8: memref<16x32xf32, #tpu.memory_space<vmem>>) attributes {dimension_semantics = [#tpu.dimension_semantics<parallel>], iteration_bounds = array<i64: 1>, scalar_prefetch = 0 : i64, scratch_operands = 0 : i64, tpu.core_type = #tpu.core_type<tc>, window_params = [{transform_indices = @transform_0, window_bounds = array<i64: 16, 32>}, {pipeline_mode = #tpu.pipeline_mode<synchronous>, transform_indices = @transform_1, window_bounds = array<i64: 32, 128>}, {pipeline_mode = #tpu.pipeline_mode<synchronous>, transform_indices = @transform_2, window_bounds = array<i64: 1, 128>}, {pipeline_mode = #tpu.pipeline_mode<synchronous>, transform_indices = @transform_3, window_bounds = array<i64: 128, 32>}, {pipeline_mode = #tpu.pipeline_mode<synchronous>, transform_indices = @transform_4, window_bounds = array<i64: 1, 32>}, {pipeline_mode = #tpu.pipeline_mode<synchronous>, transform_indices = @transform_5, window_bounds = array<i64: 1, 32>}, {pipeline_mode = #tpu.pipeline_mode<synchronous>, transform_indices = @transform_6, window_bounds = array<i64: 1, 32>}, {transform_indices = @transform_7, window_bounds = array<i64: 16, 32>}]} {
    %c0 = arith.constant 0 : index
    %c0_0 = arith.constant 0 : index
    %0 = vector.load %arg1[%c0, %c0_0] : memref<16x32xf32, #tpu.memory_space<vmem>>, vector<16x32xf32>
    %c0_1 = arith.constant 0 : index
    %c0_2 = arith.constant 0 : index
    %1 = vector.load %arg2[%c0_1, %c0_2] : memref<32x128xf32, #tpu.memory_space<vmem>>, vector<32x128xf32>
    %cst = arith.constant dense<0.000000e+00> : vector<16x128xf32>
    %2 = tpu.matmul %0, %1, %cst {dimension_numbers = #tpu.dot_dimension_numbers<[1], [0], [0], [1], [0, 0, 1, 1], [], []>} : vector<16x32xf32>, vector<32x128xf32>, vector<16x128xf32> -> vector<16x128xf32>
    %c0_3 = arith.constant 0 : index
    %c0_4 = arith.constant 0 : index
    %3 = vector.load %arg3[%c0_3, %c0_4] : memref<1x128xf32, #tpu.memory_space<vmem>>, vector<1x128xf32>
    %4 = vector.broadcast %3 : vector<1x128xf32> to vector<16x128xf32>
    %5 = arith.addf %2, %4 : vector<16x128xf32>
    %cst_5 = arith.constant 0.000000e+00 : f32
    %6 = vector.broadcast %cst_5 : f32 to vector<16x128xf32>
    %7 = arith.maximumf %5, %6 : vector<16x128xf32>
    %c0_6 = arith.constant 0 : index
    %c0_7 = arith.constant 0 : index
    %8 = vector.load %arg4[%c0_6, %c0_7] : memref<128x32xf32, #tpu.memory_space<vmem>>, vector<128x32xf32>
    %cst_8 = arith.constant dense<0.000000e+00> : vector<16x32xf32>
    %9 = tpu.matmul %7, %8, %cst_8 {dimension_numbers = #tpu.dot_dimension_numbers<[1], [0], [0], [1], [0, 0, 1, 1], [], []>} : vector<16x128xf32>, vector<128x32xf32>, vector<16x32xf32> -> vector<16x32xf32>
    %c0_9 = arith.constant 0 : index
    %c0_10 = arith.constant 0 : index
    %10 = vector.load %arg5[%c0_9, %c0_10] : memref<1x32xf32, #tpu.memory_space<vmem>>, vector<1x32xf32>
    %11 = vector.broadcast %10 : vector<1x32xf32> to vector<16x32xf32>
    %12 = arith.addf %9, %11 : vector<16x32xf32>
    %13 = arith.addf %0, %12 : vector<16x32xf32>
    %cst_11 = arith.constant dense<0.000000e+00> : vector<16xf32>
    %14 = vector.multi_reduction <add>, %13, %cst_11 [1] : vector<16x32xf32> to vector<16xf32>
    %15 = vector.shape_cast %14 : vector<16xf32> to vector<16x1xf32>
    %cst_12 = arith.constant 3.200000e+01 : f32
    %16 = vector.broadcast %cst_12 : f32 to vector<16x1xf32>
    %17 = arith.divf %15, %16 : vector<16x1xf32>
    %18 = vector.broadcast %17 : vector<16x1xf32> to vector<16x32xf32>
    %19 = arith.subf %13, %18 : vector<16x32xf32>
    %20 = arith.mulf %19, %19 : vector<16x32xf32>
    %cst_13 = arith.constant dense<0.000000e+00> : vector<16xf32>
    %21 = vector.multi_reduction <add>, %20, %cst_13 [1] : vector<16x32xf32> to vector<16xf32>
    %22 = vector.shape_cast %21 : vector<16xf32> to vector<16x1xf32>
    %cst_14 = arith.constant 3.200000e+01 : f32
    %23 = vector.broadcast %cst_14 : f32 to vector<16x1xf32>
    %24 = arith.divf %22, %23 : vector<16x1xf32>
    %25 = vector.broadcast %17 : vector<16x1xf32> to vector<16x32xf32>
    %26 = arith.subf %13, %25 : vector<16x32xf32>
    %cst_15 = arith.constant 9.99999974E-6 : f32
    %27 = vector.broadcast %cst_15 : f32 to vector<16x1xf32>
    %28 = arith.addf %24, %27 : vector<16x1xf32>
    %29 = math.rsqrt %28 : vector<16x1xf32>
    %30 = vector.broadcast %29 : vector<16x1xf32> to vector<16x32xf32>
    %31 = arith.mulf %26, %30 : vector<16x32xf32>
    %c0_16 = arith.constant 0 : index
    %c0_17 = arith.constant 0 : index
    %32 = vector.load %arg6[%c0_16, %c0_17] : memref<1x32xf32, #tpu.memory_space<vmem>>, vector<1x32xf32>
    %33 = vector.broadcast %32 : vector<1x32xf32> to vector<16x32xf32>
    %34 = arith.mulf %31, %33 : vector<16x32xf32>
    %c0_18 = arith.constant 0 : index
    %c0_19 = arith.constant 0 : index
    %35 = vector.load %arg7[%c0_18, %c0_19] : memref<1x32xf32, #tpu.memory_space<vmem>>, vector<1x32xf32>
    %36 = vector.broadcast %35 : vector<1x32xf32> to vector<16x32xf32>
    %37 = arith.addf %34, %36 : vector<16x32xf32>
    %c0_20 = arith.constant 0 : index
    %c0_21 = arith.constant 0 : index
    %38 = vector.load %arg8[%c0_20, %c0_21] : memref<16x32xf32, #tpu.memory_space<vmem>>, vector<16x32xf32>
    tpu.vector_store %arg8[%c0_20, %c0_21], %37 {strides = array<i32>} : memref<16x32xf32, #tpu.memory_space<vmem>>, vector<16x32xf32>,
    return
  }
  func.func @transform_0(%arg0: i32) -> (i32, i32) {
    %c0_i32 = arith.constant 0 : i32
    %c0_i32_0 = arith.constant 0 : i32
    return %arg0, %c0_i32 : i32, i32
  }
  func.func @transform_1(%arg0: i32) -> (i32, i32) {
    %c0_i32 = arith.constant 0 : i32
    %c0_i32_0 = arith.constant 0 : i32
    %c0_i32_1 = arith.constant 0 : i32
    return %c0_i32, %c0_i32_0 : i32, i32
  }
  func.func @transform_2(%arg0: i32) -> (i32, i32) {
    %c0_i32 = arith.constant 0 : i32
    %c0_i32_0 = arith.constant 0 : i32
    %c0_i32_1 = arith.constant 0 : i32
    return %c0_i32, %c0_i32_0 : i32, i32
  }
  func.func @transform_3(%arg0: i32) -> (i32, i32) {
    %c0_i32 = arith.constant 0 : i32
    %c0_i32_0 = arith.constant 0 : i32
    %c0_i32_1 = arith.constant 0 : i32
    return %c0_i32, %c0_i32_0 : i32, i32
  }
  func.func @transform_4(%arg0: i32) -> (i32, i32) {
    %c0_i32 = arith.constant 0 : i32
    %c0_i32_0 = arith.constant 0 : i32
    %c0_i32_1 = arith.constant 0 : i32
    return %c0_i32, %c0_i32_0 : i32, i32
  }
  func.func @transform_5(%arg0: i32) -> (i32, i32) {
    %c0_i32 = arith.constant 0 : i32
    %c0_i32_0 = arith.constant 0 : i32
    %c0_i32_1 = arith.constant 0 : i32
    return %c0_i32, %c0_i32_0 : i32, i32
  }
  func.func @transform_6(%arg0: i32) -> (i32, i32) {
    %c0_i32 = arith.constant 0 : i32
    %c0_i32_0 = arith.constant 0 : i32
    %c0_i32_1 = arith.constant 0 : i32
    return %c0_i32, %c0_i32_0 : i32, i32
  }
  func.func @transform_7(%arg0: i32) -> (i32, i32) {
    %c0_i32 = arith.constant 0 : i32
    %c0_i32_0 = arith.constant 0 : i32
    return %arg0, %c0_i32 : i32, i32
  }
}

module attributes {stable_mosaic.version = 11 : i64} {
  func.func @_attn_block_kernel(%arg0: i32, %arg1: memref<1x8x32xf32, #tpu.memory_space<vmem>>, %arg2: memref<1x8x8xf32, #tpu.memory_space<vmem>>, %arg3: memref<32x96xf32, #tpu.memory_space<vmem>>, %arg4: memref<1x96xf32, #tpu.memory_space<vmem>>, %arg5: memref<32x32xf32, #tpu.memory_space<vmem>>, %arg6: memref<1x32xf32, #tpu.memory_space<vmem>>, %arg7: memref<1x32xf32, #tpu.memory_space<vmem>>, %arg8: memref<1x32xf32, #tpu.memory_space<vmem>>, %arg9: memref<1x8x32xf32, #tpu.memory_space<vmem>>) attributes {dimension_semantics = [#tpu.dimension_semantics<parallel>], iteration_bounds = array<i64: 2>, scalar_prefetch = 0 : i64, scratch_operands = 0 : i64, tpu.core_type = #tpu.core_type<tc>, window_params = [{transform_indices = @transform_0, window_bounds = array<i64: 1, 8, 32>}, {transform_indices = @transform_1, window_bounds = array<i64: 1, 8, 8>}, {pipeline_mode = #tpu.pipeline_mode<synchronous>, transform_indices = @transform_2, window_bounds = array<i64: 32, 96>}, {pipeline_mode = #tpu.pipeline_mode<synchronous>, transform_indices = @transform_3, window_bounds = array<i64: 1, 96>}, {pipeline_mode = #tpu.pipeline_mode<synchronous>, transform_indices = @transform_4, window_bounds = array<i64: 32, 32>}, {pipeline_mode = #tpu.pipeline_mode<synchronous>, transform_indices = @transform_5, window_bounds = array<i64: 1, 32>}, {pipeline_mode = #tpu.pipeline_mode<synchronous>, transform_indices = @transform_6, window_bounds = array<i64: 1, 32>}, {pipeline_mode = #tpu.pipeline_mode<synchronous>, transform_indices = @transform_7, window_bounds = array<i64: 1, 32>}, {transform_indices = @transform_8, window_bounds = array<i64: 1, 8, 32>}]} {
    %c0 = arith.constant 0 : index
    %c0_0 = arith.constant 0 : index
    %c0_1 = arith.constant 0 : index
    %0 = vector.load %arg1[%c0, %c0_0, %c0_1] : memref<1x8x32xf32, #tpu.memory_space<vmem>>, vector<1x8x32xf32>
    %1 = vector.shape_cast %0 : vector<1x8x32xf32> to vector<8x32xf32>
    %c0_2 = arith.constant 0 : index
    %c0_3 = arith.constant 0 : index
    %2 = vector.load %arg3[%c0_2, %c0_3] : memref<32x96xf32, #tpu.memory_space<vmem>>, vector<32x96xf32>
    %cst = arith.constant dense<0.000000e+00> : vector<8x96xf32>
    %3 = tpu.matmul %1, %2, %cst {dimension_numbers = #tpu.dot_dimension_numbers<[1], [0], [0], [1], [0, 0, 1, 1], [], []>} : vector<8x32xf32>, vector<32x96xf32>, vector<8x96xf32> -> vector<8x96xf32>
    %c0_4 = arith.constant 0 : index
    %c0_5 = arith.constant 0 : index
    %4 = vector.load %arg4[%c0_4, %c0_5] : memref<1x96xf32, #tpu.memory_space<vmem>>, vector<1x96xf32>
    %5 = vector.broadcast %4 : vector<1x96xf32> to vector<8x96xf32>
    %6 = arith.addf %3, %5 : vector<8x96xf32>
    %7 = vector.extract_strided_slice %6 {offsets = [0, 0], sizes = [8, 32], strides = [1, 1]} : vector<8x96xf32> to vector<8x32xf32>
    %8 = vector.extract_strided_slice %6 {offsets = [0, 32], sizes = [8, 32], strides = [1, 1]} : vector<8x96xf32> to vector<8x32xf32>
    %9 = vector.extract_strided_slice %6 {offsets = [0, 64], sizes = [8, 32], strides = [1, 1]} : vector<8x96xf32> to vector<8x32xf32>
    %c0_6 = arith.constant 0 : index
    %c0_7 = arith.constant 0 : index
    %c0_8 = arith.constant 0 : index
    %10 = vector.load %arg2[%c0_6, %c0_7, %c0_8] : memref<1x8x8xf32, #tpu.memory_space<vmem>>, vector<1x8x8xf32>
    %11 = vector.shape_cast %10 : vector<1x8x8xf32> to vector<8x8xf32>
    %cst_9 = arith.constant 5.000000e-01 : f32
    %12 = vector.broadcast %cst_9 : f32 to vector<8x8xf32>
    %13 = arith.cmpf ogt, %11, %12 : vector<8x8xf32>
    %14 = vector.extract_strided_slice %7 {offsets = [0, 0], sizes = [8, 8], strides = [1, 1]} : vector<8x32xf32> to vector<8x8xf32>
    %15 = vector.extract_strided_slice %8 {offsets = [0, 0], sizes = [8, 8], strides = [1, 1]} : vector<8x32xf32> to vector<8x8xf32>
    %16 = vector.extract_strided_slice %9 {offsets = [0, 0], sizes = [8, 8], strides = [1, 1]} : vector<8x32xf32> to vector<8x8xf32>
    %cst_10 = arith.constant dense<0.000000e+00> : vector<8x8xf32>
    %17 = tpu.matmul %14, %15, %cst_10 {dimension_numbers = #tpu.dot_dimension_numbers<[1], [1], [0], [0], [0, 0, 1, 0], [], []>} : vector<8x8xf32>, vector<8x8xf32>, vector<8x8xf32> -> vector<8x8xf32>
    %cst_11 = arith.constant 0.353553385 : f32
    %18 = vector.broadcast %cst_11 : f32 to vector<8x8xf32>
    %19 = arith.mulf %17, %18 : vector<8x8xf32>
    %cst_12 = arith.constant -1.000000e+30 : f32
    %20 = vector.broadcast %cst_12 : f32 to vector<8x8xf32>
    %21 = arith.select %13, %20, %19 : vector<8x8xi1>, vector<8x8xf32>
    %cst_13 = arith.constant dense<0xFF800000> : vector<8xf32>
    %22 = vector.multi_reduction <maximumf>, %21, %cst_13 [1] : vector<8x8xf32> to vector<8xf32>
    %23 = vector.shape_cast %22 : vector<8xf32> to vector<8x1xf32>
    %24 = vector.broadcast %23 : vector<8x1xf32> to vector<8x8xf32>
    %25 = arith.subf %21, %24 : vector<8x8xf32>
    %26 = math.exp %25 : vector<8x8xf32>
    %cst_14 = arith.constant dense<0.000000e+00> : vector<8xf32>
    %27 = vector.multi_reduction <add>, %26, %cst_14 [1] : vector<8x8xf32> to vector<8xf32>
    %28 = vector.shape_cast %27 : vector<8xf32> to vector<8x1xf32>
    %29 = tpu.reciprocal %28 {approx = true} : vector<8x1xf32> -> vector<8x1xf32>
    %30 = vector.broadcast %29 : vector<8x1xf32> to vector<8x8xf32>
    %31 = arith.mulf %26, %30 : vector<8x8xf32>
    %cst_15 = arith.constant dense<0.000000e+00> : vector<8x8xf32>
    %32 = tpu.matmul %31, %16, %cst_15 {dimension_numbers = #tpu.dot_dimension_numbers<[1], [0], [0], [1], [0, 0, 1, 1], [], []>} : vector<8x8xf32>, vector<8x8xf32>, vector<8x8xf32> -> vector<8x8xf32>
    %33 = vector.extract_strided_slice %7 {offsets = [0, 8], sizes = [8, 8], strides = [1, 1]} : vector<8x32xf32> to vector<8x8xf32>
    %34 = vector.extract_strided_slice %8 {offsets = [0, 8], sizes = [8, 8], strides = [1, 1]} : vector<8x32xf32> to vector<8x8xf32>
    %35 = vector.extract_strided_slice %9 {offsets = [0, 8], sizes = [8, 8], strides = [1, 1]} : vector<8x32xf32> to vector<8x8xf32>
    %cst_16 = arith.constant dense<0.000000e+00> : vector<8x8xf32>
    %36 = tpu.matmul %33, %34, %cst_16 {dimension_numbers = #tpu.dot_dimension_numbers<[1], [1], [0], [0], [0, 0, 1, 0], [], []>} : vector<8x8xf32>, vector<8x8xf32>, vector<8x8xf32> -> vector<8x8xf32>
    %cst_17 = arith.constant 0.353553385 : f32
    %37 = vector.broadcast %cst_17 : f32 to vector<8x8xf32>
    %38 = arith.mulf %36, %37 : vector<8x8xf32>
    %cst_18 = arith.constant -1.000000e+30 : f32
    %39 = vector.broadcast %cst_18 : f32 to vector<8x8xf32>
    %40 = arith.select %13, %39, %38 : vector<8x8xi1>, vector<8x8xf32>
    %cst_19 = arith.constant dense<0xFF800000> : vector<8xf32>
    %41 = vector.multi_reduction <maximumf>, %40, %cst_19 [1] : vector<8x8xf32> to vector<8xf32>
    %42 = vector.shape_cast %41 : vector<8xf32> to vector<8x1xf32>
    %43 = vector.broadcast %42 : vector<8x1xf32> to vector<8x8xf32>
    %44 = arith.subf %40, %43 : vector<8x8xf32>
    %45 = math.exp %44 : vector<8x8xf32>
    %cst_20 = arith.constant dense<0.000000e+00> : vector<8xf32>
    %46 = vector.multi_reduction <add>, %45, %cst_20 [1] : vector<8x8xf32> to vector<8xf32>
    %47 = vector.shape_cast %46 : vector<8xf32> to vector<8x1xf32>
    %48 = tpu.reciprocal %47 {approx = true} : vector<8x1xf32> -> vector<8x1xf32>
    %49 = vector.broadcast %48 : vector<8x1xf32> to vector<8x8xf32>
    %50 = arith.mulf %45, %49 : vector<8x8xf32>
    %cst_21 = arith.constant dense<0.000000e+00> : vector<8x8xf32>
    %51 = tpu.matmul %50, %35, %cst_21 {dimension_numbers = #tpu.dot_dimension_numbers<[1], [0], [0], [1], [0, 0, 1, 1], [], []>} : vector<8x8xf32>, vector<8x8xf32>, vector<8x8xf32> -> vector<8x8xf32>
    %52 = vector.extract_strided_slice %7 {offsets = [0, 16], sizes = [8, 8], strides = [1, 1]} : vector<8x32xf32> to vector<8x8xf32>
    %53 = vector.extract_strided_slice %8 {offsets = [0, 16], sizes = [8, 8], strides = [1, 1]} : vector<8x32xf32> to vector<8x8xf32>
    %54 = vector.extract_strided_slice %9 {offsets = [0, 16], sizes = [8, 8], strides = [1, 1]} : vector<8x32xf32> to vector<8x8xf32>
    %cst_22 = arith.constant dense<0.000000e+00> : vector<8x8xf32>
    %55 = tpu.matmul %52, %53, %cst_22 {dimension_numbers = #tpu.dot_dimension_numbers<[1], [1], [0], [0], [0, 0, 1, 0], [], []>} : vector<8x8xf32>, vector<8x8xf32>, vector<8x8xf32> -> vector<8x8xf32>
    %cst_23 = arith.constant 0.353553385 : f32
    %56 = vector.broadcast %cst_23 : f32 to vector<8x8xf32>
    %57 = arith.mulf %55, %56 : vector<8x8xf32>
    %cst_24 = arith.constant -1.000000e+30 : f32
    %58 = vector.broadcast %cst_24 : f32 to vector<8x8xf32>
    %59 = arith.select %13, %58, %57 : vector<8x8xi1>, vector<8x8xf32>
    %cst_25 = arith.constant dense<0xFF800000> : vector<8xf32>
    %60 = vector.multi_reduction <maximumf>, %59, %cst_25 [1] : vector<8x8xf32> to vector<8xf32>
    %61 = vector.shape_cast %60 : vector<8xf32> to vector<8x1xf32>
    %62 = vector.broadcast %61 : vector<8x1xf32> to vector<8x8xf32>
    %63 = arith.subf %59, %62 : vector<8x8xf32>
    %64 = math.exp %63 : vector<8x8xf32>
    %cst_26 = arith.constant dense<0.000000e+00> : vector<8xf32>
    %65 = vector.multi_reduction <add>, %64, %cst_26 [1] : vector<8x8xf32> to vector<8xf32>
    %66 = vector.shape_cast %65 : vector<8xf32> to vector<8x1xf32>
    %67 = tpu.reciprocal %66 {approx = true} : vector<8x1xf32> -> vector<8x1xf32>
    %68 = vector.broadcast %67 : vector<8x1xf32> to vector<8x8xf32>
    %69 = arith.mulf %64, %68 : vector<8x8xf32>
    %cst_27 = arith.constant dense<0.000000e+00> : vector<8x8xf32>
    %70 = tpu.matmul %69, %54, %cst_27 {dimension_numbers = #tpu.dot_dimension_numbers<[1], [0], [0], [1], [0, 0, 1, 1], [], []>} : vector<8x8xf32>, vector<8x8xf32>, vector<8x8xf32> -> vector<8x8xf32>
    %71 = vector.extract_strided_slice %7 {offsets = [0, 24], sizes = [8, 8], strides = [1, 1]} : vector<8x32xf32> to vector<8x8xf32>
    %72 = vector.extract_strided_slice %8 {offsets = [0, 24], sizes = [8, 8], strides = [1, 1]} : vector<8x32xf32> to vector<8x8xf32>
    %73 = vector.extract_strided_slice %9 {offsets = [0, 24], sizes = [8, 8], strides = [1, 1]} : vector<8x32xf32> to vector<8x8xf32>
    %cst_28 = arith.constant dense<0.000000e+00> : vector<8x8xf32>
    %74 = tpu.matmul %71, %72, %cst_28 {dimension_numbers = #tpu.dot_dimension_numbers<[1], [1], [0], [0], [0, 0, 1, 0], [], []>} : vector<8x8xf32>, vector<8x8xf32>, vector<8x8xf32> -> vector<8x8xf32>
    %cst_29 = arith.constant 0.353553385 : f32
    %75 = vector.broadcast %cst_29 : f32 to vector<8x8xf32>
    %76 = arith.mulf %74, %75 : vector<8x8xf32>
    %cst_30 = arith.constant -1.000000e+30 : f32
    %77 = vector.broadcast %cst_30 : f32 to vector<8x8xf32>
    %78 = arith.select %13, %77, %76 : vector<8x8xi1>, vector<8x8xf32>
    %cst_31 = arith.constant dense<0xFF800000> : vector<8xf32>
    %79 = vector.multi_reduction <maximumf>, %78, %cst_31 [1] : vector<8x8xf32> to vector<8xf32>
    %80 = vector.shape_cast %79 : vector<8xf32> to vector<8x1xf32>
    %81 = vector.broadcast %80 : vector<8x1xf32> to vector<8x8xf32>
    %82 = arith.subf %78, %81 : vector<8x8xf32>
    %83 = math.exp %82 : vector<8x8xf32>
    %cst_32 = arith.constant dense<0.000000e+00> : vector<8xf32>
    %84 = vector.multi_reduction <add>, %83, %cst_32 [1] : vector<8x8xf32> to vector<8xf32>
    %85 = vector.shape_cast %84 : vector<8xf32> to vector<8x1xf32>
    %86 = tpu.reciprocal %85 {approx = true} : vector<8x1xf32> -> vector<8x1xf32>
    %87 = vector.broadcast %86 : vector<8x1xf32> to vector<8x8xf32>
    %88 = arith.mulf %83, %87 : vector<8x8xf32>
    %cst_33 = arith.constant dense<0.000000e+00> : vector<8x8xf32>
    %89 = tpu.matmul %88, %73, %cst_33 {dimension_numbers = #tpu.dot_dimension_numbers<[1], [0], [0], [1], [0, 0, 1, 1], [], []>} : vector<8x8xf32>, vector<8x8xf32>, vector<8x8xf32> -> vector<8x8xf32>
    %90 = tpu.concatenate %32, %51, %70, %89 in 1 : vector<8x8xf32>, vector<8x8xf32>, vector<8x8xf32>, vector<8x8xf32> -> vector<8x32xf32>
    %c0_34 = arith.constant 0 : index
    %c0_35 = arith.constant 0 : index
    %91 = vector.load %arg5[%c0_34, %c0_35] : memref<32x32xf32, #tpu.memory_space<vmem>>, vector<32x32xf32>
    %cst_36 = arith.constant dense<0.000000e+00> : vector<8x32xf32>
    %92 = tpu.matmul %90, %91, %cst_36 {dimension_numbers = #tpu.dot_dimension_numbers<[1], [0], [0], [1], [0, 0, 1, 1], [], []>} : vector<8x32xf32>, vector<32x32xf32>, vector<8x32xf32> -> vector<8x32xf32>
    %c0_37 = arith.constant 0 : index
    %c0_38 = arith.constant 0 : index
    %93 = vector.load %arg6[%c0_37, %c0_38] : memref<1x32xf32, #tpu.memory_space<vmem>>, vector<1x32xf32>
    %94 = vector.broadcast %93 : vector<1x32xf32> to vector<8x32xf32>
    %95 = arith.addf %92, %94 : vector<8x32xf32>
    %96 = arith.addf %1, %95 : vector<8x32xf32>
    %cst_39 = arith.constant dense<0.000000e+00> : vector<8xf32>
    %97 = vector.multi_reduction <add>, %96, %cst_39 [1] : vector<8x32xf32> to vector<8xf32>
    %98 = vector.shape_cast %97 : vector<8xf32> to vector<8x1xf32>
    %cst_40 = arith.constant 3.200000e+01 : f32
    %99 = vector.broadcast %cst_40 : f32 to vector<8x1xf32>
    %100 = arith.divf %98, %99 : vector<8x1xf32>
    %101 = vector.broadcast %100 : vector<8x1xf32> to vector<8x32xf32>
    %102 = arith.subf %96, %101 : vector<8x32xf32>
    %103 = arith.mulf %102, %102 : vector<8x32xf32>
    %cst_41 = arith.constant dense<0.000000e+00> : vector<8xf32>
    %104 = vector.multi_reduction <add>, %103, %cst_41 [1] : vector<8x32xf32> to vector<8xf32>
    %105 = vector.shape_cast %104 : vector<8xf32> to vector<8x1xf32>
    %cst_42 = arith.constant 3.200000e+01 : f32
    %106 = vector.broadcast %cst_42 : f32 to vector<8x1xf32>
    %107 = arith.divf %105, %106 : vector<8x1xf32>
    %108 = vector.broadcast %100 : vector<8x1xf32> to vector<8x32xf32>
    %109 = arith.subf %96, %108 : vector<8x32xf32>
    %cst_43 = arith.constant 9.99999974E-6 : f32
    %110 = vector.broadcast %cst_43 : f32 to vector<8x1xf32>
    %111 = arith.addf %107, %110 : vector<8x1xf32>
    %112 = math.rsqrt %111 : vector<8x1xf32>
    %113 = vector.broadcast %112 : vector<8x1xf32> to vector<8x32xf32>
    %114 = arith.mulf %109, %113 : vector<8x32xf32>
    %c0_44 = arith.constant 0 : index
    %c0_45 = arith.constant 0 : index
    %115 = vector.load %arg7[%c0_44, %c0_45] : memref<1x32xf32, #tpu.memory_space<vmem>>, vector<1x32xf32>
    %116 = vector.broadcast %115 : vector<1x32xf32> to vector<8x32xf32>
    %117 = arith.mulf %114, %116 : vector<8x32xf32>
    %c0_46 = arith.constant 0 : index
    %c0_47 = arith.constant 0 : index
    %118 = vector.load %arg8[%c0_46, %c0_47] : memref<1x32xf32, #tpu.memory_space<vmem>>, vector<1x32xf32>
    %119 = vector.broadcast %118 : vector<1x32xf32> to vector<8x32xf32>
    %120 = arith.addf %117, %119 : vector<8x32xf32>
    %c0_48 = arith.constant 0 : index
    %c0_49 = arith.constant 0 : index
    %c0_50 = arith.constant 0 : index
    %121 = vector.load %arg9[%c0_48, %c0_49, %c0_50] : memref<1x8x32xf32, #tpu.memory_space<vmem>>, vector<1x8x32xf32>
    %122 = vector.shape_cast %121 : vector<1x8x32xf32> to vector<8x32xf32>
    %123 = vector.shape_cast %120 : vector<8x32xf32> to vector<1x8x32xf32>
    tpu.vector_store %arg9[%c0_48, %c0_49, %c0_50], %123 {strides = array<i32>} : memref<1x8x32xf32, #tpu.memory_space<vmem>>, vector<1x8x32xf32>,
    return
  }
  func.func @transform_0(%arg0: i32) -> (i32, i32, i32) {
    %c0_i32 = arith.constant 0 : i32
    %c0_i32_0 = arith.constant 0 : i32
    %c0_i32_1 = arith.constant 0 : i32
    return %arg0, %c0_i32, %c0_i32_0 : i32, i32, i32
  }
  func.func @transform_1(%arg0: i32) -> (i32, i32, i32) {
    %c0_i32 = arith.constant 0 : i32
    %c0_i32_0 = arith.constant 0 : i32
    %c0_i32_1 = arith.constant 0 : i32
    return %arg0, %c0_i32, %c0_i32_0 : i32, i32, i32
  }
  func.func @transform_2(%arg0: i32) -> (i32, i32) {
    %c0_i32 = arith.constant 0 : i32
    %c0_i32_0 = arith.constant 0 : i32
    %c0_i32_1 = arith.constant 0 : i32
    return %c0_i32, %c0_i32_0 : i32, i32
  }
  func.func @transform_3(%arg0: i32) -> (i32, i32) {
    %c0_i32 = arith.constant 0 : i32
    %c0_i32_0 = arith.constant 0 : i32
    %c0_i32_1 = arith.constant 0 : i32
    return %c0_i32, %c0_i32_0 : i32, i32
  }
  func.func @transform_4(%arg0: i32) -> (i32, i32) {
    %c0_i32 = arith.constant 0 : i32
    %c0_i32_0 = arith.constant 0 : i32
    %c0_i32_1 = arith.constant 0 : i32
    return %c0_i32, %c0_i32_0 : i32, i32
  }
  func.func @transform_5(%arg0: i32) -> (i32, i32) {
    %c0_i32 = arith.constant 0 : i32
    %c0_i32_0 = arith.constant 0 : i32
    %c0_i32_1 = arith.constant 0 : i32
    return %c0_i32, %c0_i32_0 : i32, i32
  }
  func.func @transform_6(%arg0: i32) -> (i32, i32) {
    %c0_i32 = arith.constant 0 : i32
    %c0_i32_0 = arith.constant 0 : i32
    %c0_i32_1 = arith.constant 0 : i32
    return %c0_i32, %c0_i32_0 : i32, i32
  }
  func.func @transform_7(%arg0: i32) -> (i32, i32) {
    %c0_i32 = arith.constant 0 : i32
    %c0_i32_0 = arith.constant 0 : i32
    %c0_i32_1 = arith.constant 0 : i32
    return %c0_i32, %c0_i32_0 : i32, i32
  }
  func.func @transform_8(%arg0: i32) -> (i32, i32, i32) {
    %c0_i32 = arith.constant 0 : i32
    %c0_i32_0 = arith.constant 0 : i32
    %c0_i32_1 = arith.constant 0 : i32
    return %arg0, %c0_i32, %c0_i32_0 : i32, i32, i32
  }
}

module attributes {stable_mosaic.version = 11 : i64} {
  func.func @_attn_block_kernel(%arg0: i32, %arg1: memref<1x8x32xf32, #tpu.memory_space<vmem>>, %arg2: memref<1x8x8xf32, #tpu.memory_space<vmem>>, %arg3: memref<32x96xf32, #tpu.memory_space<vmem>>, %arg4: memref<1x96xf32, #tpu.memory_space<vmem>>, %arg5: memref<32x32xf32, #tpu.memory_space<vmem>>, %arg6: memref<1x32xf32, #tpu.memory_space<vmem>>, %arg7: memref<1x32xf32, #tpu.memory_space<vmem>>, %arg8: memref<1x32xf32, #tpu.memory_space<vmem>>, %arg9: memref<1x8x32xf32, #tpu.memory_space<vmem>>) attributes {dimension_semantics = [#tpu.dimension_semantics<parallel>], iteration_bounds = array<i64: 2>, scalar_prefetch = 0 : i64, scratch_operands = 0 : i64, tpu.core_type = #tpu.core_type<tc>, window_params = [{transform_indices = @transform_0, window_bounds = array<i64: 1, 8, 32>}, {transform_indices = @transform_1, window_bounds = array<i64: 1, 8, 8>}, {pipeline_mode = #tpu.pipeline_mode<synchronous>, transform_indices = @transform_2, window_bounds = array<i64: 32, 96>}, {pipeline_mode = #tpu.pipeline_mode<synchronous>, transform_indices = @transform_3, window_bounds = array<i64: 1, 96>}, {pipeline_mode = #tpu.pipeline_mode<synchronous>, transform_indices = @transform_4, window_bounds = array<i64: 32, 32>}, {pipeline_mode = #tpu.pipeline_mode<synchronous>, transform_indices = @transform_5, window_bounds = array<i64: 1, 32>}, {pipeline_mode = #tpu.pipeline_mode<synchronous>, transform_indices = @transform_6, window_bounds = array<i64: 1, 32>}, {pipeline_mode = #tpu.pipeline_mode<synchronous>, transform_indices = @transform_7, window_bounds = array<i64: 1, 32>}, {transform_indices = @transform_8, window_bounds = array<i64: 1, 8, 32>}]} {
    %c0 = arith.constant 0 : index
    %c0_0 = arith.constant 0 : index
    %c0_1 = arith.constant 0 : index
    %0 = vector.load %arg1[%c0, %c0_0, %c0_1] : memref<1x8x32xf32, #tpu.memory_space<vmem>>, vector<1x8x32xf32>
    %1 = vector.shape_cast %0 : vector<1x8x32xf32> to vector<8x32xf32>
    %c0_2 = arith.constant 0 : index
    %c0_3 = arith.constant 0 : index
    %2 = vector.load %arg3[%c0_2, %c0_3] : memref<32x96xf32, #tpu.memory_space<vmem>>, vector<32x96xf32>
    %cst = arith.constant dense<0.000000e+00> : vector<8x96xf32>
    %3 = tpu.matmul %1, %2, %cst {dimension_numbers = #tpu.dot_dimension_numbers<[1], [0], [0], [1], [0, 0, 1, 1], [], []>} : vector<8x32xf32>, vector<32x96xf32>, vector<8x96xf32> -> vector<8x96xf32>
    %c0_4 = arith.constant 0 : index
    %c0_5 = arith.constant 0 : index
    %4 = vector.load %arg4[%c0_4, %c0_5] : memref<1x96xf32, #tpu.memory_space<vmem>>, vector<1x96xf32>
    %5 = vector.broadcast %4 : vector<1x96xf32> to vector<8x96xf32>
    %6 = arith.addf %3, %5 : vector<8x96xf32>
    %7 = vector.extract_strided_slice %6 {offsets = [0, 0], sizes = [8, 32], strides = [1, 1]} : vector<8x96xf32> to vector<8x32xf32>
    %8 = vector.extract_strided_slice %6 {offsets = [0, 32], sizes = [8, 32], strides = [1, 1]} : vector<8x96xf32> to vector<8x32xf32>
    %9 = vector.extract_strided_slice %6 {offsets = [0, 64], sizes = [8, 32], strides = [1, 1]} : vector<8x96xf32> to vector<8x32xf32>
    %c0_6 = arith.constant 0 : index
    %c0_7 = arith.constant 0 : index
    %c0_8 = arith.constant 0 : index
    %10 = vector.load %arg2[%c0_6, %c0_7, %c0_8] : memref<1x8x8xf32, #tpu.memory_space<vmem>>, vector<1x8x8xf32>
    %11 = vector.shape_cast %10 : vector<1x8x8xf32> to vector<8x8xf32>
    %cst_9 = arith.constant 5.000000e-01 : f32
    %12 = vector.broadcast %cst_9 : f32 to vector<8x8xf32>
    %13 = arith.cmpf ogt, %11, %12 : vector<8x8xf32>
    %14 = vector.extract_strided_slice %7 {offsets = [0, 0], sizes = [8, 8], strides = [1, 1]} : vector<8x32xf32> to vector<8x8xf32>
    %15 = vector.extract_strided_slice %8 {offsets = [0, 0], sizes = [8, 8], strides = [1, 1]} : vector<8x32xf32> to vector<8x8xf32>
    %16 = vector.extract_strided_slice %9 {offsets = [0, 0], sizes = [8, 8], strides = [1, 1]} : vector<8x32xf32> to vector<8x8xf32>
    %cst_10 = arith.constant dense<0.000000e+00> : vector<8x8xf32>
    %17 = tpu.matmul %14, %15, %cst_10 {dimension_numbers = #tpu.dot_dimension_numbers<[1], [1], [0], [0], [0, 0, 1, 0], [], []>} : vector<8x8xf32>, vector<8x8xf32>, vector<8x8xf32> -> vector<8x8xf32>
    %cst_11 = arith.constant 0.353553385 : f32
    %18 = vector.broadcast %cst_11 : f32 to vector<8x8xf32>
    %19 = arith.mulf %17, %18 : vector<8x8xf32>
    %cst_12 = arith.constant -1.000000e+30 : f32
    %20 = vector.broadcast %cst_12 : f32 to vector<8x8xf32>
    %21 = arith.select %13, %20, %19 : vector<8x8xi1>, vector<8x8xf32>
    %cst_13 = arith.constant dense<0xFF800000> : vector<8xf32>
    %22 = vector.multi_reduction <maximumf>, %21, %cst_13 [1] : vector<8x8xf32> to vector<8xf32>
    %23 = vector.shape_cast %22 : vector<8xf32> to vector<8x1xf32>
    %24 = vector.broadcast %23 : vector<8x1xf32> to vector<8x8xf32>
    %25 = arith.subf %21, %24 : vector<8x8xf32>
    %26 = math.exp %25 : vector<8x8xf32>
    %cst_14 = arith.constant dense<0.000000e+00> : vector<8xf32>
    %27 = vector.multi_reduction <add>, %26, %cst_14 [1] : vector<8x8xf32> to vector<8xf32>
    %28 = vector.shape_cast %27 : vector<8xf32> to vector<8x1xf32>
    %29 = tpu.reciprocal %28 {approx = true} : vector<8x1xf32> -> vector<8x1xf32>
    %30 = vector.broadcast %29 : vector<8x1xf32> to vector<8x8xf32>
    %31 = arith.mulf %26, %30 : vector<8x8xf32>
    %cst_15 = arith.constant dense<0.000000e+00> : vector<8x8xf32>
    %32 = tpu.matmul %31, %16, %cst_15 {dimension_numbers = #tpu.dot_dimension_numbers<[1], [0], [0], [1], [0, 0, 1, 1], [], []>} : vector<8x8xf32>, vector<8x8xf32>, vector<8x8xf32> -> vector<8x8xf32>
    %33 = vector.extract_strided_slice %7 {offsets = [0, 8], sizes = [8, 8], strides = [1, 1]} : vector<8x32xf32> to vector<8x8xf32>
    %34 = vector.extract_strided_slice %8 {offsets = [0, 8], sizes = [8, 8], strides = [1, 1]} : vector<8x32xf32> to vector<8x8xf32>
    %35 = vector.extract_strided_slice %9 {offsets = [0, 8], sizes = [8, 8], strides = [1, 1]} : vector<8x32xf32> to vector<8x8xf32>
    %cst_16 = arith.constant dense<0.000000e+00> : vector<8x8xf32>
    %36 = tpu.matmul %33, %34, %cst_16 {dimension_numbers = #tpu.dot_dimension_numbers<[1], [1], [0], [0], [0, 0, 1, 0], [], []>} : vector<8x8xf32>, vector<8x8xf32>, vector<8x8xf32> -> vector<8x8xf32>
    %cst_17 = arith.constant 0.353553385 : f32
    %37 = vector.broadcast %cst_17 : f32 to vector<8x8xf32>
    %38 = arith.mulf %36, %37 : vector<8x8xf32>
    %cst_18 = arith.constant -1.000000e+30 : f32
    %39 = vector.broadcast %cst_18 : f32 to vector<8x8xf32>
    %40 = arith.select %13, %39, %38 : vector<8x8xi1>, vector<8x8xf32>
    %cst_19 = arith.constant dense<0xFF800000> : vector<8xf32>
    %41 = vector.multi_reduction <maximumf>, %40, %cst_19 [1] : vector<8x8xf32> to vector<8xf32>
    %42 = vector.shape_cast %41 : vector<8xf32> to vector<8x1xf32>
    %43 = vector.broadcast %42 : vector<8x1xf32> to vector<8x8xf32>
    %44 = arith.subf %40, %43 : vector<8x8xf32>
    %45 = math.exp %44 : vector<8x8xf32>
    %cst_20 = arith.constant dense<0.000000e+00> : vector<8xf32>
    %46 = vector.multi_reduction <add>, %45, %cst_20 [1] : vector<8x8xf32> to vector<8xf32>
    %47 = vector.shape_cast %46 : vector<8xf32> to vector<8x1xf32>
    %48 = tpu.reciprocal %47 {approx = true} : vector<8x1xf32> -> vector<8x1xf32>
    %49 = vector.broadcast %48 : vector<8x1xf32> to vector<8x8xf32>
    %50 = arith.mulf %45, %49 : vector<8x8xf32>
    %cst_21 = arith.constant dense<0.000000e+00> : vector<8x8xf32>
    %51 = tpu.matmul %50, %35, %cst_21 {dimension_numbers = #tpu.dot_dimension_numbers<[1], [0], [0], [1], [0, 0, 1, 1], [], []>} : vector<8x8xf32>, vector<8x8xf32>, vector<8x8xf32> -> vector<8x8xf32>
    %52 = vector.extract_strided_slice %7 {offsets = [0, 16], sizes = [8, 8], strides = [1, 1]} : vector<8x32xf32> to vector<8x8xf32>
    %53 = vector.extract_strided_slice %8 {offsets = [0, 16], sizes = [8, 8], strides = [1, 1]} : vector<8x32xf32> to vector<8x8xf32>
    %54 = vector.extract_strided_slice %9 {offsets = [0, 16], sizes = [8, 8], strides = [1, 1]} : vector<8x32xf32> to vector<8x8xf32>
    %cst_22 = arith.constant dense<0.000000e+00> : vector<8x8xf32>
    %55 = tpu.matmul %52, %53, %cst_22 {dimension_numbers = #tpu.dot_dimension_numbers<[1], [1], [0], [0], [0, 0, 1, 0], [], []>} : vector<8x8xf32>, vector<8x8xf32>, vector<8x8xf32> -> vector<8x8xf32>
    %cst_23 = arith.constant 0.353553385 : f32
    %56 = vector.broadcast %cst_23 : f32 to vector<8x8xf32>
    %57 = arith.mulf %55, %56 : vector<8x8xf32>
    %cst_24 = arith.constant -1.000000e+30 : f32
    %58 = vector.broadcast %cst_24 : f32 to vector<8x8xf32>
    %59 = arith.select %13, %58, %57 : vector<8x8xi1>, vector<8x8xf32>
    %cst_25 = arith.constant dense<0xFF800000> : vector<8xf32>
    %60 = vector.multi_reduction <maximumf>, %59, %cst_25 [1] : vector<8x8xf32> to vector<8xf32>
    %61 = vector.shape_cast %60 : vector<8xf32> to vector<8x1xf32>
    %62 = vector.broadcast %61 : vector<8x1xf32> to vector<8x8xf32>
    %63 = arith.subf %59, %62 : vector<8x8xf32>
    %64 = math.exp %63 : vector<8x8xf32>
    %cst_26 = arith.constant dense<0.000000e+00> : vector<8xf32>
    %65 = vector.multi_reduction <add>, %64, %cst_26 [1] : vector<8x8xf32> to vector<8xf32>
    %66 = vector.shape_cast %65 : vector<8xf32> to vector<8x1xf32>
    %67 = tpu.reciprocal %66 {approx = true} : vector<8x1xf32> -> vector<8x1xf32>
    %68 = vector.broadcast %67 : vector<8x1xf32> to vector<8x8xf32>
    %69 = arith.mulf %64, %68 : vector<8x8xf32>
    %cst_27 = arith.constant dense<0.000000e+00> : vector<8x8xf32>
    %70 = tpu.matmul %69, %54, %cst_27 {dimension_numbers = #tpu.dot_dimension_numbers<[1], [0], [0], [1], [0, 0, 1, 1], [], []>} : vector<8x8xf32>, vector<8x8xf32>, vector<8x8xf32> -> vector<8x8xf32>
    %71 = vector.extract_strided_slice %7 {offsets = [0, 24], sizes = [8, 8], strides = [1, 1]} : vector<8x32xf32> to vector<8x8xf32>
    %72 = vector.extract_strided_slice %8 {offsets = [0, 24], sizes = [8, 8], strides = [1, 1]} : vector<8x32xf32> to vector<8x8xf32>
    %73 = vector.extract_strided_slice %9 {offsets = [0, 24], sizes = [8, 8], strides = [1, 1]} : vector<8x32xf32> to vector<8x8xf32>
    %cst_28 = arith.constant dense<0.000000e+00> : vector<8x8xf32>
    %74 = tpu.matmul %71, %72, %cst_28 {dimension_numbers = #tpu.dot_dimension_numbers<[1], [1], [0], [0], [0, 0, 1, 0], [], []>} : vector<8x8xf32>, vector<8x8xf32>, vector<8x8xf32> -> vector<8x8xf32>
    %cst_29 = arith.constant 0.353553385 : f32
    %75 = vector.broadcast %cst_29 : f32 to vector<8x8xf32>
    %76 = arith.mulf %74, %75 : vector<8x8xf32>
    %cst_30 = arith.constant -1.000000e+30 : f32
    %77 = vector.broadcast %cst_30 : f32 to vector<8x8xf32>
    %78 = arith.select %13, %77, %76 : vector<8x8xi1>, vector<8x8xf32>
    %cst_31 = arith.constant dense<0xFF800000> : vector<8xf32>
    %79 = vector.multi_reduction <maximumf>, %78, %cst_31 [1] : vector<8x8xf32> to vector<8xf32>
    %80 = vector.shape_cast %79 : vector<8xf32> to vector<8x1xf32>
    %81 = vector.broadcast %80 : vector<8x1xf32> to vector<8x8xf32>
    %82 = arith.subf %78, %81 : vector<8x8xf32>
    %83 = math.exp %82 : vector<8x8xf32>
    %cst_32 = arith.constant dense<0.000000e+00> : vector<8xf32>
    %84 = vector.multi_reduction <add>, %83, %cst_32 [1] : vector<8x8xf32> to vector<8xf32>
    %85 = vector.shape_cast %84 : vector<8xf32> to vector<8x1xf32>
    %86 = tpu.reciprocal %85 {approx = true} : vector<8x1xf32> -> vector<8x1xf32>
    %87 = vector.broadcast %86 : vector<8x1xf32> to vector<8x8xf32>
    %88 = arith.mulf %83, %87 : vector<8x8xf32>
    %cst_33 = arith.constant dense<0.000000e+00> : vector<8x8xf32>
    %89 = tpu.matmul %88, %73, %cst_33 {dimension_numbers = #tpu.dot_dimension_numbers<[1], [0], [0], [1], [0, 0, 1, 1], [], []>} : vector<8x8xf32>, vector<8x8xf32>, vector<8x8xf32> -> vector<8x8xf32>
    %90 = tpu.concatenate %32, %51, %70, %89 in 1 : vector<8x8xf32>, vector<8x8xf32>, vector<8x8xf32>, vector<8x8xf32> -> vector<8x32xf32>
    %c0_34 = arith.constant 0 : index
    %c0_35 = arith.constant 0 : index
    %91 = vector.load %arg5[%c0_34, %c0_35] : memref<32x32xf32, #tpu.memory_space<vmem>>, vector<32x32xf32>
    %cst_36 = arith.constant dense<0.000000e+00> : vector<8x32xf32>
    %92 = tpu.matmul %90, %91, %cst_36 {dimension_numbers = #tpu.dot_dimension_numbers<[1], [0], [0], [1], [0, 0, 1, 1], [], []>} : vector<8x32xf32>, vector<32x32xf32>, vector<8x32xf32> -> vector<8x32xf32>
    %c0_37 = arith.constant 0 : index
    %c0_38 = arith.constant 0 : index
    %93 = vector.load %arg6[%c0_37, %c0_38] : memref<1x32xf32, #tpu.memory_space<vmem>>, vector<1x32xf32>
    %94 = vector.broadcast %93 : vector<1x32xf32> to vector<8x32xf32>
    %95 = arith.addf %92, %94 : vector<8x32xf32>
    %96 = arith.addf %1, %95 : vector<8x32xf32>
    %cst_39 = arith.constant dense<0.000000e+00> : vector<8xf32>
    %97 = vector.multi_reduction <add>, %96, %cst_39 [1] : vector<8x32xf32> to vector<8xf32>
    %98 = vector.shape_cast %97 : vector<8xf32> to vector<8x1xf32>
    %cst_40 = arith.constant 3.200000e+01 : f32
    %99 = vector.broadcast %cst_40 : f32 to vector<8x1xf32>
    %100 = arith.divf %98, %99 : vector<8x1xf32>
    %101 = vector.broadcast %100 : vector<8x1xf32> to vector<8x32xf32>
    %102 = arith.subf %96, %101 : vector<8x32xf32>
    %103 = arith.mulf %102, %102 : vector<8x32xf32>
    %cst_41 = arith.constant dense<0.000000e+00> : vector<8xf32>
    %104 = vector.multi_reduction <add>, %103, %cst_41 [1] : vector<8x32xf32> to vector<8xf32>
    %105 = vector.shape_cast %104 : vector<8xf32> to vector<8x1xf32>
    %cst_42 = arith.constant 3.200000e+01 : f32
    %106 = vector.broadcast %cst_42 : f32 to vector<8x1xf32>
    %107 = arith.divf %105, %106 : vector<8x1xf32>
    %108 = vector.broadcast %100 : vector<8x1xf32> to vector<8x32xf32>
    %109 = arith.subf %96, %108 : vector<8x32xf32>
    %cst_43 = arith.constant 9.99999974E-6 : f32
    %110 = vector.broadcast %cst_43 : f32 to vector<8x1xf32>
    %111 = arith.addf %107, %110 : vector<8x1xf32>
    %112 = math.rsqrt %111 : vector<8x1xf32>
    %113 = vector.broadcast %112 : vector<8x1xf32> to vector<8x32xf32>
    %114 = arith.mulf %109, %113 : vector<8x32xf32>
    %c0_44 = arith.constant 0 : index
    %c0_45 = arith.constant 0 : index
    %115 = vector.load %arg7[%c0_44, %c0_45] : memref<1x32xf32, #tpu.memory_space<vmem>>, vector<1x32xf32>
    %116 = vector.broadcast %115 : vector<1x32xf32> to vector<8x32xf32>
    %117 = arith.mulf %114, %116 : vector<8x32xf32>
    %c0_46 = arith.constant 0 : index
    %c0_47 = arith.constant 0 : index
    %118 = vector.load %arg8[%c0_46, %c0_47] : memref<1x32xf32, #tpu.memory_space<vmem>>, vector<1x32xf32>
    %119 = vector.broadcast %118 : vector<1x32xf32> to vector<8x32xf32>
    %120 = arith.addf %117, %119 : vector<8x32xf32>
    %c0_48 = arith.constant 0 : index
    %c0_49 = arith.constant 0 : index
    %c0_50 = arith.constant 0 : index
    %121 = vector.load %arg9[%c0_48, %c0_49, %c0_50] : memref<1x8x32xf32, #tpu.memory_space<vmem>>, vector<1x8x32xf32>
    %122 = vector.shape_cast %121 : vector<1x8x32xf32> to vector<8x32xf32>
    %123 = vector.shape_cast %120 : vector<8x32xf32> to vector<1x8x32xf32>
    tpu.vector_store %arg9[%c0_48, %c0_49, %c0_50], %123 {strides = array<i32>} : memref<1x8x32xf32, #tpu.memory_space<vmem>>, vector<1x8x32xf32>,
    return
  }
  func.func @transform_0(%arg0: i32) -> (i32, i32, i32) {
    %c0_i32 = arith.constant 0 : i32
    %c0_i32_0 = arith.constant 0 : i32
    %c0_i32_1 = arith.constant 0 : i32
    return %arg0, %c0_i32, %c0_i32_0 : i32, i32, i32
  }
  func.func @transform_1(%arg0: i32) -> (i32, i32, i32) {
    %c0_i32 = arith.constant 0 : i32
    %c0_i32_0 = arith.constant 0 : i32
    %c0_i32_1 = arith.constant 0 : i32
    return %arg0, %c0_i32, %c0_i32_0 : i32, i32, i32
  }
  func.func @transform_2(%arg0: i32) -> (i32, i32) {
    %c0_i32 = arith.constant 0 : i32
    %c0_i32_0 = arith.constant 0 : i32
    %c0_i32_1 = arith.constant 0 : i32
    return %c0_i32, %c0_i32_0 : i32, i32
  }
  func.func @transform_3(%arg0: i32) -> (i32, i32) {
    %c0_i32 = arith.constant 0 : i32
    %c0_i32_0 = arith.constant 0 : i32
    %c0_i32_1 = arith.constant 0 : i32
    return %c0_i32, %c0_i32_0 : i32, i32
  }
  func.func @transform_4(%arg0: i32) -> (i32, i32) {
    %c0_i32 = arith.constant 0 : i32
    %c0_i32_0 = arith.constant 0 : i32
    %c0_i32_1 = arith.constant 0 : i32
    return %c0_i32, %c0_i32_0 : i32, i32
  }
  func.func @transform_5(%arg0: i32) -> (i32, i32) {
    %c0_i32 = arith.constant 0 : i32
    %c0_i32_0 = arith.constant 0 : i32
    %c0_i32_1 = arith.constant 0 : i32
    return %c0_i32, %c0_i32_0 : i32, i32
  }
  func.func @transform_6(%arg0: i32) -> (i32, i32) {
    %c0_i32 = arith.constant 0 : i32
    %c0_i32_0 = arith.constant 0 : i32
    %c0_i32_1 = arith.constant 0 : i32
    return %c0_i32, %c0_i32_0 : i32, i32
  }
  func.func @transform_7(%arg0: i32) -> (i32, i32) {
    %c0_i32 = arith.constant 0 : i32
    %c0_i32_0 = arith.constant 0 : i32
    %c0_i32_1 = arith.constant 0 : i32
    return %c0_i32, %c0_i32_0 : i32, i32
  }
  func.func @transform_8(%arg0: i32) -> (i32, i32, i32) {
    %c0_i32 = arith.constant 0 : i32
    %c0_i32_0 = arith.constant 0 : i32
    %c0_i32_1 = arith.constant 0 : i32
    return %arg0, %c0_i32, %c0_i32_0 : i32, i32, i32
  }
}

module attributes {stable_mosaic.version = 11 : i64} {
  func.func @_ffn_kernel(%arg0: i32, %arg1: memref<16x32xf32, #tpu.memory_space<vmem>>, %arg2: memref<32x128xf32, #tpu.memory_space<vmem>>, %arg3: memref<1x128xf32, #tpu.memory_space<vmem>>, %arg4: memref<128x32xf32, #tpu.memory_space<vmem>>, %arg5: memref<1x32xf32, #tpu.memory_space<vmem>>, %arg6: memref<1x32xf32, #tpu.memory_space<vmem>>, %arg7: memref<1x32xf32, #tpu.memory_space<vmem>>, %arg8: memref<16x32xf32, #tpu.memory_space<vmem>>) attributes {dimension_semantics = [#tpu.dimension_semantics<parallel>], iteration_bounds = array<i64: 1>, scalar_prefetch = 0 : i64, scratch_operands = 0 : i64, tpu.core_type = #tpu.core_type<tc>, window_params = [{transform_indices = @transform_0, window_bounds = array<i64: 16, 32>}, {pipeline_mode = #tpu.pipeline_mode<synchronous>, transform_indices = @transform_1, window_bounds = array<i64: 32, 128>}, {pipeline_mode = #tpu.pipeline_mode<synchronous>, transform_indices = @transform_2, window_bounds = array<i64: 1, 128>}, {pipeline_mode = #tpu.pipeline_mode<synchronous>, transform_indices = @transform_3, window_bounds = array<i64: 128, 32>}, {pipeline_mode = #tpu.pipeline_mode<synchronous>, transform_indices = @transform_4, window_bounds = array<i64: 1, 32>}, {pipeline_mode = #tpu.pipeline_mode<synchronous>, transform_indices = @transform_5, window_bounds = array<i64: 1, 32>}, {pipeline_mode = #tpu.pipeline_mode<synchronous>, transform_indices = @transform_6, window_bounds = array<i64: 1, 32>}, {transform_indices = @transform_7, window_bounds = array<i64: 16, 32>}]} {
    %c0 = arith.constant 0 : index
    %c0_0 = arith.constant 0 : index
    %0 = vector.load %arg1[%c0, %c0_0] : memref<16x32xf32, #tpu.memory_space<vmem>>, vector<16x32xf32>
    %c0_1 = arith.constant 0 : index
    %c0_2 = arith.constant 0 : index
    %1 = vector.load %arg2[%c0_1, %c0_2] : memref<32x128xf32, #tpu.memory_space<vmem>>, vector<32x128xf32>
    %cst = arith.constant dense<0.000000e+00> : vector<16x128xf32>
    %2 = tpu.matmul %0, %1, %cst {dimension_numbers = #tpu.dot_dimension_numbers<[1], [0], [0], [1], [0, 0, 1, 1], [], []>} : vector<16x32xf32>, vector<32x128xf32>, vector<16x128xf32> -> vector<16x128xf32>
    %c0_3 = arith.constant 0 : index
    %c0_4 = arith.constant 0 : index
    %3 = vector.load %arg3[%c0_3, %c0_4] : memref<1x128xf32, #tpu.memory_space<vmem>>, vector<1x128xf32>
    %4 = vector.broadcast %3 : vector<1x128xf32> to vector<16x128xf32>
    %5 = arith.addf %2, %4 : vector<16x128xf32>
    %cst_5 = arith.constant 0.000000e+00 : f32
    %6 = vector.broadcast %cst_5 : f32 to vector<16x128xf32>
    %7 = arith.maximumf %5, %6 : vector<16x128xf32>
    %c0_6 = arith.constant 0 : index
    %c0_7 = arith.constant 0 : index
    %8 = vector.load %arg4[%c0_6, %c0_7] : memref<128x32xf32, #tpu.memory_space<vmem>>, vector<128x32xf32>
    %cst_8 = arith.constant dense<0.000000e+00> : vector<16x32xf32>
    %9 = tpu.matmul %7, %8, %cst_8 {dimension_numbers = #tpu.dot_dimension_numbers<[1], [0], [0], [1], [0, 0, 1, 1], [], []>} : vector<16x128xf32>, vector<128x32xf32>, vector<16x32xf32> -> vector<16x32xf32>
    %c0_9 = arith.constant 0 : index
    %c0_10 = arith.constant 0 : index
    %10 = vector.load %arg5[%c0_9, %c0_10] : memref<1x32xf32, #tpu.memory_space<vmem>>, vector<1x32xf32>
    %11 = vector.broadcast %10 : vector<1x32xf32> to vector<16x32xf32>
    %12 = arith.addf %9, %11 : vector<16x32xf32>
    %13 = arith.addf %0, %12 : vector<16x32xf32>
    %cst_11 = arith.constant dense<0.000000e+00> : vector<16xf32>
    %14 = vector.multi_reduction <add>, %13, %cst_11 [1] : vector<16x32xf32> to vector<16xf32>
    %15 = vector.shape_cast %14 : vector<16xf32> to vector<16x1xf32>
    %cst_12 = arith.constant 3.200000e+01 : f32
    %16 = vector.broadcast %cst_12 : f32 to vector<16x1xf32>
    %17 = arith.divf %15, %16 : vector<16x1xf32>
    %18 = vector.broadcast %17 : vector<16x1xf32> to vector<16x32xf32>
    %19 = arith.subf %13, %18 : vector<16x32xf32>
    %20 = arith.mulf %19, %19 : vector<16x32xf32>
    %cst_13 = arith.constant dense<0.000000e+00> : vector<16xf32>
    %21 = vector.multi_reduction <add>, %20, %cst_13 [1] : vector<16x32xf32> to vector<16xf32>
    %22 = vector.shape_cast %21 : vector<16xf32> to vector<16x1xf32>
    %cst_14 = arith.constant 3.200000e+01 : f32
    %23 = vector.broadcast %cst_14 : f32 to vector<16x1xf32>
    %24 = arith.divf %22, %23 : vector<16x1xf32>
    %25 = vector.broadcast %17 : vector<16x1xf32> to vector<16x32xf32>
    %26 = arith.subf %13, %25 : vector<16x32xf32>
    %cst_15 = arith.constant 9.99999974E-6 : f32
    %27 = vector.broadcast %cst_15 : f32 to vector<16x1xf32>
    %28 = arith.addf %24, %27 : vector<16x1xf32>
    %29 = math.rsqrt %28 : vector<16x1xf32>
    %30 = vector.broadcast %29 : vector<16x1xf32> to vector<16x32xf32>
    %31 = arith.mulf %26, %30 : vector<16x32xf32>
    %c0_16 = arith.constant 0 : index
    %c0_17 = arith.constant 0 : index
    %32 = vector.load %arg6[%c0_16, %c0_17] : memref<1x32xf32, #tpu.memory_space<vmem>>, vector<1x32xf32>
    %33 = vector.broadcast %32 : vector<1x32xf32> to vector<16x32xf32>
    %34 = arith.mulf %31, %33 : vector<16x32xf32>
    %c0_18 = arith.constant 0 : index
    %c0_19 = arith.constant 0 : index
    %35 = vector.load %arg7[%c0_18, %c0_19] : memref<1x32xf32, #tpu.memory_space<vmem>>, vector<1x32xf32>
    %36 = vector.broadcast %35 : vector<1x32xf32> to vector<16x32xf32>
    %37 = arith.addf %34, %36 : vector<16x32xf32>
    %c0_20 = arith.constant 0 : index
    %c0_21 = arith.constant 0 : index
    %38 = vector.load %arg8[%c0_20, %c0_21] : memref<16x32xf32, #tpu.memory_space<vmem>>, vector<16x32xf32>
    tpu.vector_store %arg8[%c0_20, %c0_21], %37 {strides = array<i32>} : memref<16x32xf32, #tpu.memory_space<vmem>>, vector<16x32xf32>,
    return
  }
  func.func @transform_0(%arg0: i32) -> (i32, i32) {
    %c0_i32 = arith.constant 0 : i32
    %c0_i32_0 = arith.constant 0 : i32
    return %arg0, %c0_i32 : i32, i32
  }
  func.func @transform_1(%arg0: i32) -> (i32, i32) {
    %c0_i32 = arith.constant 0 : i32
    %c0_i32_0 = arith.constant 0 : i32
    %c0_i32_1 = arith.constant 0 : i32
    return %c0_i32, %c0_i32_0 : i32, i32
  }
  func.func @transform_2(%arg0: i32) -> (i32, i32) {
    %c0_i32 = arith.constant 0 : i32
    %c0_i32_0 = arith.constant 0 : i32
    %c0_i32_1 = arith.constant 0 : i32
    return %c0_i32, %c0_i32_0 : i32, i32
  }
  func.func @transform_3(%arg0: i32) -> (i32, i32) {
    %c0_i32 = arith.constant 0 : i32
    %c0_i32_0 = arith.constant 0 : i32
    %c0_i32_1 = arith.constant 0 : i32
    return %c0_i32, %c0_i32_0 : i32, i32
  }
  func.func @transform_4(%arg0: i32) -> (i32, i32) {
    %c0_i32 = arith.constant 0 : i32
    %c0_i32_0 = arith.constant 0 : i32
    %c0_i32_1 = arith.constant 0 : i32
    return %c0_i32, %c0_i32_0 : i32, i32
  }
  func.func @transform_5(%arg0: i32) -> (i32, i32) {
    %c0_i32 = arith.constant 0 : i32
    %c0_i32_0 = arith.constant 0 : i32
    %c0_i32_1 = arith.constant 0 : i32
    return %c0_i32, %c0_i32_0 : i32, i32
  }
  func.func @transform_6(%arg0: i32) -> (i32, i32) {
    %c0_i32 = arith.constant 0 : i32
    %c0_i32_0 = arith.constant 0 : i32
    %c0_i32_1 = arith.constant 0 : i32
    return %c0_i32, %c0_i32_0 : i32, i32
  }
  func.func @transform_7(%arg0: i32) -> (i32, i32) {
    %c0_i32 = arith.constant 0 : i32
    %c0_i32_0 = arith.constant 0 : i32
    return %arg0, %c0_i32 : i32, i32
  }
}

</mosaic_0001>

<llo_original>
// kernel: encoder_fwd.5
$region0: #{encoder_fwd.5}
  #allocation0 [shape = 'u32[]', space=smem, size = 0x4, offset = 0x4, fixed_abs, tag = 'smem constant byte address 0x4 - core index']
  #allocation1 [shape = 'u32[144,128]{1,0:T(1,128)}', space=vmem, size = 0x12000, scoped, tag = 'internal scratch']
  %s0 = inlined_call_operand.vmem [shape: f32[16,32], index: 0, kind: input, shape index: {}]
  %s1 = inlined_call_operand.vmem [shape: f32[32,128], index: 1, kind: input, shape index: {}]
  %s2 = inlined_call_operand.vmem [shape: f32[1,128], index: 2, kind: input, shape index: {}]
  %s3 = inlined_call_operand.vmem [shape: f32[128,32], index: 3, kind: input, shape index: {}]
  %s4 = inlined_call_operand.vmem [shape: f32[1,32], index: 4, kind: input, shape index: {}]
  %s5 = inlined_call_operand.vmem [shape: f32[1,32], index: 5, kind: input, shape index: {}]
  %s6 = inlined_call_operand.vmem [shape: f32[1,32], index: 6, kind: input, shape index: {}]
  %s7 = inlined_call_operand.vmem [shape: f32[16,32], index: 7, kind: output, shape index: {}]
  %s8 = sld [smem:[#allocation0]]
  $region38: #{encoder_fwd.5} parent=0
    _
  %s10 = ssub.s32 1, %s8
  %s11 = scalar_select 0, %s10, %s8
  // Predicated region
  $region2: #{encoder_fwd.5} parent=0 // pred_check
    _
  $region3: #{encoder_fwd.5} parent=0 // pred_check_branch
    %13 = sbr.rel (0) target = $region5
  $region4: #{encoder_fwd.5} parent=0 // pred_region
    _
  $region5: #{encoder_fwd.5} parent=0 // pred_fallthru
    _
  // Predicated region
  $region6: #{encoder_fwd.5} parent=0 // pred_check
    _
  $region7: #{encoder_fwd.5} parent=0 // pred_check_branch
    %15 = sbr.rel (0) target = $region9
  $region8: #{encoder_fwd.5} parent=0 // pred_region
    _
  $region9: #{encoder_fwd.5} parent=0 // pred_fallthru
    _
  // Predicated region
  $region10: #{encoder_fwd.5} parent=0 // pred_check
    _
  $region11: #{encoder_fwd.5} parent=0 // pred_check_branch
    %17 = sbr.rel (0) target = $region13
  $region12: #{encoder_fwd.5} parent=0 // pred_region
    _
  $region13: #{encoder_fwd.5} parent=0 // pred_fallthru
    _
  // Predicated region
  $region14: #{encoder_fwd.5} parent=0 // pred_check
    _
  $region15: #{encoder_fwd.5} parent=0 // pred_check_branch
    %19 = sbr.rel (0) target = $region17
  $region16: #{encoder_fwd.5} parent=0 // pred_region
    _
  $region17: #{encoder_fwd.5} parent=0 // pred_fallthru
    _
  // Predicated region
  $region18: #{encoder_fwd.5} parent=0 // pred_check
    _
  $region19: #{encoder_fwd.5} parent=0 // pred_check_branch
    %21 = sbr.rel (0) target = $region21
  $region20: #{encoder_fwd.5} parent=0 // pred_region
    _
  $region21: #{encoder_fwd.5} parent=0 // pred_fallthru
    _
  // Predicated region
  $region22: #{encoder_fwd.5} parent=0 // pred_check
    _
  $region23: #{encoder_fwd.5} parent=0 // pred_check_branch
    %23 = sbr.rel (0) target = $region25
  $region24: #{encoder_fwd.5} parent=0 // pred_region
    _
  $region25: #{encoder_fwd.5} parent=0 // pred_fallthru
    _
  // Predicated region
  $region26: #{encoder_fwd.5} parent=0 // pred_check
    _
  $region27: #{encoder_fwd.5} parent=0 // pred_check_branch
    %25 = sbr.rel (0) target = $region29
  $region28: #{encoder_fwd.5} parent=0 // pred_region
    _
  $region29: #{encoder_fwd.5} parent=0 // pred_fallthru
    _
  %v26 = vld [vmem:[%s0] sm:$0xff]
  %v27 = vld [vmem:[%s0 + $0x8] sm:$0xff]
  %v28 = vld [vmem:[%s1] sm:$0xff]
  %v29 = vld [vmem:[%s1 + $0x8] sm:$0xff]
  %v30 = vld [vmem:[%s1 + $0x10] sm:$0xff]
  %v31 = vld [vmem:[%s1 + $0x18] sm:$0xff]
  %v32 = vld [vmem:[%s2] sm:$0x1]
  %v34 = vlaneseq
  %v35 = vshrl.u32 %v34, 7
  %v36 = vsub.s32 0, %v35
  %v37 = vrot.slane %v32, %v36
  %vm39 = vcmask 261120
  %v41 = vsel %vm39, %v26, 0
  %v44 = vsel %vm39, %v27, 0
  %46 = vmatprep.subr.mxu0 0.0
  %47 = vmatpush1.msra.mxu0 %v28
  %48 = vmatprep.subr.mxu0 0.0
  %49 = vmatpush1.msra.mxu0 %v29
  %50 = vmatprep.subr.mxu0 0.0
  %51 = vmatpush1.msra.mxu0 %v30
  %52 = vmatprep.subr.mxu0 0.0
  %53 = vmatpush1.msra.mxu0 %v31
  %54 = vmatprep.subr.mxu0 0.0
  %55 = vmatpush1.msra.mxu0 0.0
  %56 = vmatprep.subr.mxu0 0.0
  %57 = vmatpush1.msra.mxu0 0.0
  %58 = vmatprep.subr.mxu0 0.0
  %59 = vmatpush1.msra.mxu0 0.0
  %60 = vmatprep.subr.mxu0 0.0
  %61 = vmatpush1.msra.mxu0 0.0
  %62 = vmatprep.subr.mxu0 0.0
  %63 = vmatpush1.msra.mxu0 0.0
  %64 = vmatprep.subr.mxu0 0.0
  %65 = vmatpush1.msra.mxu0 0.0
  %66 = vmatprep.subr.mxu0 0.0
  %67 = vmatpush1.msra.mxu0 0.0
  %68 = vmatprep.subr.mxu0 0.0
  %69 = vmatpush1.msra.mxu0 0.0
  %70 = vmatprep.subr.mxu0 0.0
  %71 = vmatpush1.msra.mxu0 0.0
  %72 = vmatprep.subr.mxu0 0.0
  %73 = vmatpush1.msra.mxu0 0.0
  %74 = vmatprep.subr.mxu0 0.0
  %75 = vmatpush1.msra.mxu0 0.0
  %76 = vmatprep.subr.mxu0 0.0
  %77 = vmatpush1.msra.mxu0 0.0
  %78 = vmatprep.subr.mxu0 0.0
  %79 = vmatpush1.msra.mxu0 0.0
  %80 = vmatprep.subr.mxu0 0.0
  %81 = vmatpush1.msra.mxu0 0.0
  %82 = vmatprep.subr.mxu0 0.0
  %83 = vmatpush1.msra.mxu0 0.0
  %84 = vmatprep.subr.mxu0 0.0
  %85 = vmatpush1.msra.mxu0 0.0
  %86 = vmatprep.subr.mxu0 0.0
  %87 = vmatpush1.msra.mxu0 0.0
  %88 = vmatprep.subr.mxu0 0.0
  %89 = vmatpush1.msra.mxu0 0.0
  %90 = vmatprep.subr.mxu0 0.0
  %91 = vmatpush1.msra.mxu0 0.0
  %92 = vmatprep.subr.mxu0 0.0
  %93 = vmatpush1.msra.mxu0 0.0
  %94 = vmatprep.subr.mxu0 0.0
  %95 = vmatpush1.msra.mxu0 0.0
  %96 = vmatprep.subr.mxu0 0.0
  %97 = vmatpush1.msra.mxu0 0.0
  %98 = vmatprep.subr.mxu0 0.0
  %99 = vmatpush1.msra.mxu0 0.0
  %100 = vmatprep.subr.mxu0 0.0
  %101 = vmatpush1.msra.mxu0 0.0
  %102 = vmatprep.subr.mxu0 0.0
  %103 = vmatpush1.msra.mxu0 0.0
  %104 = vmatprep.subr.mxu0 0.0
  %105 = vmatpush1.msra.mxu0 0.0
  %106 = vmatprep.subr.mxu0 0.0
  %107 = vmatpush1.msra.mxu0 0.0
  %108 = vmatprep.subr.mxu0 0.0
  %109 = vmatpush1.msra.mxu0 0.0
  %110 = vmatprep.mubr.f32.mxu0 0.0
  %111 = vmatmul.mubr.f32.gmra.mrb[0].mxu0 %v41
  %v112 = vpop.f32.mrb[0].mxu0
  %v113 = vadd.f32 %v37, %v112
  %v114 = vpop.f32.mrb[0].mxu0
  %115 = vmatprep.mubr.f32.mxu0 0.0
  %116 = vmatmul.mubr.f32.gmra.mrb[0].mxu0 %v44
  %v117 = vpop.f32.mrb[0].mxu0
  %v118 = vadd.f32 %v37, %v117
  %v119 = vpop.f32.mrb[0].mxu0
  %120 = vdwg.mxu0
  %v121 = vmax.f32 %v113, 0.0
  %v122 = vmax.f32 %v118, 0.0
  %v123 = vld [vmem:[%s3] sm:$0xff]
  %v124 = vld [vmem:[%s3 + $0x8] sm:$0xff]
  %v125 = vld [vmem:[%s3 + $0x10] sm:$0xff]
  %v126 = vld [vmem:[%s3 + $0x18] sm:$0xff]
  %v127 = vld [vmem:[%s3 + $0x20] sm:$0xff]
  %v128 = vld [vmem:[%s3 + $0x28] sm:$0xff]
  %v129 = vld [vmem:[%s3 + $0x30] sm:$0xff]
  %v130 = vld [vmem:[%s3 + $0x38] sm:$0xff]
  %v131 = vld [vmem:[%s3 + $0x40] sm:$0xff]
  %v132 = vld [vmem:[%s3 + $0x48] sm:$0xff]
  %v133 = vld [vmem:[%s3 + $0x50] sm:$0xff]
  %v134 = vld [vmem:[%s3 + $0x58] sm:$0xff]
  %v135 = vld [vmem:[%s3 + $0x60] sm:$0xff]
  %v136 = vld [vmem:[%s3 + $0x68] sm:$0xff]
  %v137 = vld [vmem:[%s3 + $0x70] sm:$0xff]
  %v138 = vld [vmem:[%s3 + $0x78] sm:$0xff]
  %v139 = vld [vmem:[%s4] sm:$0x1]
  %v141 = vlaneseq
  %v142 = vshrl.u32 %v141, 7
  %v143 = vsub.s32 0, %v142
  %v144 = vrot.slane %v139, %v143
  %146 = vmatprep.subr.mxu0 0.0
  %147 = vmatpush1.msra.mxu0 %v123
  %148 = vmatprep.subr.mxu0 0.0
  %149 = vmatpush1.msra.mxu0 %v124
  %150 = vmatprep.subr.mxu0 0.0
  %151 = vmatpush1.msra.mxu0 %v125
  %152 = vmatprep.subr.mxu0 0.0
  %153 = vmatpush1.msra.mxu0 %v126
  %154 = vmatprep.subr.mxu0 0.0
  %155 = vmatpush1.msra.mxu0 %v127
  %156 = vmatprep.subr.mxu0 0.0
  %157 = vmatpush1.msra.mxu0 %v128
  %158 = vmatprep.subr.mxu0 0.0
  %159 = vmatpush1.msra.mxu0 %v129
  %160 = vmatprep.subr.mxu0 0.0
  %161 = vmatpush1.msra.mxu0 %v130
  %162 = vmatprep.subr.mxu0 0.0
  %163 = vmatpush1.msra.mxu0 %v131
  %164 = vmatprep.subr.mxu0 0.0
  %165 = vmatpush1.msra.mxu0 %v132
  %166 = vmatprep.subr.mxu0 0.0
  %167 = vmatpush1.msra.mxu0 %v133
  %168 = vmatprep.subr.mxu0 0.0
  %169 = vmatpush1.msra.mxu0 %v134
  %170 = vmatprep.subr.mxu0 0.0
  %171 = vmatpush1.msra.mxu0 %v135
  %172 = vmatprep.subr.mxu0 0.0
  %173 = vmatpush1.msra.mxu0 %v136
  %174 = vmatprep.subr.mxu0 0.0
  %175 = vmatpush1.msra.mxu0 %v137
  %176 = vmatprep.subr.mxu0 0.0
  %177 = vmatpush1.msra.mxu0 %v138
  %178 = vmatprep.subr.mxu0 0.0
  %179 = vmatpush1.msra.mxu0 0.0
  %180 = vmatprep.subr.mxu0 0.0
  %181 = vmatpush1.msra.mxu0 0.0
  %182 = vmatprep.subr.mxu0 0.0
  %183 = vmatpush1.msra.mxu0 0.0
  %184 = vmatprep.subr.mxu0 0.0
  %185 = vmatpush1.msra.mxu0 0.0
  %186 = vmatprep.subr.mxu0 0.0
  %187 = vmatpush1.msra.mxu0 0.0
  %188 = vmatprep.subr.mxu0 0.0
  %189 = vmatpush1.msra.mxu0 0.0
  %190 = vmatprep.subr.mxu0 0.0
  %191 = vmatpush1.msra.mxu0 0.0
  %192 = vmatprep.subr.mxu0 0.0
  %193 = vmatpush1.msra.mxu0 0.0
  %194 = vmatprep.subr.mxu0 0.0
  %195 = vmatpush1.msra.mxu0 0.0
  %196 = vmatprep.subr.mxu0 0.0
  %197 = vmatpush1.msra.mxu0 0.0
  %198 = vmatprep.subr.mxu0 0.0
  %199 = vmatpush1.msra.mxu0 0.0
  %200 = vmatprep.subr.mxu0 0.0
  %201 = vmatpush1.msra.mxu0 0.0
  %202 = vmatprep.subr.mxu0 0.0
  %203 = vmatpush1.msra.mxu0 0.0
  %204 = vmatprep.subr.mxu0 0.0
  %205 = vmatpush1.msra.mxu0 0.0
  %206 = vmatprep.subr.mxu0 0.0
  %207 = vmatpush1.msra.mxu0 0.0
  %208 = vmatprep.subr.mxu0 0.0
  %209 = vmatpush1.msra.mxu0 0.0
  %210 = vmatprep.mubr.f32.mxu0 0.0
  %211 = vmatmul.mubr.f32.gmra.mrb[0].mxu0 %v121
  %v212 = vpop.f32.mrb[0].mxu0
  %v213 = vadd.f32 %v144, %v212
  %v214 = vpop.f32.mrb[0].mxu0
  %215 = vmatprep.mubr.f32.mxu0 0.0
  %216 = vmatmul.mubr.f32.gmra.mrb[0].mxu0 %v122
  %v217 = vpop.f32.mrb[0].mxu0
  %v218 = vadd.f32 %v144, %v217
  %v219 = vpop.f32.mrb[0].mxu0
  %220 = vdwg.mxu0
  %v221 = vadd.f32 %v26, %v213
  %v222 = vadd.f32 %v27, %v218
  %v223 = vsel %vm39, %v221, 0.0
  %224 = vadd.xlane.f32.xlu0 %v223
  %v225 = vpop.xlane.xlu0 %224
  %v226 = vsel %vm39, %v222, 0.0
  %227 = vadd.xlane.f32.xlu0 %v226
  %v228 = vpop.xlane.xlu0 %227
  %v229 = vrcp.pop 32.0
  %v230 = vmul.f32 %v225, %v229
  %v231 = vmul.f32 %v228, %v229
  %v232 = vsub.f32 %v221, %v230
  %v233 = vsub.f32 %v222, %v231
  %v234 = vmul.f32 %v232, %v232
  %v235 = vmul.f32 %v233, %v233
  %v236 = vsel %vm39, %v234, 0.0
  %237 = vadd.xlane.f32.xlu0 %v236
  %v238 = vpop.xlane.xlu0 %237
  %v239 = vsel %vm39, %v235, 0.0
  %240 = vadd.xlane.f32.xlu0 %v239
  %v241 = vpop.xlane.xlu0 %240
  %v242 = vmul.f32 %v238, %v229
  %v243 = vmul.f32 %v241, %v229
  %v244 = vadd.f32 %v242, 1e-05
  %v245 = vadd.f32 %v243, 1e-05
  %v246 = vrsqrt.pop %v244
  %v247 = vrsqrt.pop %v245
  %v248 = vmul.f32 %v232, %v246
  %v249 = vmul.f32 %v233, %v247
  %v250 = vld [vmem:[%s5] sm:$0x1]
  %v252 = vlaneseq
  %v253 = vshrl.u32 %v252, 7
  %v254 = vsub.s32 0, %v253
  %v255 = vrot.slane %v250, %v254
  %v257 = vmul.f32 %v248, %v255
  %v258 = vmul.f32 %v249, %v255
  %v259 = vld [vmem:[%s6] sm:$0x1]
  %v261 = vlaneseq
  %v262 = vshrl.u32 %v261, 7
  %v263 = vsub.s32 0, %v262
  %v264 = vrot.slane %v259, %v263
  %v266 = vadd.f32 %v257, %v264
  %v267 = vadd.f32 %v258, %v264
  %268 = vst.msk [vmem:[%s7] sm:$0xff] %vm39, %v266
  %269 = vst.msk [vmem:[%s7 + $0x8] sm:$0xff] %vm39, %v267
  // Predicated region
  $region30: #{encoder_fwd.5} parent=0 // pred_check
    _
  $region31: #{encoder_fwd.5} parent=0 // pred_check_branch
    %271 = sbr.rel (0) target = $region33
  $region32: #{encoder_fwd.5} parent=0 // pred_region
    _
  $region33: #{encoder_fwd.5} parent=0 // pred_fallthru
    _
  // Predicated region
  $region34: #{encoder_fwd.5} parent=0 // pred_check
    _
  $region35: #{encoder_fwd.5} parent=0 // pred_check_branch
    %273 = sbr.rel (0) target = $region37
  $region36: #{encoder_fwd.5} parent=0 // pred_region
    _
  $region37: #{encoder_fwd.5} parent=0 // pred_fallthru
    _

// kernel: encoder_fwd.4
$region0: #{encoder_fwd.4}
  #allocation0 [shape = 'u32[]', space=smem, size = 0x4, offset = 0x4, fixed_abs, tag = 'smem constant byte address 0x4 - core index']
  #allocation1 [shape = 'u32[144,128]{1,0:T(1,128)}', space=vmem, size = 0x12000, scoped, tag = 'internal scratch']
  %s0 = inlined_call_operand.vmem [shape: f32[2,8,32], index: 0, kind: input, shape index: {}]
  %s1 = inlined_call_operand.vmem [shape: f32[2,8,8], index: 1, kind: input, shape index: {}]
  %s2 = inlined_call_operand.vmem [shape: f32[32,96], index: 2, kind: input, shape index: {}]
  %s3 = inlined_call_operand.vmem [shape: f32[1,96], index: 3, kind: input, shape index: {}]
  %s4 = inlined_call_operand.hbm [shape: f32[32,32], index: 4, kind: input, shape index: {}]
  %s5 = inlined_call_operand.vmem [shape: f32[1,32], index: 5, kind: input, shape index: {}]
  %s6 = inlined_call_operand.vmem [shape: f32[1,32], index: 6, kind: input, shape index: {}]
  %s7 = inlined_call_operand.vmem [shape: f32[1,32], index: 7, kind: input, shape index: {}]
  %s8 = inlined_call_operand.vmem [shape: f32[2,8,32], index: 8, kind: output, shape index: {}]
  %s9 = sld [smem:[#allocation0]]
  $region69: #{encoder_fwd.4} parent=0
    _
  %s11 = ssub.s32 1, %s9
  %s12 = scalar_select 0, %s11, %s9
  $region1: #{encoder_fwd.4} parent=0
    #allocation2 [shape = 'u8[16384]{0}', space=vmem, size = 0x4000, scoped, tag = 'input window, operand 4, single buffered']
    #allocation3 [shape = 's32[2]{0}', space=sflag, size = 0x8, scoped, tag = 'scoped memory for encoder_fwd.4']
    %13 = vsyncpa [#allocation3], 0
    loop: start=0, step=1, limit=4
    $region2: #{encoder_fwd.4} parent=1 // loop_pre_header
      _
    $region3: #{encoder_fwd.4} parent=1 // loop_header
      %s15 = sphi 0, %s19
      %p16 = scmp.ge.s32.totalorder %s15, 4
      %s25 = sphi 0, %s27
      %s28 = sphi 0, %s25
      %s29 = sphi 0, %s28
      %s45 = sphi 0, %s29
      %s51 = sphi 0, %s53
      %s54 = sphi 0, %s51
      %s55 = sphi 0, %s54
      %s71 = sphi 0, %s55
      %s75 = sphi 0, %s75
      %s77 = sphi 0, %s75
      %s78 = sphi 0, %s77
      %s92 = sphi 0, %s78
      %s96 = sphi 0, %s96
      %s98 = sphi 0, %s96
      %s99 = sphi 0, %s98
      %s113 = sphi 0, %s99
      %s117 = sphi 0, %s117
      %s119 = sphi 0, %s117
      %s120 = sphi 0, %s119
      %s134 = sphi 0, %s120
      %s138 = sphi 0, %s138
      %s140 = sphi 0, %s138
      %s141 = sphi 0, %s140
      %s155 = sphi 0, %s141
      %s159 = sphi 0, %s159
      %s161 = sphi 0, %s159
      %s162 = sphi 0, %s161
      %s176 = sphi 0, %s162
      %s180 = sphi 0, %s180
      %s182 = sphi 0, %s180
      %s183 = sphi 0, %s182
      %s197 = sphi 0, %s183
      %s203 = sphi 0, %s205
      %s206 = sphi 0, %s203
      %s207 = sphi 0, %s206
      %s223 = sphi 0, %s207
    $region4: #{encoder_fwd.4} parent=1 // loop_header_branch
      %18 = sbr.rel (%p16) target = $region8
    $region5: #{encoder_fwd.4} parent=1 // loop_body
      %s20 = ssub.s32 %s15, 1
      %s21 = ssub.s32 %s15, 2
      %s22 = sadd.s32 %s15, 1
      %s23 = ssub.s32 %s15, %s22
      %p24 = scmp.eq.s32.totalorder %s23, 0
      %s26 = sadd.s32 %s25, 1
      %s27 = scalar_select %p24, %s25, %s26
      %p30 = pneg %p24
      %p31 = scmp.eq.s32.totalorder %s15, 1
      %p32 = por %p30, %p31
      %p33 = scmp.ne.s32.totalorder %s25, %s28
      %p34 = scmp.eq.s32.totalorder %s15, 0
      %p35 = por %p33, %p34
      %p36 = scmp.ne.s32.totalorder %s25, %s28
      %p37 = scmp.eq.s32.totalorder %s20, 1
      %p38 = por %p36, %p37
      %p39 = scmp.ne.s32.totalorder %s28, %s29
      %p40 = scmp.eq.s32.totalorder %s20, 0
      %p41 = por %p39, %p40
      %p42 = scmp.ne.s32.totalorder %s28, %s29
      %p43 = scmp.eq.s32.totalorder %s21, 1
      %p44 = por %p42, %p43
      %p46 = scmp.ne.s32.totalorder %s29, %s45
      %p47 = scmp.eq.s32.totalorder %s21, 0
      %p48 = por %p46, %p47
      %s49 = ssub.s32 %s15, %s22
      %p50 = scmp.eq.s32.totalorder %s49, 0
      %s52 = sadd.s32 %s51, 1
      %s53 = scalar_select %p50, %s51, %s52
      %p56 = pneg %p50
      %p57 = scmp.eq.s32.totalorder %s15, 1
      %p58 = por %p56, %p57
      %p59 = scmp.ne.s32.totalorder %s51, %s54
      %p60 = scmp.eq.s32.totalorder %s15, 0
      %p61 = por %p59, %p60
      %p62 = scmp.ne.s32.totalorder %s51, %s54
      %p63 = scmp.eq.s32.totalorder %s20, 1
      %p64 = por %p62, %p63
      %p65 = scmp.ne.s32.totalorder %s54, %s55
      %p66 = scmp.eq.s32.totalorder %s20, 0
      %p67 = por %p65, %p66
      %p68 = scmp.ne.s32.totalorder %s54, %s55
      %p69 = scmp.eq.s32.totalorder %s21, 1
      %p70 = por %p68, %p69
      %p72 = scmp.ne.s32.totalorder %s55, %s71
      %p73 = scmp.eq.s32.totalorder %s21, 0
      %p74 = por %p72, %p73
      %s76 = sadd.s32 %s75, 1
      %p79 = scmp.eq.s32.totalorder %s15, 1
      %p80 = scmp.ne.s32.totalorder %s75, %s77
      %p81 = scmp.eq.s32.totalorder %s15, 0
      %p82 = por %p80, %p81
      %p83 = scmp.ne.s32.totalorder %s75, %s77
      %p84 = scmp.eq.s32.totalorder %s20, 1
      %p85 = por %p83, %p84
      %p86 = scmp.ne.s32.totalorder %s77, %s78
      %p87 = scmp.eq.s32.totalorder %s20, 0
      %p88 = por %p86, %p87
      %p89 = scmp.ne.s32.totalorder %s77, %s78
      %p90 = scmp.eq.s32.totalorder %s21, 1
      %p91 = por %p89, %p90
      %p93 = scmp.ne.s32.totalorder %s78, %s92
      %p94 = scmp.eq.s32.totalorder %s21, 0
      %p95 = por %p93, %p94
      %s97 = sadd.s32 %s96, 1
      %p100 = scmp.eq.s32.totalorder %s15, 1
      %p101 = scmp.ne.s32.totalorder %s96, %s98
      %p102 = scmp.eq.s32.totalorder %s15, 0
      %p103 = por %p101, %p102
      %p104 = scmp.ne.s32.totalorder %s96, %s98
      %p105 = scmp.eq.s32.totalorder %s20, 1
      %p106 = por %p104, %p105
      %p107 = scmp.ne.s32.totalorder %s98, %s99
      %p108 = scmp.eq.s32.totalorder %s20, 0
      %p109 = por %p107, %p108
      %p110 = scmp.ne.s32.totalorder %s98, %s99
      %p111 = scmp.eq.s32.totalorder %s21, 1
      %p112 = por %p110, %p111
      %p114 = scmp.ne.s32.totalorder %s99, %s113
      %p115 = scmp.eq.s32.totalorder %s21, 0
      %p116 = por %p114, %p115
      %s118 = sadd.s32 %s117, 1
      %p121 = scmp.eq.s32.totalorder %s15, 1
      %p122 = scmp.ne.s32.totalorder %s117, %s119
      %p123 = scmp.eq.s32.totalorder %s15, 0
      %p124 = por %p122, %p123
      %p125 = scmp.ne.s32.totalorder %s117, %s119
      %p126 = scmp.eq.s32.totalorder %s20, 1
      %p127 = por %p125, %p126
      %p128 = scmp.ne.s32.totalorder %s119, %s120
      %p129 = scmp.eq.s32.totalorder %s20, 0
      %p130 = por %p128, %p129
      %p131 = scmp.ne.s32.totalorder %s119, %s120
      %p132 = scmp.eq.s32.totalorder %s21, 1
      %p133 = por %p131, %p132
      %p135 = scmp.ne.s32.totalorder %s120, %s134
      %p136 = scmp.eq.s32.totalorder %s21, 0
      %p137 = por %p135, %p136
      %s139 = sadd.s32 %s138, 1
      %p142 = scmp.eq.s32.totalorder %s15, 1
      %p143 = scmp.ne.s32.totalorder %s138, %s140
      %p144 = scmp.eq.s32.totalorder %s15, 0
      %p145 = por %p143, %p144
      %p146 = scmp.ne.s32.totalorder %s138, %s140
      %p147 = scmp.eq.s32.totalorder %s20, 1
      %p148 = por %p146, %p147
      %p149 = scmp.ne.s32.totalorder %s140, %s141
      %p150 = scmp.eq.s32.totalorder %s20, 0
      %p151 = por %p149, %p150
      %p152 = scmp.ne.s32.totalorder %s140, %s141
      %p153 = scmp.eq.s32.totalorder %s21, 1
      %p154 = por %p152, %p153
      %p156 = scmp.ne.s32.totalorder %s141, %s155
      %p157 = scmp.eq.s32.totalorder %s21, 0
      %p158 = por %p156, %p157
      %s160 = sadd.s32 %s159, 1
      %p163 = scmp.eq.s32.totalorder %s15, 1
      %p164 = scmp.ne.s32.totalorder %s159, %s161
      %p165 = scmp.eq.s32.totalorder %s15, 0
      %p166 = por %p164, %p165
      %p167 = scmp.ne.s32.totalorder %s159, %s161
      %p168 = scmp.eq.s32.totalorder %s20, 1
      %p169 = por %p167, %p168
      %p170 = scmp.ne.s32.totalorder %s161, %s162
      %p171 = scmp.eq.s32.totalorder %s20, 0
      %p172 = por %p170, %p171
      %p173 = scmp.ne.s32.totalorder %s161, %s162
      %p174 = scmp.eq.s32.totalorder %s21, 1
      %p175 = por %p173, %p174
      %p177 = scmp.ne.s32.totalorder %s162, %s176
      %p178 = scmp.eq.s32.totalorder %s21, 0
      %p179 = por %p177, %p178
      %s181 = sadd.s32 %s180, 1
      %p184 = scmp.eq.s32.totalorder %s15, 1
      %p185 = scmp.ne.s32.totalorder %s180, %s182
      %p186 = scmp.eq.s32.totalorder %s15, 0
      %p187 = por %p185, %p186
      %p188 = scmp.ne.s32.totalorder %s180, %s182
      %p189 = scmp.eq.s32.totalorder %s20, 1
      %p190 = por %p188, %p189
      %p191 = scmp.ne.s32.totalorder %s182, %s183
      %p192 = scmp.eq.s32.totalorder %s20, 0
      %p193 = por %p191, %p192
      %p194 = scmp.ne.s32.totalorder %s182, %s183
      %p195 = scmp.eq.s32.totalorder %s21, 1
      %p196 = por %p194, %p195
      %p198 = scmp.ne.s32.totalorder %s183, %s197
      %p199 = scmp.eq.s32.totalorder %s21, 0
      %p200 = por %p198, %p199
      %s201 = ssub.s32 %s15, %s22
      %p202 = scmp.eq.s32.totalorder %s201, 0
      %s204 = sadd.s32 %s203, 1
      %s205 = scalar_select %p202, %s203, %s204
      %p208 = pneg %p202
      %p209 = scmp.eq.s32.totalorder %s15, 1
      %p210 = por %p208, %p209
      %p211 = scmp.ne.s32.totalorder %s203, %s206
      %p212 = scmp.eq.s32.totalorder %s15, 0
      %p213 = por %p211, %p212
      %p214 = scmp.ne.s32.totalorder %s203, %s206
      %p215 = scmp.eq.s32.totalorder %s20, 1
      %p216 = por %p214, %p215
      %p217 = scmp.ne.s32.totalorder %s206, %s207
      %p218 = scmp.eq.s32.totalorder %s20, 0
      %p219 = por %p217, %p218
      %p220 = scmp.ne.s32.totalorder %s206, %s207
      %p221 = scmp.eq.s32.totalorder %s21, 1
      %p222 = por %p220, %p221
      %p224 = scmp.ne.s32.totalorder %s207, %s223
      %p225 = scmp.eq.s32.totalorder %s21, 0
      %p226 = por %p224, %p225
      %p227 = scmp.le.s32.totalorder 1, %s15
      %p228 = scmp.lt.s32.totalorder %s15, 3
      %p229 = pnand %p227, %p228
      %p230 = pneg %p229
      // Predicated region
      $region9: #{encoder_fwd.4} parent=5 // pred_check
        _
      $region10: #{encoder_fwd.4} parent=5 // pred_check_branch
        %232 = sbr.rel (%p229) target = $region12
      $region11: #{encoder_fwd.4} parent=5 // pred_region
        %s233 = ssub.s32 %s15, 1
        // Predicated region
        $region13: #{encoder_fwd.4} parent=11 // pred_check
          %p234 = pneg %p88
        $region14: #{encoder_fwd.4} parent=11 // pred_check_branch
          %236 = sbr.rel (%p234) target = $region16
        $region15: #{encoder_fwd.4} parent=11 // pred_region
          _
        $region16: #{encoder_fwd.4} parent=11 // pred_fallthru
          _
        // Predicated region
        $region17: #{encoder_fwd.4} parent=11 // pred_check
          %p237 = pneg %p109
        $region18: #{encoder_fwd.4} parent=11 // pred_check_branch
          %239 = sbr.rel (%p237) target = $region20
        $region19: #{encoder_fwd.4} parent=11 // pred_region
          _
        $region20: #{encoder_fwd.4} parent=11 // pred_fallthru
          _
        // Predicated region
        $region21: #{encoder_fwd.4} parent=11 // pred_check
          %p240 = pneg %p130
        $region22: #{encoder_fwd.4} parent=11 // pred_check_branch
          %242 = sbr.rel (%p240) target = $region24
        $region23: #{encoder_fwd.4} parent=11 // pred_region
          %s244 = ssub.s32 512, 512
          %245 = vsyncadd [#allocation3], %s244
          %s246 = sshll.u32 [#allocation2], 4
          %s247 = int_to_ptr.vmem [resolvable:$true] %s246
          %252 = dma.hbm_to_vmem [thread:$0]  %s4, 512, %s247, [#allocation3], 128, 128, 8
        $region24: #{encoder_fwd.4} parent=11 // pred_fallthru
          _
        // Predicated region
        $region25: #{encoder_fwd.4} parent=11 // pred_check
          %p253 = pneg %p151
        $region26: #{encoder_fwd.4} parent=11 // pred_check_branch
          %255 = sbr.rel (%p253) target = $region28
        $region27: #{encoder_fwd.4} parent=11 // pred_region
          _
        $region28: #{encoder_fwd.4} parent=11 // pred_fallthru
          _
        // Predicated region
        $region29: #{encoder_fwd.4} parent=11 // pred_check
          %p256 = pneg %p172
        $region30: #{encoder_fwd.4} parent=11 // pred_check_branch
          %258 = sbr.rel (%p256) target = $region32
        $region31: #{encoder_fwd.4} parent=11 // pred_region
          _
        $region32: #{encoder_fwd.4} parent=11 // pred_fallthru
          _
        // Predicated region
        $region33: #{encoder_fwd.4} parent=11 // pred_check
          %p259 = pneg %p193
        $region34: #{encoder_fwd.4} parent=11 // pred_check_branch
          %261 = sbr.rel (%p259) target = $region36
        $region35: #{encoder_fwd.4} parent=11 // pred_region
          _
        $region36: #{encoder_fwd.4} parent=11 // pred_fallthru
          _
      $region12: #{encoder_fwd.4} parent=5 // pred_fallthru
        _
      %p262 = scmp.lt.s32.totalorder %s15, 2
      // Predicated region
      $region37: #{encoder_fwd.4} parent=5 // pred_check
        %p263 = pneg %p262
      $region38: #{encoder_fwd.4} parent=5 // pred_check_branch
        %265 = sbr.rel (%p263) target = $region40
      $region39: #{encoder_fwd.4} parent=5 // pred_region
        // Predicated region
        $region41: #{encoder_fwd.4} parent=39 // pred_check
          %p266 = pneg %p35
        $region42: #{encoder_fwd.4} parent=39 // pred_check_branch
          %268 = sbr.rel (%p266) target = $region44
        $region43: #{encoder_fwd.4} parent=39 // pred_region
          %p269 = scmp.lt.s32.totalorder %s15, 1
          %s270 = scalar_select %p269, %s15, 1
          %s271 = smul.addr %s270, 8
          %s272 = scalar_lea.vmem %s0, %s271
        $region44: #{encoder_fwd.4} parent=39 // pred_fallthru
          _
        // Predicated region
        $region45: #{encoder_fwd.4} parent=39 // pred_check
          %p273 = pneg %p61
        $region46: #{encoder_fwd.4} parent=39 // pred_check_branch
          %275 = sbr.rel (%p273) target = $region48
        $region47: #{encoder_fwd.4} parent=39 // pred_region
          %p276 = scmp.lt.s32.totalorder %s15, 1
          %s277 = scalar_select %p276, %s15, 1
          %s278 = smul.addr %s277, 8
          %s279 = scalar_lea.vmem %s1, %s278
        $region48: #{encoder_fwd.4} parent=39 // pred_fallthru
          _
      $region40: #{encoder_fwd.4} parent=5 // pred_fallthru
        _
      %p280 = scmp.le.s32.totalorder 1, %s15
      %p281 = scmp.lt.s32.totalorder %s15, 3
      %p282 = pnand %p280, %p281
      %p283 = pneg %p282
      // Predicated region
      $region49: #{encoder_fwd.4} parent=5 // pred_check
        _
      $region50: #{encoder_fwd.4} parent=5 // pred_check_branch
        %285 = sbr.rel (%p282) target = $region52
      $region51: #{encoder_fwd.4} parent=5 // pred_region
        %s286 = ssub.s32 %s15, 1
        // Predicated region
        $region53: #{encoder_fwd.4} parent=51 // pred_check
          %p287 = pneg %p130
        $region54: #{encoder_fwd.4} parent=51 // pred_check_branch
          %289 = sbr.rel (%p287) target = $region56
        $region55: #{encoder_fwd.4} parent=51 // pred_region
          %290 = dma.done [#allocation3], 512
        $region56: #{encoder_fwd.4} parent=51 // pred_fallthru
          _
        %p291 = scmp.lt.s32.totalorder %s20, 1
        %s292 = scalar_select %p291, %s20, 1
        %s293 = smul.addr %s292, 8
        %s294 = scalar_lea.vmem %s0, %s293
        %p295 = pneg %p41
        %p296 = pneg %p38
        %p297 = scmp.lt.s32.totalorder %s20, 1
        %s298 = scalar_select %p297, %s20, 1
        %s299 = smul.addr %s298, 8
        %s300 = scalar_lea.vmem %s1, %s299
        %p301 = pneg %p67
        %p302 = pneg %p64
        %p303 = pneg %p88
        %p304 = pneg %p85
        %p305 = pneg %p109
        %p306 = pneg %p106
        %p307 = pneg %p130
        %p308 = pneg %p127
        %p309 = pneg %p151
        %p310 = pneg %p148
        %p311 = pneg %p172
        %p312 = pneg %p169
        %p313 = pneg %p193
        %p314 = pneg %p190
        %p315 = pneg %p219
        %p316 = pneg %p216
        %p317 = scmp.lt.s32.totalorder %s20, 1
        %s318 = scalar_select %p317, %s20, 1
        %s319 = smul.addr %s318, 8
        %s320 = scalar_lea.vmem %s8, %s319
        %p321 = scmp.lt.s32.totalorder %s20, 1
        %s322 = scalar_select %p321, %s20, 1
        %s323 = smul.addr %s322, 8
        %s324 = scalar_lea.vmem %s0, %s323
        %p325 = scmp.lt.s32.totalorder %s20, 1
        %s326 = scalar_select %p325, %s20, 1
        %s327 = smul.addr %s326, 8
        %s328 = scalar_lea.vmem %s1, %s327
        %p329 = scmp.lt.s32.totalorder %s20, 1
        %s330 = scalar_select %p329, %s20, 1
        %s331 = smul.addr %s330, 8
        %s332 = scalar_lea.vmem %s8, %s331
        %v333 = vld [vmem:[%s324] sm:$0xff]
        %v334 = vld [vmem:[%s2] sm:$0xff]
        %v335 = vld [vmem:[%s2 + $0x8] sm:$0xff]
        %v336 = vld [vmem:[%s2 + $0x10] sm:$0xff]
        %v337 = vld [vmem:[%s2 + $0x18] sm:$0xff]
        %v338 = vld [vmem:[%s3] sm:$0x1]
        %v340 = vlaneseq
        %v341 = vshrl.u32 %v340, 7
        %v342 = vsub.s32 0, %v341
        %v343 = vrot.slane %v338, %v342
        %vm345 = vcmask 261120
        %v347 = vsel %vm345, %v333, 0
        %349 = vmatprep.subr.mxu0 0.0
        %350 = vmatpush1.msra.mxu0 %v334
        %351 = vmatprep.subr.mxu0 0.0
        %352 = vmatpush1.msra.mxu0 %v335
        %353 = vmatprep.subr.mxu0 0.0
        %354 = vmatpush1.msra.mxu0 %v336
        %355 = vmatprep.subr.mxu0 0.0
        %356 = vmatpush1.msra.mxu0 %v337
        %357 = vmatprep.subr.mxu0 0.0
        %358 = vmatpush1.msra.mxu0 0.0
        %359 = vmatprep.subr.mxu0 0.0
        %360 = vmatpush1.msra.mxu0 0.0
        %361 = vmatprep.subr.mxu0 0.0
        %362 = vmatpush1.msra.mxu0 0.0
        %363 = vmatprep.subr.mxu0 0.0
        %364 = vmatpush1.msra.mxu0 0.0
        %365 = vmatprep.subr.mxu0 0.0
        %366 = vmatpush1.msra.mxu0 0.0
        %367 = vmatprep.subr.mxu0 0.0
        %368 = vmatpush1.msra.mxu0 0.0
        %369 = vmatprep.subr.mxu0 0.0
        %370 = vmatpush1.msra.mxu0 0.0
        %371 = vmatprep.subr.mxu0 0.0
        %372 = vmatpush1.msra.mxu0 0.0
        %373 = vmatprep.subr.mxu0 0.0
        %374 = vmatpush1.msra.mxu0 0.0
        %375 = vmatprep.subr.mxu0 0.0
        %376 = vmatpush1.msra.mxu0 0.0
        %377 = vmatprep.subr.mxu0 0.0
        %378 = vmatpush1.msra.mxu0 0.0
        %379 = vmatprep.subr.mxu0 0.0
        %380 = vmatpush1.msra.mxu0 0.0
        %381 = vmatprep.subr.mxu0 0.0
        %382 = vmatpush1.msra.mxu0 0.0
        %383 = vmatprep.subr.mxu0 0.0
        %384 = vmatpush1.msra.mxu0 0.0
        %385 = vmatprep.subr.mxu0 0.0
        %386 = vmatpush1.msra.mxu0 0.0
        %387 = vmatprep.subr.mxu0 0.0
        %388 = vmatpush1.msra.mxu0 0.0
        %389 = vmatprep.subr.mxu0 0.0
        %390 = vmatpush1.msra.mxu0 0.0
        %391 = vmatprep.subr.mxu0 0.0
        %392 = vmatpush1.msra.mxu0 0.0
        %393 = vmatprep.subr.mxu0 0.0
        %394 = vmatpush1.msra.mxu0 0.0
        %395 = vmatprep.subr.mxu0 0.0
        %396 = vmatpush1.msra.mxu0 0.0
        %397 = vmatprep.subr.mxu0 0.0
        %398 = vmatpush1.msra.mxu0 0.0
        %399 = vmatprep.subr.mxu0 0.0
        %400 = vmatpush1.msra.mxu0 0.0
        %401 = vmatprep.subr.mxu0 0.0
        %402 = vmatpush1.msra.mxu0 0.0
        %403 = vmatprep.subr.mxu0 0.0
        %404 = vmatpush1.msra.mxu0 0.0
        %405 = vmatprep.subr.mxu0 0.0
        %406 = vmatpush1.msra.mxu0 0.0
        %407 = vmatprep.subr.mxu0 0.0
        %408 = vmatpush1.msra.mxu0 0.0
        %409 = vmatprep.subr.mxu0 0.0
        %410 = vmatpush1.msra.mxu0 0.0
        %411 = vmatprep.subr.mxu0 0.0
        %412 = vmatpush1.msra.mxu0 0.0
        %413 = vmatprep.mubr.f32.mxu0 0.0
        %414 = vmatmul.mubr.f32.gmra.mrb[0].mxu0 %v347
        %v415 = vpop.f32.mrb[0].mxu0
        %v416 = vadd.f32 %v343, %v415
        %v417 = vpop.f32.mrb[0].mxu0
        %418 = vdwg.mxu0
        %v419 = vld [vmem:[%s328] sm:$0xff]
        %vm420 = vcmp.gt.f32.partialorder %v419, 0.5
        %422 = vrot.lane.b32.xlu0 %v416, 96
        %v423 = vpop.permute.xlu0 %422
        %vm424 = vcmask 64512
        %v425 = vsel %vm424, %v416, 0
        %v427 = vsel %vm424, %v423, 0
        %429 = vmatprep.subr.mxu0 0.0
        %430 = vmatpush1.xpose.msra.mxu0 %v427
        %431 = vmatprep.subr.mxu0 0.0
        %432 = vmatpush1.xpose.msra.mxu0 0.0
        %433 = vmatprep.subr.mxu0 0.0
        %434 = vmatpush1.xpose.msra.mxu0 0.0
        %435 = vmatprep.subr.mxu0 0.0
        %436 = vmatpush1.xpose.msra.mxu0 0.0
        %437 = vmatprep.subr.mxu0 0.0
        %438 = vmatpush1.xpose.msra.mxu0 0.0
        %439 = vmatprep.subr.mxu0 0.0
        %440 = vmatpush1.xpose.msra.mxu0 0.0
        %441 = vmatprep.subr.mxu0 0.0
        %442 = vmatpush1.xpose.msra.mxu0 0.0
        %443 = vmatprep.subr.mxu0 0.0
        %444 = vmatpush1.xpose.msra.mxu0 0.0
        %445 = vmatprep.subr.mxu0 0.0
        %446 = vmatpush1.xpose.msra.mxu0 0.0
        %447 = vmatprep.subr.mxu0 0.0
        %448 = vmatpush1.xpose.msra.mxu0 0.0
        %449 = vmatprep.subr.mxu0 0.0
        %450 = vmatpush1.xpose.msra.mxu0 0.0
        %451 = vmatprep.subr.mxu0 0.0
        %452 = vmatpush1.xpose.msra.mxu0 0.0
        %453 = vmatprep.subr.mxu0 0.0
        %454 = vmatpush1.xpose.msra.mxu0 0.0
        %455 = vmatprep.subr.mxu0 0.0
        %456 = vmatpush1.xpose.msra.mxu0 0.0
        %457 = vmatprep.subr.mxu0 0.0
        %458 = vmatpush1.xpose.msra.mxu0 0.0
        %459 = vmatprep.subr.mxu0 0.0
        %460 = vmatpush1.xpose.msra.mxu0 0.0
        %461 = vmatprep.subr.mxu0 0.0
        %462 = vmatpush1.xpose.msra.mxu0 0.0
        %463 = vmatprep.subr.mxu0 0.0
        %464 = vmatpush1.xpose.msra.mxu0 0.0
        %465 = vmatprep.subr.mxu0 0.0
        %466 = vmatpush1.xpose.msra.mxu0 0.0
        %467 = vmatprep.subr.mxu0 0.0
        %468 = vmatpush1.xpose.msra.mxu0 0.0
        %469 = vmatprep.subr.mxu0 0.0
        %470 = vmatpush1.xpose.msra.mxu0 0.0
        %471 = vmatprep.subr.mxu0 0.0
        %472 = vmatpush1.xpose.msra.mxu0 0.0
        %473 = vmatprep.subr.mxu0 0.0
        %474 = vmatpush1.xpose.msra.mxu0 0.0
        %475 = vmatprep.subr.mxu0 0.0
        %476 = vmatpush1.xpose.msra.mxu0 0.0
        %477 = vmatprep.subr.mxu0 0.0
        %478 = vmatpush1.xpose.msra.mxu0 0.0
        %479 = vmatprep.subr.mxu0 0.0
        %480 = vmatpush1.xpose.msra.mxu0 0.0
        %481 = vmatprep.subr.mxu0 0.0
        %482 = vmatpush1.xpose.msra.mxu0 0.0
        %483 = vmatprep.subr.mxu0 0.0
        %484 = vmatpush1.xpose.msra.mxu0 0.0
        %485 = vmatprep.subr.mxu0 0.0
        %486 = vmatpush1.xpose.msra.mxu0 0.0
        %487 = vmatprep.subr.mxu0 0.0
        %488 = vmatpush1.xpose.msra.mxu0 0.0
        %489 = vmatprep.subr.mxu0 0.0
        %490 = vmatpush1.xpose.msra.mxu0 0.0
        %491 = vmatprep.subr.mxu0 0.0
        %492 = vmatpush1.xpose.msra.mxu0 0.0
        %493 = vmatprep.mubr.f32.mxu0 0.0
        %494 = vmatmul.mubr.f32.gmra.mrb[0].mxu0 %v425
        %v495 = vpop.f32.mrb[0].mxu0
        %v496 = vadd.f32 0.0, %v495
        %v497 = vpop.f32.mrb[0].mxu0
        %498 = vdwg.mxu0
        %v499 = vmul.f32 %v496, 0.35355338
        %v500 = vsel %vm420, -1e+30, %v499
        %v501 = vsel %vm424, %v500, -inf
        %502 = vmax.xlane.f32.xlu0 %v501
        %v503 = vpop.xlane.xlu0 %502
        %v504 = vsub.f32 %v500, %v503
        %v505 = vmul.f32 %v504, 1.442695
        %v506 = vpow.pop %v505
        %v507 = vsel %vm424, %v506, 0.0
        %508 = vadd.xlane.f32.xlu0 %v507
        %v509 = vpop.xlane.xlu0 %508
        %v510 = vrcp.pop %v509
        %v511 = vmul.f32 %v506, %v510
        %512 = vrot.lane.b32.xlu0 %v416, 64
        %v513 = vpop.permute.xlu0 %512
        %v516 = vsel %vm424, %v511, 0
        %518 = vmatprep.subr.mxu0 0.0
        %519 = vmatpush1.msra.mxu0 %v513
        %520 = vmatprep.subr.mxu0 0.0
        %521 = vmatpush1.msra.mxu0 0.0
        %522 = vmatprep.subr.mxu0 0.0
        %523 = vmatpush1.msra.mxu0 0.0
        %524 = vmatprep.subr.mxu0 0.0
        %525 = vmatpush1.msra.mxu0 0.0
        %526 = vmatprep.subr.mxu0 0.0
        %527 = vmatpush1.msra.mxu0 0.0
        %528 = vmatprep.subr.mxu0 0.0
        %529 = vmatpush1.msra.mxu0 0.0
        %530 = vmatprep.subr.mxu0 0.0
        %531 = vmatpush1.msra.mxu0 0.0
        %532 = vmatprep.subr.mxu0 0.0
        %533 = vmatpush1.msra.mxu0 0.0
        %534 = vmatprep.subr.mxu0 0.0
        %535 = vmatpush1.msra.mxu0 0.0
        %536 = vmatprep.subr.mxu0 0.0
        %537 = vmatpush1.msra.mxu0 0.0
        %538 = vmatprep.subr.mxu0 0.0
        %539 = vmatpush1.msra.mxu0 0.0
        %540 = vmatprep.subr.mxu0 0.0
        %541 = vmatpush1.msra.mxu0 0.0
        %542 = vmatprep.subr.mxu0 0.0
        %543 = vmatpush1.msra.mxu0 0.0
        %544 = vmatprep.subr.mxu0 0.0
        %545 = vmatpush1.msra.mxu0 0.0
        %546 = vmatprep.subr.mxu0 0.0
        %547 = vmatpush1.msra.mxu0 0.0
        %548 = vmatprep.subr.mxu0 0.0
        %549 = vmatpush1.msra.mxu0 0.0
        %550 = vmatprep.subr.mxu0 0.0
        %551 = vmatpush1.msra.mxu0 0.0
        %552 = vmatprep.subr.mxu0 0.0
        %553 = vmatpush1.msra.mxu0 0.0
        %554 = vmatprep.subr.mxu0 0.0
        %555 = vmatpush1.msra.mxu0 0.0
        %556 = vmatprep.subr.mxu0 0.0
        %557 = vmatpush1.msra.mxu0 0.0
        %558 = vmatprep.subr.mxu0 0.0
        %559 = vmatpush1.msra.mxu0 0.0
        %560 = vmatprep.subr.mxu0 0.0
        %561 = vmatpush1.msra.mxu0 0.0
        %562 = vmatprep.subr.mxu0 0.0
        %563 = vmatpush1.msra.mxu0 0.0
        %564 = vmatprep.subr.mxu0 0.0
        %565 = vmatpush1.msra.mxu0 0.0
        %566 = vmatprep.subr.mxu0 0.0
        %567 = vmatpush1.msra.mxu0 0.0
        %568 = vmatprep.subr.mxu0 0.0
        %569 = vmatpush1.msra.mxu0 0.0
        %570 = vmatprep.subr.mxu0 0.0
        %571 = vmatpush1.msra.mxu0 0.0
        %572 = vmatprep.subr.mxu0 0.0
        %573 = vmatpush1.msra.mxu0 0.0
        %574 = vmatprep.subr.mxu0 0.0
        %575 = vmatpush1.msra.mxu0 0.0
        %576 = vmatprep.subr.mxu0 0.0
        %577 = vmatpush1.msra.mxu0 0.0
        %578 = vmatprep.subr.mxu0 0.0
        %579 = vmatpush1.msra.mxu0 0.0
        %580 = vmatprep.subr.mxu0 0.0
        %581 = vmatpush1.msra.mxu0 0.0
        %582 = vmatprep.mubr.f32.mxu0 0.0
        %583 = vmatmul.mubr.f32.gmra.mrb[0].mxu0 %v516
        %v584 = vpop.f32.mrb[0].mxu0
        %v585 = vadd.f32 0.0, %v584
        %v586 = vpop.f32.mrb[0].mxu0
        %587 = vdwg.mxu0
        %588 = vrot.lane.b32.xlu0 %v416, 120
        %v589 = vpop.permute.xlu0 %588
        %590 = vrot.lane.b32.xlu0 %v416, 88
        %v591 = vpop.permute.xlu0 %590
        %v592 = vsel %vm424, %v589, 0
        %v594 = vsel %vm424, %v591, 0
        %596 = vmatprep.subr.mxu0 0.0
        %597 = vmatpush1.xpose.msra.mxu0 %v594
        %598 = vmatprep.subr.mxu0 0.0
        %599 = vmatpush1.xpose.msra.mxu0 0.0
        %600 = vmatprep.subr.mxu0 0.0
        %601 = vmatpush1.xpose.msra.mxu0 0.0
        %602 = vmatprep.subr.mxu0 0.0
        %603 = vmatpush1.xpose.msra.mxu0 0.0
        %604 = vmatprep.subr.mxu0 0.0
        %605 = vmatpush1.xpose.msra.mxu0 0.0
        %606 = vmatprep.subr.mxu0 0.0
        %607 = vmatpush1.xpose.msra.mxu0 0.0
        %608 = vmatprep.subr.mxu0 0.0
        %609 = vmatpush1.xpose.msra.mxu0 0.0
        %610 = vmatprep.subr.mxu0 0.0
        %611 = vmatpush1.xpose.msra.mxu0 0.0
        %612 = vmatprep.subr.mxu0 0.0
        %613 = vmatpush1.xpose.msra.mxu0 0.0
        %614 = vmatprep.subr.mxu0 0.0
        %615 = vmatpush1.xpose.msra.mxu0 0.0
        %616 = vmatprep.subr.mxu0 0.0
        %617 = vmatpush1.xpose.msra.mxu0 0.0
        %618 = vmatprep.subr.mxu0 0.0
        %619 = vmatpush1.xpose.msra.mxu0 0.0
        %620 = vmatprep.subr.mxu0 0.0
        %621 = vmatpush1.xpose.msra.mxu0 0.0
        %622 = vmatprep.subr.mxu0 0.0
        %623 = vmatpush1.xpose.msra.mxu0 0.0
        %624 = vmatprep.subr.mxu0 0.0
        %625 = vmatpush1.xpose.msra.mxu0 0.0
        %626 = vmatprep.subr.mxu0 0.0
        %627 = vmatpush1.xpose.msra.mxu0 0.0
        %628 = vmatprep.subr.mxu0 0.0
        %629 = vmatpush1.xpose.msra.mxu0 0.0
        %630 = vmatprep.subr.mxu0 0.0
        %631 = vmatpush1.xpose.msra.mxu0 0.0
        %632 = vmatprep.subr.mxu0 0.0
        %633 = vmatpush1.xpose.msra.mxu0 0.0
        %634 = vmatprep.subr.mxu0 0.0
        %635 = vmatpush1.xpose.msra.mxu0 0.0
        %636 = vmatprep.subr.mxu0 0.0
        %637 = vmatpush1.xpose.msra.mxu0 0.0
        %638 = vmatprep.subr.mxu0 0.0
        %639 = vmatpush1.xpose.msra.mxu0 0.0
        %640 = vmatprep.subr.mxu0 0.0
        %641 = vmatpush1.xpose.msra.mxu0 0.0
        %642 = vmatprep.subr.mxu0 0.0
        %643 = vmatpush1.xpose.msra.mxu0 0.0
        %644 = vmatprep.subr.mxu0 0.0
        %645 = vmatpush1.xpose.msra.mxu0 0.0
        %646 = vmatprep.subr.mxu0 0.0
        %647 = vmatpush1.xpose.msra.mxu0 0.0
        %648 = vmatprep.subr.mxu0 0.0
        %649 = vmatpush1.xpose.msra.mxu0 0.0
        %650 = vmatprep.subr.mxu0 0.0
        %651 = vmatpush1.xpose.msra.mxu0 0.0
        %652 = vmatprep.subr.mxu0 0.0
        %653 = vmatpush1.xpose.msra.mxu0 0.0
        %654 = vmatprep.subr.mxu0 0.0
        %655 = vmatpush1.xpose.msra.mxu0 0.0
        %656 = vmatprep.subr.mxu0 0.0
        %657 = vmatpush1.xpose.msra.mxu0 0.0
        %658 = vmatprep.subr.mxu0 0.0
        %659 = vmatpush1.xpose.msra.mxu0 0.0
        %660 = vmatprep.mubr.f32.mxu0 0.0
        %661 = vmatmul.mubr.f32.gmra.mrb[0].mxu0 %v592
        %v662 = vpop.f32.mrb[0].mxu0
        %v663 = vadd.f32 0.0, %v662
        %v664 = vpop.f32.mrb[0].mxu0
        %665 = vdwg.mxu0
        %v666 = vmul.f32 %v663, 0.35355338
        %v667 = vsel %vm420, -1e+30, %v666
        %v668 = vsel %vm424, %v667, -inf
        %669 = vmax.xlane.f32.xlu0 %v668
        %v670 = vpop.xlane.xlu0 %669
        %v671 = vsub.f32 %v667, %v670
        %v672 = vmul.f32 %v671, 1.442695
        %v673 = vpow.pop %v672
        %v674 = vsel %vm424, %v673, 0.0
        %675 = vadd.xlane.f32.xlu0 %v674
        %v676 = vpop.xlane.xlu0 %675
        %v677 = vrcp.pop %v676
        %v678 = vmul.f32 %v673, %v677
        %679 = vrot.lane.b32.xlu0 %v416, 56
        %v680 = vpop.permute.xlu0 %679
        %v683 = vsel %vm424, %v678, 0
        %685 = vmatprep.subr.mxu0 0.0
        %686 = vmatpush1.msra.mxu0 %v680
        %687 = vmatprep.subr.mxu0 0.0
        %688 = vmatpush1.msra.mxu0 0.0
        %689 = vmatprep.subr.mxu0 0.0
        %690 = vmatpush1.msra.mxu0 0.0
        %691 = vmatprep.subr.mxu0 0.0
        %692 = vmatpush1.msra.mxu0 0.0
        %693 = vmatprep.subr.mxu0 0.0
        %694 = vmatpush1.msra.mxu0 0.0
        %695 = vmatprep.subr.mxu0 0.0
        %696 = vmatpush1.msra.mxu0 0.0
        %697 = vmatprep.subr.mxu0 0.0
        %698 = vmatpush1.msra.mxu0 0.0
        %699 = vmatprep.subr.mxu0 0.0
        %700 = vmatpush1.msra.mxu0 0.0
        %701 = vmatprep.subr.mxu0 0.0
        %702 = vmatpush1.msra.mxu0 0.0
        %703 = vmatprep.subr.mxu0 0.0
        %704 = vmatpush1.msra.mxu0 0.0
        %705 = vmatprep.subr.mxu0 0.0
        %706 = vmatpush1.msra.mxu0 0.0
        %707 = vmatprep.subr.mxu0 0.0
        %708 = vmatpush1.msra.mxu0 0.0
        %709 = vmatprep.subr.mxu0 0.0
        %710 = vmatpush1.msra.mxu0 0.0
        %711 = vmatprep.subr.mxu0 0.0
        %712 = vmatpush1.msra.mxu0 0.0
        %713 = vmatprep.subr.mxu0 0.0
        %714 = vmatpush1.msra.mxu0 0.0
        %715 = vmatprep.subr.mxu0 0.0
        %716 = vmatpush1.msra.mxu0 0.0
        %717 = vmatprep.subr.mxu0 0.0
        %718 = vmatpush1.msra.mxu0 0.0
        %719 = vmatprep.subr.mxu0 0.0
        %720 = vmatpush1.msra.mxu0 0.0
        %721 = vmatprep.subr.mxu0 0.0
        %722 = vmatpush1.msra.mxu0 0.0
        %723 = vmatprep.subr.mxu0 0.0
        %724 = vmatpush1.msra.mxu0 0.0
        %725 = vmatprep.subr.mxu0 0.0
        %726 = vmatpush1.msra.mxu0 0.0
        %727 = vmatprep.subr.mxu0 0.0
        %728 = vmatpush1.msra.mxu0 0.0
        %729 = vmatprep.subr.mxu0 0.0
        %730 = vmatpush1.msra.mxu0 0.0
        %731 = vmatprep.subr.mxu0 0.0
        %732 = vmatpush1.msra.mxu0 0.0
        %733 = vmatprep.subr.mxu0 0.0
        %734 = vmatpush1.msra.mxu0 0.0
        %735 = vmatprep.subr.mxu0 0.0
        %736 = vmatpush1.msra.mxu0 0.0
        %737 = vmatprep.subr.mxu0 0.0
        %738 = vmatpush1.msra.mxu0 0.0
        %739 = vmatprep.subr.mxu0 0.0
        %740 = vmatpush1.msra.mxu0 0.0
        %741 = vmatprep.subr.mxu0 0.0
        %742 = vmatpush1.msra.mxu0 0.0
        %743 = vmatprep.subr.mxu0 0.0
        %744 = vmatpush1.msra.mxu0 0.0
        %745 = vmatprep.subr.mxu0 0.0
        %746 = vmatpush1.msra.mxu0 0.0
        %747 = vmatprep.subr.mxu0 0.0
        %748 = vmatpush1.msra.mxu0 0.0
        %749 = vmatprep.mubr.f32.mxu0 0.0
        %750 = vmatmul.mubr.f32.gmra.mrb[0].mxu0 %v683
        %v751 = vpop.f32.mrb[0].mxu0
        %v752 = vadd.f32 0.0, %v751
        %v753 = vpop.f32.mrb[0].mxu0
        %754 = vdwg.mxu0
        %755 = vrot.lane.b32.xlu0 %v416, 112
        %v756 = vpop.permute.xlu0 %755
        %757 = vrot.lane.b32.xlu0 %v416, 80
        %v758 = vpop.permute.xlu0 %757
        %v759 = vsel %vm424, %v756, 0
        %v761 = vsel %vm424, %v758, 0
        %763 = vmatprep.subr.mxu0 0.0
        %764 = vmatpush1.xpose.msra.mxu0 %v761
        %765 = vmatprep.subr.mxu0 0.0
        %766 = vmatpush1.xpose.msra.mxu0 0.0
        %767 = vmatprep.subr.mxu0 0.0
        %768 = vmatpush1.xpose.msra.mxu0 0.0
        %769 = vmatprep.subr.mxu0 0.0
        %770 = vmatpush1.xpose.msra.mxu0 0.0
        %771 = vmatprep.subr.mxu0 0.0
        %772 = vmatpush1.xpose.msra.mxu0 0.0
        %773 = vmatprep.subr.mxu0 0.0
        %774 = vmatpush1.xpose.msra.mxu0 0.0
        %775 = vmatprep.subr.mxu0 0.0
        %776 = vmatpush1.xpose.msra.mxu0 0.0
        %777 = vmatprep.subr.mxu0 0.0
        %778 = vmatpush1.xpose.msra.mxu0 0.0
        %779 = vmatprep.subr.mxu0 0.0
        %780 = vmatpush1.xpose.msra.mxu0 0.0
        %781 = vmatprep.subr.mxu0 0.0
        %782 = vmatpush1.xpose.msra.mxu0 0.0
        %783 = vmatprep.subr.mxu0 0.0
        %784 = vmatpush1.xpose.msra.mxu0 0.0
        %785 = vmatprep.subr.mxu0 0.0
        %786 = vmatpush1.xpose.msra.mxu0 0.0
        %787 = vmatprep.subr.mxu0 0.0
        %788 = vmatpush1.xpose.msra.mxu0 0.0
        %789 = vmatprep.subr.mxu0 0.0
        %790 = vmatpush1.xpose.msra.mxu0 0.0
        %791 = vmatprep.subr.mxu0 0.0
        %792 = vmatpush1.xpose.msra.mxu0 0.0
        %793 = vmatprep.subr.mxu0 0.0
        %794 = vmatpush1.xpose.msra.mxu0 0.0
        %795 = vmatprep.subr.mxu0 0.0
        %796 = vmatpush1.xpose.msra.mxu0 0.0
        %797 = vmatprep.subr.mxu0 0.0
        %798 = vmatpush1.xpose.msra.mxu0 0.0
        %799 = vmatprep.subr.mxu0 0.0
        %800 = vmatpush1.xpose.msra.mxu0 0.0
        %801 = vmatprep.subr.mxu0 0.0
        %802 = vmatpush1.xpose.msra.mxu0 0.0
        %803 = vmatprep.subr.mxu0 0.0
        %804 = vmatpush1.xpose.msra.mxu0 0.0
        %805 = vmatprep.subr.mxu0 0.0
        %806 = vmatpush1.xpose.msra.mxu0 0.0
        %807 = vmatprep.subr.mxu0 0.0
        %808 = vmatpush1.xpose.msra.mxu0 0.0
        %809 = vmatprep.subr.mxu0 0.0
        %810 = vmatpush1.xpose.msra.mxu0 0.0
        %811 = vmatprep.subr.mxu0 0.0
        %812 = vmatpush1.xpose.msra.mxu0 0.0
        %813 = vmatprep.subr.mxu0 0.0
        %814 = vmatpush1.xpose.msra.mxu0 0.0
        %815 = vmatprep.subr.mxu0 0.0
        %816 = vmatpush1.xpose.msra.mxu0 0.0
        %817 = vmatprep.subr.mxu0 0.0
        %818 = vmatpush1.xpose.msra.mxu0 0.0
        %819 = vmatprep.subr.mxu0 0.0
        %820 = vmatpush1.xpose.msra.mxu0 0.0
        %821 = vmatprep.subr.mxu0 0.0
        %822 = vmatpush1.xpose.msra.mxu0 0.0
        %823 = vmatprep.subr.mxu0 0.0
        %824 = vmatpush1.xpose.msra.mxu0 0.0
        %825 = vmatprep.subr.mxu0 0.0
        %826 = vmatpush1.xpose.msra.mxu0 0.0
        %827 = vmatprep.mubr.f32.mxu0 0.0
        %828 = vmatmul.mubr.f32.gmra.mrb[0].mxu0 %v759
        %v829 = vpop.f32.mrb[0].mxu0
        %v830 = vadd.f32 0.0, %v829
        %v831 = vpop.f32.mrb[0].mxu0
        %832 = vdwg.mxu0
        %v833 = vmul.f32 %v830, 0.35355338
        %v834 = vsel %vm420, -1e+30, %v833
        %v835 = vsel %vm424, %v834, -inf
        %836 = vmax.xlane.f32.xlu0 %v835
        %v837 = vpop.xlane.xlu0 %836
        %v838 = vsub.f32 %v834, %v837
        %v839 = vmul.f32 %v838, 1.442695
        %v840 = vpow.pop %v839
        %v841 = vsel %vm424, %v840, 0.0
        %842 = vadd.xlane.f32.xlu0 %v841
        %v843 = vpop.xlane.xlu0 %842
        %v844 = vrcp.pop %v843
        %v845 = vmul.f32 %v840, %v844
        %846 = vrot.lane.b32.xlu0 %v416, 48
        %v847 = vpop.permute.xlu0 %846
        %v850 = vsel %vm424, %v845, 0
        %852 = vmatprep.subr.mxu0 0.0
        %853 = vmatpush1.msra.mxu0 %v847
        %854 = vmatprep.subr.mxu0 0.0
        %855 = vmatpush1.msra.mxu0 0.0
        %856 = vmatprep.subr.mxu0 0.0
        %857 = vmatpush1.msra.mxu0 0.0
        %858 = vmatprep.subr.mxu0 0.0
        %859 = vmatpush1.msra.mxu0 0.0
        %860 = vmatprep.subr.mxu0 0.0
        %861 = vmatpush1.msra.mxu0 0.0
        %862 = vmatprep.subr.mxu0 0.0
        %863 = vmatpush1.msra.mxu0 0.0
        %864 = vmatprep.subr.mxu0 0.0
        %865 = vmatpush1.msra.mxu0 0.0
        %866 = vmatprep.subr.mxu0 0.0
        %867 = vmatpush1.msra.mxu0 0.0
        %868 = vmatprep.subr.mxu0 0.0
        %869 = vmatpush1.msra.mxu0 0.0
        %870 = vmatprep.subr.mxu0 0.0
        %871 = vmatpush1.msra.mxu0 0.0
        %872 = vmatprep.subr.mxu0 0.0
        %873 = vmatpush1.msra.mxu0 0.0
        %874 = vmatprep.subr.mxu0 0.0
        %875 = vmatpush1.msra.mxu0 0.0
        %876 = vmatprep.subr.mxu0 0.0
        %877 = vmatpush1.msra.mxu0 0.0
        %878 = vmatprep.subr.mxu0 0.0
        %879 = vmatpush1.msra.mxu0 0.0
        %880 = vmatprep.subr.mxu0 0.0
        %881 = vmatpush1.msra.mxu0 0.0
        %882 = vmatprep.subr.mxu0 0.0
        %883 = vmatpush1.msra.mxu0 0.0
        %884 = vmatprep.subr.mxu0 0.0
        %885 = vmatpush1.msra.mxu0 0.0
        %886 = vmatprep.subr.mxu0 0.0
        %887 = vmatpush1.msra.mxu0 0.0
        %888 = vmatprep.subr.mxu0 0.0
        %889 = vmatpush1.msra.mxu0 0.0
        %890 = vmatprep.subr.mxu0 0.0
        %891 = vmatpush1.msra.mxu0 0.0
        %892 = vmatprep.subr.mxu0 0.0
        %893 = vmatpush1.msra.mxu0 0.0
        %894 = vmatprep.subr.mxu0 0.0
        %895 = vmatpush1.msra.mxu0 0.0
        %896 = vmatprep.subr.mxu0 0.0
        %897 = vmatpush1.msra.mxu0 0.0
        %898 = vmatprep.subr.mxu0 0.0
        %899 = vmatpush1.msra.mxu0 0.0
        %900 = vmatprep.subr.mxu0 0.0
        %901 = vmatpush1.msra.mxu0 0.0
        %902 = vmatprep.subr.mxu0 0.0
        %903 = vmatpush1.msra.mxu0 0.0
        %904 = vmatprep.subr.mxu0 0.0
        %905 = vmatpush1.msra.mxu0 0.0
        %906 = vmatprep.subr.mxu0 0.0
        %907 = vmatpush1.msra.mxu0 0.0
        %908 = vmatprep.subr.mxu0 0.0
        %909 = vmatpush1.msra.mxu0 0.0
        %910 = vmatprep.subr.mxu0 0.0
        %911 = vmatpush1.msra.mxu0 0.0
        %912 = vmatprep.subr.mxu0 0.0
        %913 = vmatpush1.msra.mxu0 0.0
        %914 = vmatprep.subr.mxu0 0.0
        %915 = vmatpush1.msra.mxu0 0.0
        %916 = vmatprep.mubr.f32.mxu0 0.0
        %917 = vmatmul.mubr.f32.gmra.mrb[0].mxu0 %v850
        %v918 = vpop.f32.mrb[0].mxu0
        %v919 = vadd.f32 0.0, %v918
        %v920 = vpop.f32.mrb[0].mxu0
        %921 = vdwg.mxu0
        %922 = vrot.lane.b32.xlu0 %v416, 104
        %v923 = vpop.permute.xlu0 %922
        %924 = vrot.lane.b32.xlu0 %v416, 72
        %v925 = vpop.permute.xlu0 %924
        %v926 = vsel %vm424, %v923, 0
        %v928 = vsel %vm424, %v925, 0
        %930 = vmatprep.subr.mxu0 0.0
        %931 = vmatpush1.xpose.msra.mxu0 %v928
        %932 = vmatprep.subr.mxu0 0.0
        %933 = vmatpush1.xpose.msra.mxu0 0.0
        %934 = vmatprep.subr.mxu0 0.0
        %935 = vmatpush1.xpose.msra.mxu0 0.0
        %936 = vmatprep.subr.mxu0 0.0
        %937 = vmatpush1.xpose.msra.mxu0 0.0
        %938 = vmatprep.subr.mxu0 0.0
        %939 = vmatpush1.xpose.msra.mxu0 0.0
        %940 = vmatprep.subr.mxu0 0.0
        %941 = vmatpush1.xpose.msra.mxu0 0.0
        %942 = vmatprep.subr.mxu0 0.0
        %943 = vmatpush1.xpose.msra.mxu0 0.0
        %944 = vmatprep.subr.mxu0 0.0
        %945 = vmatpush1.xpose.msra.mxu0 0.0
        %946 = vmatprep.subr.mxu0 0.0
        %947 = vmatpush1.xpose.msra.mxu0 0.0
        %948 = vmatprep.subr.mxu0 0.0
        %949 = vmatpush1.xpose.msra.mxu0 0.0
        %950 = vmatprep.subr.mxu0 0.0
        %951 = vmatpush1.xpose.msra.mxu0 0.0
        %952 = vmatprep.subr.mxu0 0.0
        %953 = vmatpush1.xpose.msra.mxu0 0.0
        %954 = vmatprep.subr.mxu0 0.0
        %955 = vmatpush1.xpose.msra.mxu0 0.0
        %956 = vmatprep.subr.mxu0 0.0
        %957 = vmatpush1.xpose.msra.mxu0 0.0
        %958 = vmatprep.subr.mxu0 0.0
        %959 = vmatpush1.xpose.msra.mxu0 0.0
        %960 = vmatprep.subr.mxu0 0.0
        %961 = vmatpush1.xpose.msra.mxu0 0.0
        %962 = vmatprep.subr.mxu0 0.0
        %963 = vmatpush1.xpose.msra.mxu0 0.0
        %964 = vmatprep.subr.mxu0 0.0
        %965 = vmatpush1.xpose.msra.mxu0 0.0
        %966 = vmatprep.subr.mxu0 0.0
        %967 = vmatpush1.xpose.msra.mxu0 0.0
        %968 = vmatprep.subr.mxu0 0.0
        %969 = vmatpush1.xpose.msra.mxu0 0.0
        %970 = vmatprep.subr.mxu0 0.0
        %971 = vmatpush1.xpose.msra.mxu0 0.0
        %972 = vmatprep.subr.mxu0 0.0
        %973 = vmatpush1.xpose.msra.mxu0 0.0
        %974 = vmatprep.subr.mxu0 0.0
        %975 = vmatpush1.xpose.msra.mxu0 0.0
        %976 = vmatprep.subr.mxu0 0.0
        %977 = vmatpush1.xpose.msra.mxu0 0.0
        %978 = vmatprep.subr.mxu0 0.0
        %979 = vmatpush1.xpose.msra.mxu0 0.0
        %980 = vmatprep.subr.mxu0 0.0
        %981 = vmatpush1.xpose.msra.mxu0 0.0
        %982 = vmatprep.subr.mxu0 0.0
        %983 = vmatpush1.xpose.msra.mxu0 0.0
        %984 = vmatprep.subr.mxu0 0.0
        %985 = vmatpush1.xpose.msra.mxu0 0.0
        %986 = vmatprep.subr.mxu0 0.0
        %987 = vmatpush1.xpose.msra.mxu0 0.0
        %988 = vmatprep.subr.mxu0 0.0
        %989 = vmatpush1.xpose.msra.mxu0 0.0
        %990 = vmatprep.subr.mxu0 0.0
        %991 = vmatpush1.xpose.msra.mxu0 0.0
        %992 = vmatprep.subr.mxu0 0.0
        %993 = vmatpush1.xpose.msra.mxu0 0.0
        %994 = vmatprep.mubr.f32.mxu0 0.0
        %995 = vmatmul.mubr.f32.gmra.mrb[0].mxu0 %v926
        %v996 = vpop.f32.mrb[0].mxu0
        %v997 = vadd.f32 0.0, %v996
        %v998 = vpop.f32.mrb[0].mxu0
        %999 = vdwg.mxu0
        %v1000 = vmul.f32 %v997, 0.35355338
        %v1001 = vsel %vm420, -1e+30, %v1000
        %v1002 = vsel %vm424, %v1001, -inf
        %1003 = vmax.xlane.f32.xlu0 %v1002
        %v1004 = vpop.xlane.xlu0 %1003
        %v1005 = vsub.f32 %v1001, %v1004
        %v1006 = vmul.f32 %v1005, 1.442695
        %v1007 = vpow.pop %v1006
        %v1008 = vsel %vm424, %v1007, 0.0
        %1009 = vadd.xlane.f32.xlu0 %v1008
        %v1010 = vpop.xlane.xlu0 %1009
        %v1011 = vrcp.pop %v1010
        %v1012 = vmul.f32 %v1007, %v1011
        %1013 = vrot.lane.b32.xlu0 %v416, 40
        %v1014 = vpop.permute.xlu0 %1013
        %v1017 = vsel %vm424, %v1012, 0
        %1019 = vmatprep.subr.mxu0 0.0
        %1020 = vmatpush1.msra.mxu0 %v1014
        %1021 = vmatprep.subr.mxu0 0.0
        %1022 = vmatpush1.msra.mxu0 0.0
        %1023 = vmatprep.subr.mxu0 0.0
        %1024 = vmatpush1.msra.mxu0 0.0
        %1025 = vmatprep.subr.mxu0 0.0
        %1026 = vmatpush1.msra.mxu0 0.0
        %1027 = vmatprep.subr.mxu0 0.0
        %1028 = vmatpush1.msra.mxu0 0.0
        %1029 = vmatprep.subr.mxu0 0.0
        %1030 = vmatpush1.msra.mxu0 0.0
        %1031 = vmatprep.subr.mxu0 0.0
        %1032 = vmatpush1.msra.mxu0 0.0
        %1033 = vmatprep.subr.mxu0 0.0
        %1034 = vmatpush1.msra.mxu0 0.0
        %1035 = vmatprep.subr.mxu0 0.0
        %1036 = vmatpush1.msra.mxu0 0.0
        %1037 = vmatprep.subr.mxu0 0.0
        %1038 = vmatpush1.msra.mxu0 0.0
        %1039 = vmatprep.subr.mxu0 0.0
        %1040 = vmatpush1.msra.mxu0 0.0
        %1041 = vmatprep.subr.mxu0 0.0
        %1042 = vmatpush1.msra.mxu0 0.0
        %1043 = vmatprep.subr.mxu0 0.0
        %1044 = vmatpush1.msra.mxu0 0.0
        %1045 = vmatprep.subr.mxu0 0.0
        %1046 = vmatpush1.msra.mxu0 0.0
        %1047 = vmatprep.subr.mxu0 0.0
        %1048 = vmatpush1.msra.mxu0 0.0
        %1049 = vmatprep.subr.mxu0 0.0
        %1050 = vmatpush1.msra.mxu0 0.0
        %1051 = vmatprep.subr.mxu0 0.0
        %1052 = vmatpush1.msra.mxu0 0.0
        %1053 = vmatprep.subr.mxu0 0.0
        %1054 = vmatpush1.msra.mxu0 0.0
        %1055 = vmatprep.subr.mxu0 0.0
        %1056 = vmatpush1.msra.mxu0 0.0
        %1057 = vmatprep.subr.mxu0 0.0
        %1058 = vmatpush1.msra.mxu0 0.0
        %1059 = vmatprep.subr.mxu0 0.0
        %1060 = vmatpush1.msra.mxu0 0.0
        %1061 = vmatprep.subr.mxu0 0.0
        %1062 = vmatpush1.msra.mxu0 0.0
        %1063 = vmatprep.subr.mxu0 0.0
        %1064 = vmatpush1.msra.mxu0 0.0
        %1065 = vmatprep.subr.mxu0 0.0
        %1066 = vmatpush1.msra.mxu0 0.0
        %1067 = vmatprep.subr.mxu0 0.0
        %1068 = vmatpush1.msra.mxu0 0.0
        %1069 = vmatprep.subr.mxu0 0.0
        %1070 = vmatpush1.msra.mxu0 0.0
        %1071 = vmatprep.subr.mxu0 0.0
        %1072 = vmatpush1.msra.mxu0 0.0
        %1073 = vmatprep.subr.mxu0 0.0
        %1074 = vmatpush1.msra.mxu0 0.0
        %1075 = vmatprep.subr.mxu0 0.0
        %1076 = vmatpush1.msra.mxu0 0.0
        %1077 = vmatprep.subr.mxu0 0.0
        %1078 = vmatpush1.msra.mxu0 0.0
        %1079 = vmatprep.subr.mxu0 0.0
        %1080 = vmatpush1.msra.mxu0 0.0
        %1081 = vmatprep.subr.mxu0 0.0
        %1082 = vmatpush1.msra.mxu0 0.0
        %1083 = vmatprep.mubr.f32.mxu0 0.0
        %1084 = vmatmul.mubr.f32.gmra.mrb[0].mxu0 %v1017
        %v1085 = vpop.f32.mrb[0].mxu0
        %v1086 = vadd.f32 0.0, %v1085
        %v1087 = vpop.f32.mrb[0].mxu0
        %1088 = vdwg.mxu0
        %1090 = vrot.lane.b32.xlu0 %v752, 8
        %v1091 = vpop.permute.xlu0 %1090
        %1094 = vrot.lane.b32.xlu0 %v919, 16
        %v1095 = vpop.permute.xlu0 %1094
        %1098 = vrot.lane.b32.xlu0 %v1086, 24
        %v1099 = vpop.permute.xlu0 %1098
        %v1101 = vsel %vm424, %v585, %v1091
        %vm1102 = vcmask 130048
        %v1103 = vsel %vm1102, %v1101, %v1095
        %vm1104 = vcmask 195584
        %v1105 = vsel %vm1104, %v1103, %v1099
        %v1106 = vld [vmem:[#allocation2] sm:$0xff]
        %v1107 = vld [vmem:[#allocation2 + $0x8] sm:$0xff]
        %v1108 = vld [vmem:[#allocation2 + $0x10] sm:$0xff]
        %v1109 = vld [vmem:[#allocation2 + $0x18] sm:$0xff]
        %v1110 = vld [vmem:[%s5] sm:$0x1]
        %v1112 = vlaneseq
        %v1113 = vshrl.u32 %v1112, 7
        %v1114 = vsub.s32 0, %v1113
        %v1115 = vrot.slane %v1110, %v1114
        %v1118 = vsel %vm345, %v1105, 0
        %1120 = vmatprep.subr.mxu0 0.0
        %1121 = vmatpush1.msra.mxu0 %v1106
        %1122 = vmatprep.subr.mxu0 0.0
        %1123 = vmatpush1.msra.mxu0 %v1107
        %1124 = vmatprep.subr.mxu0 0.0
        %1125 = vmatpush1.msra.mxu0 %v1108
        %1126 = vmatprep.subr.mxu0 0.0
        %1127 = vmatpush1.msra.mxu0 %v1109
        %1128 = vmatprep.subr.mxu0 0.0
        %1129 = vmatpush1.msra.mxu0 0.0
        %1130 = vmatprep.subr.mxu0 0.0
        %1131 = vmatpush1.msra.mxu0 0.0
        %1132 = vmatprep.subr.mxu0 0.0
        %1133 = vmatpush1.msra.mxu0 0.0
        %1134 = vmatprep.subr.mxu0 0.0
        %1135 = vmatpush1.msra.mxu0 0.0
        %1136 = vmatprep.subr.mxu0 0.0
        %1137 = vmatpush1.msra.mxu0 0.0
        %1138 = vmatprep.subr.mxu0 0.0
        %1139 = vmatpush1.msra.mxu0 0.0
        %1140 = vmatprep.subr.mxu0 0.0
        %1141 = vmatpush1.msra.mxu0 0.0
        %1142 = vmatprep.subr.mxu0 0.0
        %1143 = vmatpush1.msra.mxu0 0.0
        %1144 = vmatprep.subr.mxu0 0.0
        %1145 = vmatpush1.msra.mxu0 0.0
        %1146 = vmatprep.subr.mxu0 0.0
        %1147 = vmatpush1.msra.mxu0 0.0
        %1148 = vmatprep.subr.mxu0 0.0
        %1149 = vmatpush1.msra.mxu0 0.0
        %1150 = vmatprep.subr.mxu0 0.0
        %1151 = vmatpush1.msra.mxu0 0.0
        %1152 = vmatprep.subr.mxu0 0.0
        %1153 = vmatpush1.msra.mxu0 0.0
        %1154 = vmatprep.subr.mxu0 0.0
        %1155 = vmatpush1.msra.mxu0 0.0
        %1156 = vmatprep.subr.mxu0 0.0
        %1157 = vmatpush1.msra.mxu0 0.0
        %1158 = vmatprep.subr.mxu0 0.0
        %1159 = vmatpush1.msra.mxu0 0.0
        %1160 = vmatprep.subr.mxu0 0.0
        %1161 = vmatpush1.msra.mxu0 0.0
        %1162 = vmatprep.subr.mxu0 0.0
        %1163 = vmatpush1.msra.mxu0 0.0
        %1164 = vmatprep.subr.mxu0 0.0
        %1165 = vmatpush1.msra.mxu0 0.0
        %1166 = vmatprep.subr.mxu0 0.0
        %1167 = vmatpush1.msra.mxu0 0.0
        %1168 = vmatprep.subr.mxu0 0.0
        %1169 = vmatpush1.msra.mxu0 0.0
        %1170 = vmatprep.subr.mxu0 0.0
        %1171 = vmatpush1.msra.mxu0 0.0
        %1172 = vmatprep.subr.mxu0 0.0
        %1173 = vmatpush1.msra.mxu0 0.0
        %1174 = vmatprep.subr.mxu0 0.0
        %1175 = vmatpush1.msra.mxu0 0.0
        %1176 = vmatprep.subr.mxu0 0.0
        %1177 = vmatpush1.msra.mxu0 0.0
        %1178 = vmatprep.subr.mxu0 0.0
        %1179 = vmatpush1.msra.mxu0 0.0
        %1180 = vmatprep.subr.mxu0 0.0
        %1181 = vmatpush1.msra.mxu0 0.0
        %1182 = vmatprep.subr.mxu0 0.0
        %1183 = vmatpush1.msra.mxu0 0.0
        %1184 = vmatprep.mubr.f32.mxu0 0.0
        %1185 = vmatmul.mubr.f32.gmra.mrb[0].mxu0 %v1118
        %v1186 = vpop.f32.mrb[0].mxu0
        %v1187 = vadd.f32 %v1115, %v1186
        %v1188 = vpop.f32.mrb[0].mxu0
        %1189 = vdwg.mxu0
        %v1190 = vadd.f32 %v333, %v1187
        %v1191 = vsel %vm345, %v1190, 0.0
        %1192 = vadd.xlane.f32.xlu0 %v1191
        %v1193 = vpop.xlane.xlu0 %1192
        %v1194 = vrcp.pop 32.0
        %v1195 = vmul.f32 %v1193, %v1194
        %v1196 = vsub.f32 %v1190, %v1195
        %v1197 = vmul.f32 %v1196, %v1196
        %v1198 = vsel %vm345, %v1197, 0.0
        %1199 = vadd.xlane.f32.xlu0 %v1198
        %v1200 = vpop.xlane.xlu0 %1199
        %v1201 = vmul.f32 %v1200, %v1194
        %v1202 = vadd.f32 %v1201, 1e-05
        %v1203 = vrsqrt.pop %v1202
        %v1204 = vmul.f32 %v1196, %v1203
        %v1205 = vld [vmem:[%s6] sm:$0x1]
        %v1207 = vlaneseq
        %v1208 = vshrl.u32 %v1207, 7
        %v1209 = vsub.s32 0, %v1208
        %v1210 = vrot.slane %v1205, %v1209
        %v1212 = vmul.f32 %v1204, %v1210
        %v1213 = vld [vmem:[%s7] sm:$0x1]
        %v1215 = vlaneseq
        %v1216 = vshrl.u32 %v1215, 7
        %v1217 = vsub.s32 0, %v1216
        %v1218 = vrot.slane %v1213, %v1217
        %v1220 = vadd.f32 %v1212, %v1218
        %1221 = vst.msk [vmem:[%s332] sm:$0xff] %vm345, %v1220
        %p1222 = scmp.lt.s32.totalorder %s20, 1
        %s1223 = scalar_select %p1222, %s20, 1
        %s1224 = smul.addr %s1223, 8
        %s1225 = scalar_lea.vmem %s8, %s1224
        // Predicated region
        $region57: #{encoder_fwd.4} parent=51 // pred_check
          %p1226 = pneg %p216
        $region58: #{encoder_fwd.4} parent=51 // pred_check_branch
          %1228 = sbr.rel (%p1226) target = $region60
        $region59: #{encoder_fwd.4} parent=51 // pred_region
          _
        $region60: #{encoder_fwd.4} parent=51 // pred_fallthru
          _
      $region52: #{encoder_fwd.4} parent=5 // pred_fallthru
        _
      %p1229 = scmp.le.s32.totalorder 2, %s15
      // Predicated region
      $region61: #{encoder_fwd.4} parent=5 // pred_check
        %p1230 = pneg %p1229
      $region62: #{encoder_fwd.4} parent=5 // pred_check_branch
        %1232 = sbr.rel (%p1230) target = $region64
      $region63: #{encoder_fwd.4} parent=5 // pred_region
        %s1233 = ssub.s32 %s15, 2
        // Predicated region
        $region65: #{encoder_fwd.4} parent=63 // pred_check
          %p1234 = pneg %p222
        $region66: #{encoder_fwd.4} parent=63 // pred_check_branch
          %1236 = sbr.rel (%p1234) target = $region68
        $region67: #{encoder_fwd.4} parent=63 // pred_region
          %p1237 = scmp.lt.s32.totalorder %s21, 1
          %s1238 = scalar_select %p1237, %s21, 1
          %s1239 = smul.addr %s1238, 8
          %s1240 = scalar_lea.vmem %s8, %s1239
        $region68: #{encoder_fwd.4} parent=63 // pred_fallthru
          _
      $region64: #{encoder_fwd.4} parent=5 // pred_fallthru
        _
    $region6: #{encoder_fwd.4} parent=1 // loop_footer
      %s19 = sadd.s32 1, %s15
    $region7: #{encoder_fwd.4} parent=1 // loop_footer_branch
      %14 = sbr.rel target = $region3
    $region8: #{encoder_fwd.4} parent=1 // loop_exit
      _
    %1241 = vsyncpa [#allocation3], 1
    %s1242 = scalar_lea.sflag [#allocation3], 1
    %1243 = vsyncpa %s1242, 1

// kernel: encoder_fwd.7
$region0: #{encoder_fwd.7}
  #allocation0 [shape = 'u32[]', space=smem, size = 0x4, offset = 0x4, fixed_abs, tag = 'smem constant byte address 0x4 - core index']
  #allocation1 [shape = 'u32[144,128]{1,0:T(1,128)}', space=vmem, size = 0x12000, scoped, tag = 'internal scratch']
  %s0 = inlined_call_operand.vmem [shape: f32[16,32], index: 0, kind: input, shape index: {}]
  %s1 = inlined_call_operand.vmem [shape: f32[32,128], index: 1, kind: input, shape index: {}]
  %s2 = inlined_call_operand.vmem [shape: f32[1,128], index: 2, kind: input, shape index: {}]
  %s3 = inlined_call_operand.vmem [shape: f32[128,32], index: 3, kind: input, shape index: {}]
  %s4 = inlined_call_operand.vmem [shape: f32[1,32], index: 4, kind: input, shape index: {}]
  %s5 = inlined_call_operand.vmem [shape: f32[1,32], index: 5, kind: input, shape index: {}]
  %s6 = inlined_call_operand.vmem [shape: f32[1,32], index: 6, kind: input, shape index: {}]
  %s7 = inlined_call_operand.hbm [shape: f32[16,32], index: 7, kind: output, shape index: {}]
  %s8 = sld [smem:[#allocation0]]
  $region38: #{encoder_fwd.7} parent=0
    _
  %s10 = ssub.s32 1, %s8
  %s11 = scalar_select 0, %s10, %s8
  $region1: #{encoder_fwd.7} parent=0
    #allocation2 [shape = 'u8[8192]{0}', space=vmem, size = 0x2000, scoped, tag = 'output window, operand 0, single buffered']
    #allocation3 [shape = 's32[1]{0}', space=sflag, size = 0x4, scoped, tag = 'scoped memory for encoder_fwd.7']
    %12 = vsyncpa [#allocation3], 0
    // Predicated region
    $region2: #{encoder_fwd.7} parent=1 // pred_check
      _
    $region3: #{encoder_fwd.7} parent=1 // pred_check_branch
      %14 = sbr.rel (0) target = $region5
    $region4: #{encoder_fwd.7} parent=1 // pred_region
      _
    $region5: #{encoder_fwd.7} parent=1 // pred_fallthru
      _
    // Predicated region
    $region6: #{encoder_fwd.7} parent=1 // pred_check
      _
    $region7: #{encoder_fwd.7} parent=1 // pred_check_branch
      %16 = sbr.rel (0) target = $region9
    $region8: #{encoder_fwd.7} parent=1 // pred_region
      _
    $region9: #{encoder_fwd.7} parent=1 // pred_fallthru
      _
    // Predicated region
    $region10: #{encoder_fwd.7} parent=1 // pred_check
      _
    $region11: #{encoder_fwd.7} parent=1 // pred_check_branch
      %18 = sbr.rel (0) target = $region13
    $region12: #{encoder_fwd.7} parent=1 // pred_region
      _
    $region13: #{encoder_fwd.7} parent=1 // pred_fallthru
      _
    // Predicated region
    $region14: #{encoder_fwd.7} parent=1 // pred_check
      _
    $region15: #{encoder_fwd.7} parent=1 // pred_check_branch
      %20 = sbr.rel (0) target = $region17
    $region16: #{encoder_fwd.7} parent=1 // pred_region
      _
    $region17: #{encoder_fwd.7} parent=1 // pred_fallthru
      _
    // Predicated region
    $region18: #{encoder_fwd.7} parent=1 // pred_check
      _
    $region19: #{encoder_fwd.7} parent=1 // pred_check_branch
      %22 = sbr.rel (0) target = $region21
    $region20: #{encoder_fwd.7} parent=1 // pred_region
      _
    $region21: #{encoder_fwd.7} parent=1 // pred_fallthru
      _
    // Predicated region
    $region22: #{encoder_fwd.7} parent=1 // pred_check
      _
    $region23: #{encoder_fwd.7} parent=1 // pred_check_branch
      %24 = sbr.rel (0) target = $region25
    $region24: #{encoder_fwd.7} parent=1 // pred_region
      _
    $region25: #{encoder_fwd.7} parent=1 // pred_fallthru
      _
    // Predicated region
    $region26: #{encoder_fwd.7} parent=1 // pred_check
      _
    $region27: #{encoder_fwd.7} parent=1 // pred_check_branch
      %26 = sbr.rel (0) target = $region29
    $region28: #{encoder_fwd.7} parent=1 // pred_region
      _
    $region29: #{encoder_fwd.7} parent=1 // pred_fallthru
      _
    %v27 = vld [vmem:[%s0] sm:$0xff]
    %v28 = vld [vmem:[%s0 + $0x8] sm:$0xff]
    %v29 = vld [vmem:[%s1] sm:$0xff]
    %v30 = vld [vmem:[%s1 + $0x8] sm:$0xff]
    %v31 = vld [vmem:[%s1 + $0x10] sm:$0xff]
    %v32 = vld [vmem:[%s1 + $0x18] sm:$0xff]
    %v33 = vld [vmem:[%s2] sm:$0x1]
    %v35 = vlaneseq
    %v36 = vshrl.u32 %v35, 7
    %v37 = vsub.s32 0, %v36
    %v38 = vrot.slane %v33, %v37
    %vm40 = vcmask 261120
    %v42 = vsel %vm40, %v27, 0
    %v45 = vsel %vm40, %v28, 0
    %47 = vmatprep.subr.mxu0 0.0
    %48 = vmatpush1.msra.mxu0 %v29
    %49 = vmatprep.subr.mxu0 0.0
    %50 = vmatpush1.msra.mxu0 %v30
    %51 = vmatprep.subr.mxu0 0.0
    %52 = vmatpush1.msra.mxu0 %v31
    %53 = vmatprep.subr.mxu0 0.0
    %54 = vmatpush1.msra.mxu0 %v32
    %55 = vmatprep.subr.mxu0 0.0
    %56 = vmatpush1.msra.mxu0 0.0
    %57 = vmatprep.subr.mxu0 0.0
    %58 = vmatpush1.msra.mxu0 0.0
    %59 = vmatprep.subr.mxu0 0.0
    %60 = vmatpush1.msra.mxu0 0.0
    %61 = vmatprep.subr.mxu0 0.0
    %62 = vmatpush1.msra.mxu0 0.0
    %63 = vmatprep.subr.mxu0 0.0
    %64 = vmatpush1.msra.mxu0 0.0
    %65 = vmatprep.subr.mxu0 0.0
    %66 = vmatpush1.msra.mxu0 0.0
    %67 = vmatprep.subr.mxu0 0.0
    %68 = vmatpush1.msra.mxu0 0.0
    %69 = vmatprep.subr.mxu0 0.0
    %70 = vmatpush1.msra.mxu0 0.0
    %71 = vmatprep.subr.mxu0 0.0
    %72 = vmatpush1.msra.mxu0 0.0
    %73 = vmatprep.subr.mxu0 0.0
    %74 = vmatpush1.msra.mxu0 0.0
    %75 = vmatprep.subr.mxu0 0.0
    %76 = vmatpush1.msra.mxu0 0.0
    %77 = vmatprep.subr.mxu0 0.0
    %78 = vmatpush1.msra.mxu0 0.0
    %79 = vmatprep.subr.mxu0 0.0
    %80 = vmatpush1.msra.mxu0 0.0
    %81 = vmatprep.subr.mxu0 0.0
    %82 = vmatpush1.msra.mxu0 0.0
    %83 = vmatprep.subr.mxu0 0.0
    %84 = vmatpush1.msra.mxu0 0.0
    %85 = vmatprep.subr.mxu0 0.0
    %86 = vmatpush1.msra.mxu0 0.0
    %87 = vmatprep.subr.mxu0 0.0
    %88 = vmatpush1.msra.mxu0 0.0
    %89 = vmatprep.subr.mxu0 0.0
    %90 = vmatpush1.msra.mxu0 0.0
    %91 = vmatprep.subr.mxu0 0.0
    %92 = vmatpush1.msra.mxu0 0.0
    %93 = vmatprep.subr.mxu0 0.0
    %94 = vmatpush1.msra.mxu0 0.0
    %95 = vmatprep.subr.mxu0 0.0
    %96 = vmatpush1.msra.mxu0 0.0
    %97 = vmatprep.subr.mxu0 0.0
    %98 = vmatpush1.msra.mxu0 0.0
    %99 = vmatprep.subr.mxu0 0.0
    %100 = vmatpush1.msra.mxu0 0.0
    %101 = vmatprep.subr.mxu0 0.0
    %102 = vmatpush1.msra.mxu0 0.0
    %103 = vmatprep.subr.mxu0 0.0
    %104 = vmatpush1.msra.mxu0 0.0
    %105 = vmatprep.subr.mxu0 0.0
    %106 = vmatpush1.msra.mxu0 0.0
    %107 = vmatprep.subr.mxu0 0.0
    %108 = vmatpush1.msra.mxu0 0.0
    %109 = vmatprep.subr.mxu0 0.0
    %110 = vmatpush1.msra.mxu0 0.0
    %111 = vmatprep.mubr.f32.mxu0 0.0
    %112 = vmatmul.mubr.f32.gmra.mrb[0].mxu0 %v42
    %v113 = vpop.f32.mrb[0].mxu0
    %v114 = vadd.f32 %v38, %v113
    %v115 = vpop.f32.mrb[0].mxu0
    %116 = vmatprep.mubr.f32.mxu0 0.0
    %117 = vmatmul.mubr.f32.gmra.mrb[0].mxu0 %v45
    %v118 = vpop.f32.mrb[0].mxu0
    %v119 = vadd.f32 %v38, %v118
    %v120 = vpop.f32.mrb[0].mxu0
    %121 = vdwg.mxu0
    %v122 = vmax.f32 %v114, 0.0
    %v123 = vmax.f32 %v119, 0.0
    %v124 = vld [vmem:[%s3] sm:$0xff]
    %v125 = vld [vmem:[%s3 + $0x8] sm:$0xff]
    %v126 = vld [vmem:[%s3 + $0x10] sm:$0xff]
    %v127 = vld [vmem:[%s3 + $0x18] sm:$0xff]
    %v128 = vld [vmem:[%s3 + $0x20] sm:$0xff]
    %v129 = vld [vmem:[%s3 + $0x28] sm:$0xff]
    %v130 = vld [vmem:[%s3 + $0x30] sm:$0xff]
    %v131 = vld [vmem:[%s3 + $0x38] sm:$0xff]
    %v132 = vld [vmem:[%s3 + $0x40] sm:$0xff]
    %v133 = vld [vmem:[%s3 + $0x48] sm:$0xff]
    %v134 = vld [vmem:[%s3 + $0x50] sm:$0xff]
    %v135 = vld [vmem:[%s3 + $0x58] sm:$0xff]
    %v136 = vld [vmem:[%s3 + $0x60] sm:$0xff]
    %v137 = vld [vmem:[%s3 + $0x68] sm:$0xff]
    %v138 = vld [vmem:[%s3 + $0x70] sm:$0xff]
    %v139 = vld [vmem:[%s3 + $0x78] sm:$0xff]
    %v140 = vld [vmem:[%s4] sm:$0x1]
    %v142 = vlaneseq
    %v143 = vshrl.u32 %v142, 7
    %v144 = vsub.s32 0, %v143
    %v145 = vrot.slane %v140, %v144
    %147 = vmatprep.subr.mxu0 0.0
    %148 = vmatpush1.msra.mxu0 %v124
    %149 = vmatprep.subr.mxu0 0.0
    %150 = vmatpush1.msra.mxu0 %v125
    %151 = vmatprep.subr.mxu0 0.0
    %152 = vmatpush1.msra.mxu0 %v126
    %153 = vmatprep.subr.mxu0 0.0
    %154 = vmatpush1.msra.mxu0 %v127
    %155 = vmatprep.subr.mxu0 0.0
    %156 = vmatpush1.msra.mxu0 %v128
    %157 = vmatprep.subr.mxu0 0.0
    %158 = vmatpush1.msra.mxu0 %v129
    %159 = vmatprep.subr.mxu0 0.0
    %160 = vmatpush1.msra.mxu0 %v130
    %161 = vmatprep.subr.mxu0 0.0
    %162 = vmatpush1.msra.mxu0 %v131
    %163 = vmatprep.subr.mxu0 0.0
    %164 = vmatpush1.msra.mxu0 %v132
    %165 = vmatprep.subr.mxu0 0.0
    %166 = vmatpush1.msra.mxu0 %v133
    %167 = vmatprep.subr.mxu0 0.0
    %168 = vmatpush1.msra.mxu0 %v134
    %169 = vmatprep.subr.mxu0 0.0
    %170 = vmatpush1.msra.mxu0 %v135
    %171 = vmatprep.subr.mxu0 0.0
    %172 = vmatpush1.msra.mxu0 %v136
    %173 = vmatprep.subr.mxu0 0.0
    %174 = vmatpush1.msra.mxu0 %v137
    %175 = vmatprep.subr.mxu0 0.0
    %176 = vmatpush1.msra.mxu0 %v138
    %177 = vmatprep.subr.mxu0 0.0
    %178 = vmatpush1.msra.mxu0 %v139
    %179 = vmatprep.subr.mxu0 0.0
    %180 = vmatpush1.msra.mxu0 0.0
    %181 = vmatprep.subr.mxu0 0.0
    %182 = vmatpush1.msra.mxu0 0.0
    %183 = vmatprep.subr.mxu0 0.0
    %184 = vmatpush1.msra.mxu0 0.0
    %185 = vmatprep.subr.mxu0 0.0
    %186 = vmatpush1.msra.mxu0 0.0
    %187 = vmatprep.subr.mxu0 0.0
    %188 = vmatpush1.msra.mxu0 0.0
    %189 = vmatprep.subr.mxu0 0.0
    %190 = vmatpush1.msra.mxu0 0.0
    %191 = vmatprep.subr.mxu0 0.0
    %192 = vmatpush1.msra.mxu0 0.0
    %193 = vmatprep.subr.mxu0 0.0
    %194 = vmatpush1.msra.mxu0 0.0
    %195 = vmatprep.subr.mxu0 0.0
    %196 = vmatpush1.msra.mxu0 0.0
    %197 = vmatprep.subr.mxu0 0.0
    %198 = vmatpush1.msra.mxu0 0.0
    %199 = vmatprep.subr.mxu0 0.0
    %200 = vmatpush1.msra.mxu0 0.0
    %201 = vmatprep.subr.mxu0 0.0
    %202 = vmatpush1.msra.mxu0 0.0
    %203 = vmatprep.subr.mxu0 0.0
    %204 = vmatpush1.msra.mxu0 0.0
    %205 = vmatprep.subr.mxu0 0.0
    %206 = vmatpush1.msra.mxu0 0.0
    %207 = vmatprep.subr.mxu0 0.0
    %208 = vmatpush1.msra.mxu0 0.0
    %209 = vmatprep.subr.mxu0 0.0
    %210 = vmatpush1.msra.mxu0 0.0
    %211 = vmatprep.mubr.f32.mxu0 0.0
    %212 = vmatmul.mubr.f32.gmra.mrb[0].mxu0 %v122
    %v213 = vpop.f32.mrb[0].mxu0
    %v214 = vadd.f32 %v145, %v213
    %v215 = vpop.f32.mrb[0].mxu0
    %216 = vmatprep.mubr.f32.mxu0 0.0
    %217 = vmatmul.mubr.f32.gmra.mrb[0].mxu0 %v123
    %v218 = vpop.f32.mrb[0].mxu0
    %v219 = vadd.f32 %v145, %v218
    %v220 = vpop.f32.mrb[0].mxu0
    %221 = vdwg.mxu0
    %v222 = vadd.f32 %v27, %v214
    %v223 = vadd.f32 %v28, %v219
    %v224 = vsel %vm40, %v222, 0.0
    %225 = vadd.xlane.f32.xlu0 %v224
    %v226 = vpop.xlane.xlu0 %225
    %v227 = vsel %vm40, %v223, 0.0
    %228 = vadd.xlane.f32.xlu0 %v227
    %v229 = vpop.xlane.xlu0 %228
    %v230 = vrcp.pop 32.0
    %v231 = vmul.f32 %v226, %v230
    %v232 = vmul.f32 %v229, %v230
    %v233 = vsub.f32 %v222, %v231
    %v234 = vsub.f32 %v223, %v232
    %v235 = vmul.f32 %v233, %v233
    %v236 = vmul.f32 %v234, %v234
    %v237 = vsel %vm40, %v235, 0.0
    %238 = vadd.xlane.f32.xlu0 %v237
    %v239 = vpop.xlane.xlu0 %238
    %v240 = vsel %vm40, %v236, 0.0
    %241 = vadd.xlane.f32.xlu0 %v240
    %v242 = vpop.xlane.xlu0 %241
    %v243 = vmul.f32 %v239, %v230
    %v244 = vmul.f32 %v242, %v230
    %v245 = vadd.f32 %v243, 1e-05
    %v246 = vadd.f32 %v244, 1e-05
    %v247 = vrsqrt.pop %v245
    %v248 = vrsqrt.pop %v246
    %v249 = vmul.f32 %v233, %v247
    %v250 = vmul.f32 %v234, %v248
    %v251 = vld [vmem:[%s5] sm:$0x1]
    %v253 = vlaneseq
    %v254 = vshrl.u32 %v253, 7
    %v255 = vsub.s32 0, %v254
    %v256 = vrot.slane %v251, %v255
    %v258 = vmul.f32 %v249, %v256
    %v259 = vmul.f32 %v250, %v256
    %v260 = vld [vmem:[%s6] sm:$0x1]
    %v262 = vlaneseq
    %v263 = vshrl.u32 %v262, 7
    %v264 = vsub.s32 0, %v263
    %v265 = vrot.slane %v260, %v264
    %v267 = vadd.f32 %v258, %v265
    %v268 = vadd.f32 %v259, %v265
    %269 = vst.msk [vmem:[#allocation2] sm:$0xff] %vm40, %v267
    %270 = vst.msk [vmem:[#allocation2 + $0x8] sm:$0xff] %vm40, %v268
    // Predicated region
    $region30: #{encoder_fwd.7} parent=1 // pred_check
      _
    $region31: #{encoder_fwd.7} parent=1 // pred_check_branch
      %272 = sbr.rel (0) target = $region33
    $region32: #{encoder_fwd.7} parent=1 // pred_region
      %s274 = ssub.s32 256, 256
      %275 = vsyncadd [#allocation3], %s274
      %s276 = sshll.u32 [#allocation2], 4
      %s277 = int_to_ptr.vmem [resolvable:$true] %s276
      %282 = dma.vmem_to_hbm [thread:$0]  %s277, 256, %s7, [#allocation3], 128, 128, 8
    $region33: #{encoder_fwd.7} parent=1 // pred_fallthru
      _
    // Predicated region
    $region34: #{encoder_fwd.7} parent=1 // pred_check
      _
    $region35: #{encoder_fwd.7} parent=1 // pred_check_branch
      %284 = sbr.rel (0) target = $region37
    $region36: #{encoder_fwd.7} parent=1 // pred_region
      %285 = dma.done [#allocation3], 256
    $region37: #{encoder_fwd.7} parent=1 // pred_fallthru
      _
    %286 = vsyncpa [#allocation3], 1

// kernel: encoder_fwd.6
$region0: #{encoder_fwd.6}
  #allocation0 [shape = 'u32[]', space=smem, size = 0x4, offset = 0x4, fixed_abs, tag = 'smem constant byte address 0x4 - core index']
  #allocation1 [shape = 'u32[144,128]{1,0:T(1,128)}', space=vmem, size = 0x12000, scoped, tag = 'internal scratch']
  %s0 = inlined_call_operand.vmem [shape: f32[2,8,32], index: 0, kind: input, shape index: {}]
  %s1 = inlined_call_operand.vmem [shape: f32[2,8,8], index: 1, kind: input, shape index: {}]
  %s2 = inlined_call_operand.vmem [shape: f32[32,96], index: 2, kind: input, shape index: {}]
  %s3 = inlined_call_operand.vmem [shape: f32[1,96], index: 3, kind: input, shape index: {}]
  %s4 = inlined_call_operand.vmem [shape: f32[32,32], index: 4, kind: input, shape index: {}]
  %s5 = inlined_call_operand.vmem [shape: f32[1,32], index: 5, kind: input, shape index: {}]
  %s6 = inlined_call_operand.vmem [shape: f32[1,32], index: 6, kind: input, shape index: {}]
  %s7 = inlined_call_operand.vmem [shape: f32[1,32], index: 7, kind: input, shape index: {}]
  %s8 = inlined_call_operand.vmem [shape: f32[2,8,32], index: 8, kind: output, shape index: {}]
  %s9 = sld [smem:[#allocation0]]
  $region65: #{encoder_fwd.6} parent=0
    _
  %s11 = ssub.s32 1, %s9
  %s12 = scalar_select 0, %s11, %s9
  loop: start=0, step=1, limit=4
  $region2: #{encoder_fwd.6} parent=0 // loop_pre_header
    _
  $region3: #{encoder_fwd.6} parent=0 // loop_header
    %s14 = sphi 0, %s18
    %p15 = scmp.ge.s32.totalorder %s14, 4
    %s24 = sphi 0, %s26
    %s27 = sphi 0, %s24
    %s28 = sphi 0, %s27
    %s44 = sphi 0, %s28
    %s50 = sphi 0, %s52
    %s53 = sphi 0, %s50
    %s54 = sphi 0, %s53
    %s70 = sphi 0, %s54
    %s74 = sphi 0, %s74
    %s76 = sphi 0, %s74
    %s77 = sphi 0, %s76
    %s91 = sphi 0, %s77
    %s95 = sphi 0, %s95
    %s97 = sphi 0, %s95
    %s98 = sphi 0, %s97
    %s112 = sphi 0, %s98
    %s116 = sphi 0, %s116
    %s118 = sphi 0, %s116
    %s119 = sphi 0, %s118
    %s133 = sphi 0, %s119
    %s137 = sphi 0, %s137
    %s139 = sphi 0, %s137
    %s140 = sphi 0, %s139
    %s154 = sphi 0, %s140
    %s158 = sphi 0, %s158
    %s160 = sphi 0, %s158
    %s161 = sphi 0, %s160
    %s175 = sphi 0, %s161
    %s179 = sphi 0, %s179
    %s181 = sphi 0, %s179
    %s182 = sphi 0, %s181
    %s196 = sphi 0, %s182
    %s202 = sphi 0, %s204
    %s205 = sphi 0, %s202
    %s206 = sphi 0, %s205
    %s222 = sphi 0, %s206
  $region4: #{encoder_fwd.6} parent=0 // loop_header_branch
    %17 = sbr.rel (%p15) target = $region8
  $region5: #{encoder_fwd.6} parent=0 // loop_body
    %s19 = ssub.s32 %s14, 1
    %s20 = ssub.s32 %s14, 2
    %s21 = sadd.s32 %s14, 1
    %s22 = ssub.s32 %s14, %s21
    %p23 = scmp.eq.s32.totalorder %s22, 0
    %s25 = sadd.s32 %s24, 1
    %s26 = scalar_select %p23, %s24, %s25
    %p29 = pneg %p23
    %p30 = scmp.eq.s32.totalorder %s14, 1
    %p31 = por %p29, %p30
    %p32 = scmp.ne.s32.totalorder %s24, %s27
    %p33 = scmp.eq.s32.totalorder %s14, 0
    %p34 = por %p32, %p33
    %p35 = scmp.ne.s32.totalorder %s24, %s27
    %p36 = scmp.eq.s32.totalorder %s19, 1
    %p37 = por %p35, %p36
    %p38 = scmp.ne.s32.totalorder %s27, %s28
    %p39 = scmp.eq.s32.totalorder %s19, 0
    %p40 = por %p38, %p39
    %p41 = scmp.ne.s32.totalorder %s27, %s28
    %p42 = scmp.eq.s32.totalorder %s20, 1
    %p43 = por %p41, %p42
    %p45 = scmp.ne.s32.totalorder %s28, %s44
    %p46 = scmp.eq.s32.totalorder %s20, 0
    %p47 = por %p45, %p46
    %s48 = ssub.s32 %s14, %s21
    %p49 = scmp.eq.s32.totalorder %s48, 0
    %s51 = sadd.s32 %s50, 1
    %s52 = scalar_select %p49, %s50, %s51
    %p55 = pneg %p49
    %p56 = scmp.eq.s32.totalorder %s14, 1
    %p57 = por %p55, %p56
    %p58 = scmp.ne.s32.totalorder %s50, %s53
    %p59 = scmp.eq.s32.totalorder %s14, 0
    %p60 = por %p58, %p59
    %p61 = scmp.ne.s32.totalorder %s50, %s53
    %p62 = scmp.eq.s32.totalorder %s19, 1
    %p63 = por %p61, %p62
    %p64 = scmp.ne.s32.totalorder %s53, %s54
    %p65 = scmp.eq.s32.totalorder %s19, 0
    %p66 = por %p64, %p65
    %p67 = scmp.ne.s32.totalorder %s53, %s54
    %p68 = scmp.eq.s32.totalorder %s20, 1
    %p69 = por %p67, %p68
    %p71 = scmp.ne.s32.totalorder %s54, %s70
    %p72 = scmp.eq.s32.totalorder %s20, 0
    %p73 = por %p71, %p72
    %s75 = sadd.s32 %s74, 1
    %p78 = scmp.eq.s32.totalorder %s14, 1
    %p79 = scmp.ne.s32.totalorder %s74, %s76
    %p80 = scmp.eq.s32.totalorder %s14, 0
    %p81 = por %p79, %p80
    %p82 = scmp.ne.s32.totalorder %s74, %s76
    %p83 = scmp.eq.s32.totalorder %s19, 1
    %p84 = por %p82, %p83
    %p85 = scmp.ne.s32.totalorder %s76, %s77
    %p86 = scmp.eq.s32.totalorder %s19, 0
    %p87 = por %p85, %p86
    %p88 = scmp.ne.s32.totalorder %s76, %s77
    %p89 = scmp.eq.s32.totalorder %s20, 1
    %p90 = por %p88, %p89
    %p92 = scmp.ne.s32.totalorder %s77, %s91
    %p93 = scmp.eq.s32.totalorder %s20, 0
    %p94 = por %p92, %p93
    %s96 = sadd.s32 %s95, 1
    %p99 = scmp.eq.s32.totalorder %s14, 1
    %p100 = scmp.ne.s32.totalorder %s95, %s97
    %p101 = scmp.eq.s32.totalorder %s14, 0
    %p102 = por %p100, %p101
    %p103 = scmp.ne.s32.totalorder %s95, %s97
    %p104 = scmp.eq.s32.totalorder %s19, 1
    %p105 = por %p103, %p104
    %p106 = scmp.ne.s32.totalorder %s97, %s98
    %p107 = scmp.eq.s32.totalorder %s19, 0
    %p108 = por %p106, %p107
    %p109 = scmp.ne.s32.totalorder %s97, %s98
    %p110 = scmp.eq.s32.totalorder %s20, 1
    %p111 = por %p109, %p110
    %p113 = scmp.ne.s32.totalorder %s98, %s112
    %p114 = scmp.eq.s32.totalorder %s20, 0
    %p115 = por %p113, %p114
    %s117 = sadd.s32 %s116, 1
    %p120 = scmp.eq.s32.totalorder %s14, 1
    %p121 = scmp.ne.s32.totalorder %s116, %s118
    %p122 = scmp.eq.s32.totalorder %s14, 0
    %p123 = por %p121, %p122
    %p124 = scmp.ne.s32.totalorder %s116, %s118
    %p125 = scmp.eq.s32.totalorder %s19, 1
    %p126 = por %p124, %p125
    %p127 = scmp.ne.s32.totalorder %s118, %s119
    %p128 = scmp.eq.s32.totalorder %s19, 0
    %p129 = por %p127, %p128
    %p130 = scmp.ne.s32.totalorder %s118, %s119
    %p131 = scmp.eq.s32.totalorder %s20, 1
    %p132 = por %p130, %p131
    %p134 = scmp.ne.s32.totalorder %s119, %s133
    %p135 = scmp.eq.s32.totalorder %s20, 0
    %p136 = por %p134, %p135
    %s138 = sadd.s32 %s137, 1
    %p141 = scmp.eq.s32.totalorder %s14, 1
    %p142 = scmp.ne.s32.totalorder %s137, %s139
    %p143 = scmp.eq.s32.totalorder %s14, 0
    %p144 = por %p142, %p143
    %p145 = scmp.ne.s32.totalorder %s137, %s139
    %p146 = scmp.eq.s32.totalorder %s19, 1
    %p147 = por %p145, %p146
    %p148 = scmp.ne.s32.totalorder %s139, %s140
    %p149 = scmp.eq.s32.totalorder %s19, 0
    %p150 = por %p148, %p149
    %p151 = scmp.ne.s32.totalorder %s139, %s140
    %p152 = scmp.eq.s32.totalorder %s20, 1
    %p153 = por %p151, %p152
    %p155 = scmp.ne.s32.totalorder %s140, %s154
    %p156 = scmp.eq.s32.totalorder %s20, 0
    %p157 = por %p155, %p156
    %s159 = sadd.s32 %s158, 1
    %p162 = scmp.eq.s32.totalorder %s14, 1
    %p163 = scmp.ne.s32.totalorder %s158, %s160
    %p164 = scmp.eq.s32.totalorder %s14, 0
    %p165 = por %p163, %p164
    %p166 = scmp.ne.s32.totalorder %s158, %s160
    %p167 = scmp.eq.s32.totalorder %s19, 1
    %p168 = por %p166, %p167
    %p169 = scmp.ne.s32.totalorder %s160, %s161
    %p170 = scmp.eq.s32.totalorder %s19, 0
    %p171 = por %p169, %p170
    %p172 = scmp.ne.s32.totalorder %s160, %s161
    %p173 = scmp.eq.s32.totalorder %s20, 1
    %p174 = por %p172, %p173
    %p176 = scmp.ne.s32.totalorder %s161, %s175
    %p177 = scmp.eq.s32.totalorder %s20, 0
    %p178 = por %p176, %p177
    %s180 = sadd.s32 %s179, 1
    %p183 = scmp.eq.s32.totalorder %s14, 1
    %p184 = scmp.ne.s32.totalorder %s179, %s181
    %p185 = scmp.eq.s32.totalorder %s14, 0
    %p186 = por %p184, %p185
    %p187 = scmp.ne.s32.totalorder %s179, %s181
    %p188 = scmp.eq.s32.totalorder %s19, 1
    %p189 = por %p187, %p188
    %p190 = scmp.ne.s32.totalorder %s181, %s182
    %p191 = scmp.eq.s32.totalorder %s19, 0
    %p192 = por %p190, %p191
    %p193 = scmp.ne.s32.totalorder %s181, %s182
    %p194 = scmp.eq.s32.totalorder %s20, 1
    %p195 = por %p193, %p194
    %p197 = scmp.ne.s32.totalorder %s182, %s196
    %p198 = scmp.eq.s32.totalorder %s20, 0
    %p199 = por %p197, %p198
    %s200 = ssub.s32 %s14, %s21
    %p201 = scmp.eq.s32.totalorder %s200, 0
    %s203 = sadd.s32 %s202, 1
    %s204 = scalar_select %p201, %s202, %s203
    %p207 = pneg %p201
    %p208 = scmp.eq.s32.totalorder %s14, 1
    %p209 = por %p207, %p208
    %p210 = scmp.ne.s32.totalorder %s202, %s205
    %p211 = scmp.eq.s32.totalorder %s14, 0
    %p212 = por %p210, %p211
    %p213 = scmp.ne.s32.totalorder %s202, %s205
    %p214 = scmp.eq.s32.totalorder %s19, 1
    %p215 = por %p213, %p214
    %p216 = scmp.ne.s32.totalorder %s205, %s206
    %p217 = scmp.eq.s32.totalorder %s19, 0
    %p218 = por %p216, %p217
    %p219 = scmp.ne.s32.totalorder %s205, %s206
    %p220 = scmp.eq.s32.totalorder %s20, 1
    %p221 = por %p219, %p220
    %p223 = scmp.ne.s32.totalorder %s206, %s222
    %p224 = scmp.eq.s32.totalorder %s20, 0
    %p225 = por %p223, %p224
    %p226 = scmp.le.s32.totalorder 1, %s14
    %p227 = scmp.lt.s32.totalorder %s14, 3
    %p228 = pnand %p226, %p227
    %p229 = pneg %p228
    // Predicated region
    $region9: #{encoder_fwd.6} parent=5 // pred_check
      _
    $region10: #{encoder_fwd.6} parent=5 // pred_check_branch
      %231 = sbr.rel (%p228) target = $region12
    $region11: #{encoder_fwd.6} parent=5 // pred_region
      %s232 = ssub.s32 %s14, 1
      // Predicated region
      $region13: #{encoder_fwd.6} parent=11 // pred_check
        %p233 = pneg %p87
      $region14: #{encoder_fwd.6} parent=11 // pred_check_branch
        %235 = sbr.rel (%p233) target = $region16
      $region15: #{encoder_fwd.6} parent=11 // pred_region
        _
      $region16: #{encoder_fwd.6} parent=11 // pred_fallthru
        _
      // Predicated region
      $region17: #{encoder_fwd.6} parent=11 // pred_check
        %p236 = pneg %p108
      $region18: #{encoder_fwd.6} parent=11 // pred_check_branch
        %238 = sbr.rel (%p236) target = $region20
      $region19: #{encoder_fwd.6} parent=11 // pred_region
        _
      $region20: #{encoder_fwd.6} parent=11 // pred_fallthru
        _
      // Predicated region
      $region21: #{encoder_fwd.6} parent=11 // pred_check
        %p239 = pneg %p129
      $region22: #{encoder_fwd.6} parent=11 // pred_check_branch
        %241 = sbr.rel (%p239) target = $region24
      $region23: #{encoder_fwd.6} parent=11 // pred_region
        _
      $region24: #{encoder_fwd.6} parent=11 // pred_fallthru
        _
      // Predicated region
      $region25: #{encoder_fwd.6} parent=11 // pred_check
        %p242 = pneg %p150
      $region26: #{encoder_fwd.6} parent=11 // pred_check_branch
        %244 = sbr.rel (%p242) target = $region28
      $region27: #{encoder_fwd.6} parent=11 // pred_region
        _
      $region28: #{encoder_fwd.6} parent=11 // pred_fallthru
        _
      // Predicated region
      $region29: #{encoder_fwd.6} parent=11 // pred_check
        %p245 = pneg %p171
      $region30: #{encoder_fwd.6} parent=11 // pred_check_branch
        %247 = sbr.rel (%p245) target = $region32
      $region31: #{encoder_fwd.6} parent=11 // pred_region
        _
      $region32: #{encoder_fwd.6} parent=11 // pred_fallthru
        _
      // Predicated region
      $region33: #{encoder_fwd.6} parent=11 // pred_check
        %p248 = pneg %p192
      $region34: #{encoder_fwd.6} parent=11 // pred_check_branch
        %250 = sbr.rel (%p248) target = $region36
      $region35: #{encoder_fwd.6} parent=11 // pred_region
        _
      $region36: #{encoder_fwd.6} parent=11 // pred_fallthru
        _
    $region12: #{encoder_fwd.6} parent=5 // pred_fallthru
      _
    %p251 = scmp.lt.s32.totalorder %s14, 2
    // Predicated region
    $region37: #{encoder_fwd.6} parent=5 // pred_check
      %p252 = pneg %p251
    $region38: #{encoder_fwd.6} parent=5 // pred_check_branch
      %254 = sbr.rel (%p252) target = $region40
    $region39: #{encoder_fwd.6} parent=5 // pred_region
      // Predicated region
      $region41: #{encoder_fwd.6} parent=39 // pred_check
        %p255 = pneg %p34
      $region42: #{encoder_fwd.6} parent=39 // pred_check_branch
        %257 = sbr.rel (%p255) target = $region44
      $region43: #{encoder_fwd.6} parent=39 // pred_region
        %p258 = scmp.lt.s32.totalorder %s14, 1
        %s259 = scalar_select %p258, %s14, 1
        %s260 = smul.addr %s259, 8
        %s261 = scalar_lea.vmem %s0, %s260
      $region44: #{encoder_fwd.6} parent=39 // pred_fallthru
        _
      // Predicated region
      $region45: #{encoder_fwd.6} parent=39 // pred_check
        %p262 = pneg %p60
      $region46: #{encoder_fwd.6} parent=39 // pred_check_branch
        %264 = sbr.rel (%p262) target = $region48
      $region47: #{encoder_fwd.6} parent=39 // pred_region
        %p265 = scmp.lt.s32.totalorder %s14, 1
        %s266 = scalar_select %p265, %s14, 1
        %s267 = smul.addr %s266, 8
        %s268 = scalar_lea.vmem %s1, %s267
      $region48: #{encoder_fwd.6} parent=39 // pred_fallthru
        _
    $region40: #{encoder_fwd.6} parent=5 // pred_fallthru
      _
    %p269 = scmp.le.s32.totalorder 1, %s14
    %p270 = scmp.lt.s32.totalorder %s14, 3
    %p271 = pnand %p269, %p270
    %p272 = pneg %p271
    // Predicated region
    $region49: #{encoder_fwd.6} parent=5 // pred_check
      _
    $region50: #{encoder_fwd.6} parent=5 // pred_check_branch
      %274 = sbr.rel (%p271) target = $region52
    $region51: #{encoder_fwd.6} parent=5 // pred_region
      %s275 = ssub.s32 %s14, 1
      %p276 = scmp.lt.s32.totalorder %s19, 1
      %s277 = scalar_select %p276, %s19, 1
      %s278 = smul.addr %s277, 8
      %s279 = scalar_lea.vmem %s0, %s278
      %p280 = pneg %p40
      %p281 = pneg %p37
      %p282 = scmp.lt.s32.totalorder %s19, 1
      %s283 = scalar_select %p282, %s19, 1
      %s284 = smul.addr %s283, 8
      %s285 = scalar_lea.vmem %s1, %s284
      %p286 = pneg %p66
      %p287 = pneg %p63
      %p288 = pneg %p87
      %p289 = pneg %p84
      %p290 = pneg %p108
      %p291 = pneg %p105
      %p292 = pneg %p129
      %p293 = pneg %p126
      %p294 = pneg %p150
      %p295 = pneg %p147
      %p296 = pneg %p171
      %p297 = pneg %p168
      %p298 = pneg %p192
      %p299 = pneg %p189
      %p300 = pneg %p218
      %p301 = pneg %p215
      %p302 = scmp.lt.s32.totalorder %s19, 1
      %s303 = scalar_select %p302, %s19, 1
      %s304 = smul.addr %s303, 8
      %s305 = scalar_lea.vmem %s8, %s304
      %p306 = scmp.lt.s32.totalorder %s19, 1
      %s307 = scalar_select %p306, %s19, 1
      %s308 = smul.addr %s307, 8
      %s309 = scalar_lea.vmem %s0, %s308
      %p310 = scmp.lt.s32.totalorder %s19, 1
      %s311 = scalar_select %p310, %s19, 1
      %s312 = smul.addr %s311, 8
      %s313 = scalar_lea.vmem %s1, %s312
      %p314 = scmp.lt.s32.totalorder %s19, 1
      %s315 = scalar_select %p314, %s19, 1
      %s316 = smul.addr %s315, 8
      %s317 = scalar_lea.vmem %s8, %s316
      %v318 = vld [vmem:[%s309] sm:$0xff]
      %v319 = vld [vmem:[%s2] sm:$0xff]
      %v320 = vld [vmem:[%s2 + $0x8] sm:$0xff]
      %v321 = vld [vmem:[%s2 + $0x10] sm:$0xff]
      %v322 = vld [vmem:[%s2 + $0x18] sm:$0xff]
      %v323 = vld [vmem:[%s3] sm:$0x1]
      %v325 = vlaneseq
      %v326 = vshrl.u32 %v325, 7
      %v327 = vsub.s32 0, %v326
      %v328 = vrot.slane %v323, %v327
      %vm330 = vcmask 261120
      %v332 = vsel %vm330, %v318, 0
      %334 = vmatprep.subr.mxu0 0.0
      %335 = vmatpush1.msra.mxu0 %v319
      %336 = vmatprep.subr.mxu0 0.0
      %337 = vmatpush1.msra.mxu0 %v320
      %338 = vmatprep.subr.mxu0 0.0
      %339 = vmatpush1.msra.mxu0 %v321
      %340 = vmatprep.subr.mxu0 0.0
      %341 = vmatpush1.msra.mxu0 %v322
      %342 = vmatprep.subr.mxu0 0.0
      %343 = vmatpush1.msra.mxu0 0.0
      %344 = vmatprep.subr.mxu0 0.0
      %345 = vmatpush1.msra.mxu0 0.0
      %346 = vmatprep.subr.mxu0 0.0
      %347 = vmatpush1.msra.mxu0 0.0
      %348 = vmatprep.subr.mxu0 0.0
      %349 = vmatpush1.msra.mxu0 0.0
      %350 = vmatprep.subr.mxu0 0.0
      %351 = vmatpush1.msra.mxu0 0.0
      %352 = vmatprep.subr.mxu0 0.0
      %353 = vmatpush1.msra.mxu0 0.0
      %354 = vmatprep.subr.mxu0 0.0
      %355 = vmatpush1.msra.mxu0 0.0
      %356 = vmatprep.subr.mxu0 0.0
      %357 = vmatpush1.msra.mxu0 0.0
      %358 = vmatprep.subr.mxu0 0.0
      %359 = vmatpush1.msra.mxu0 0.0
      %360 = vmatprep.subr.mxu0 0.0
      %361 = vmatpush1.msra.mxu0 0.0
      %362 = vmatprep.subr.mxu0 0.0
      %363 = vmatpush1.msra.mxu0 0.0
      %364 = vmatprep.subr.mxu0 0.0
      %365 = vmatpush1.msra.mxu0 0.0
      %366 = vmatprep.subr.mxu0 0.0
      %367 = vmatpush1.msra.mxu0 0.0
      %368 = vmatprep.subr.mxu0 0.0
      %369 = vmatpush1.msra.mxu0 0.0
      %370 = vmatprep.subr.mxu0 0.0
      %371 = vmatpush1.msra.mxu0 0.0
      %372 = vmatprep.subr.mxu0 0.0
      %373 = vmatpush1.msra.mxu0 0.0
      %374 = vmatprep.subr.mxu0 0.0
      %375 = vmatpush1.msra.mxu0 0.0
      %376 = vmatprep.subr.mxu0 0.0
      %377 = vmatpush1.msra.mxu0 0.0
      %378 = vmatprep.subr.mxu0 0.0
      %379 = vmatpush1.msra.mxu0 0.0
      %380 = vmatprep.subr.mxu0 0.0
      %381 = vmatpush1.msra.mxu0 0.0
      %382 = vmatprep.subr.mxu0 0.0
      %383 = vmatpush1.msra.mxu0 0.0
      %384 = vmatprep.subr.mxu0 0.0
      %385 = vmatpush1.msra.mxu0 0.0
      %386 = vmatprep.subr.mxu0 0.0
      %387 = vmatpush1.msra.mxu0 0.0
      %388 = vmatprep.subr.mxu0 0.0
      %389 = vmatpush1.msra.mxu0 0.0
      %390 = vmatprep.subr.mxu0 0.0
      %391 = vmatpush1.msra.mxu0 0.0
      %392 = vmatprep.subr.mxu0 0.0
      %393 = vmatpush1.msra.mxu0 0.0
      %394 = vmatprep.subr.mxu0 0.0
      %395 = vmatpush1.msra.mxu0 0.0
      %396 = vmatprep.subr.mxu0 0.0
      %397 = vmatpush1.msra.mxu0 0.0
      %398 = vmatprep.mubr.f32.mxu0 0.0
      %399 = vmatmul.mubr.f32.gmra.mrb[0].mxu0 %v332
      %v400 = vpop.f32.mrb[0].mxu0
      %v401 = vadd.f32 %v328, %v400
      %v402 = vpop.f32.mrb[0].mxu0
      %403 = vdwg.mxu0
      %v404 = vld [vmem:[%s313] sm:$0xff]
      %vm405 = vcmp.gt.f32.partialorder %v404, 0.5
      %407 = vrot.lane.b32.xlu0 %v401, 96
      %v408 = vpop.permute.xlu0 %407
      %vm409 = vcmask 64512
      %v410 = vsel %vm409, %v401, 0
      %v412 = vsel %vm409, %v408, 0
      %414 = vmatprep.subr.mxu0 0.0
      %415 = vmatpush1.xpose.msra.mxu0 %v412
      %416 = vmatprep.subr.mxu0 0.0
      %417 = vmatpush1.xpose.msra.mxu0 0.0
      %418 = vmatprep.subr.mxu0 0.0
      %419 = vmatpush1.xpose.msra.mxu0 0.0
      %420 = vmatprep.subr.mxu0 0.0
      %421 = vmatpush1.xpose.msra.mxu0 0.0
      %422 = vmatprep.subr.mxu0 0.0
      %423 = vmatpush1.xpose.msra.mxu0 0.0
      %424 = vmatprep.subr.mxu0 0.0
      %425 = vmatpush1.xpose.msra.mxu0 0.0
      %426 = vmatprep.subr.mxu0 0.0
      %427 = vmatpush1.xpose.msra.mxu0 0.0
      %428 = vmatprep.subr.mxu0 0.0
      %429 = vmatpush1.xpose.msra.mxu0 0.0
      %430 = vmatprep.subr.mxu0 0.0
      %431 = vmatpush1.xpose.msra.mxu0 0.0
      %432 = vmatprep.subr.mxu0 0.0
      %433 = vmatpush1.xpose.msra.mxu0 0.0
      %434 = vmatprep.subr.mxu0 0.0
      %435 = vmatpush1.xpose.msra.mxu0 0.0
      %436 = vmatprep.subr.mxu0 0.0
      %437 = vmatpush1.xpose.msra.mxu0 0.0
      %438 = vmatprep.subr.mxu0 0.0
      %439 = vmatpush1.xpose.msra.mxu0 0.0
      %440 = vmatprep.subr.mxu0 0.0
      %441 = vmatpush1.xpose.msra.mxu0 0.0
      %442 = vmatprep.subr.mxu0 0.0
      %443 = vmatpush1.xpose.msra.mxu0 0.0
      %444 = vmatprep.subr.mxu0 0.0
      %445 = vmatpush1.xpose.msra.mxu0 0.0
      %446 = vmatprep.subr.mxu0 0.0
      %447 = vmatpush1.xpose.msra.mxu0 0.0
      %448 = vmatprep.subr.mxu0 0.0
      %449 = vmatpush1.xpose.msra.mxu0 0.0
      %450 = vmatprep.subr.mxu0 0.0
      %451 = vmatpush1.xpose.msra.mxu0 0.0
      %452 = vmatprep.subr.mxu0 0.0
      %453 = vmatpush1.xpose.msra.mxu0 0.0
      %454 = vmatprep.subr.mxu0 0.0
      %455 = vmatpush1.xpose.msra.mxu0 0.0
      %456 = vmatprep.subr.mxu0 0.0
      %457 = vmatpush1.xpose.msra.mxu0 0.0
      %458 = vmatprep.subr.mxu0 0.0
      %459 = vmatpush1.xpose.msra.mxu0 0.0
      %460 = vmatprep.subr.mxu0 0.0
      %461 = vmatpush1.xpose.msra.mxu0 0.0
      %462 = vmatprep.subr.mxu0 0.0
      %463 = vmatpush1.xpose.msra.mxu0 0.0
      %464 = vmatprep.subr.mxu0 0.0
      %465 = vmatpush1.xpose.msra.mxu0 0.0
      %466 = vmatprep.subr.mxu0 0.0
      %467 = vmatpush1.xpose.msra.mxu0 0.0
      %468 = vmatprep.subr.mxu0 0.0
      %469 = vmatpush1.xpose.msra.mxu0 0.0
      %470 = vmatprep.subr.mxu0 0.0
      %471 = vmatpush1.xpose.msra.mxu0 0.0
      %472 = vmatprep.subr.mxu0 0.0
      %473 = vmatpush1.xpose.msra.mxu0 0.0
      %474 = vmatprep.subr.mxu0 0.0
      %475 = vmatpush1.xpose.msra.mxu0 0.0
      %476 = vmatprep.subr.mxu0 0.0
      %477 = vmatpush1.xpose.msra.mxu0 0.0
      %478 = vmatprep.mubr.f32.mxu0 0.0
      %479 = vmatmul.mubr.f32.gmra.mrb[0].mxu0 %v410
      %v480 = vpop.f32.mrb[0].mxu0
      %v481 = vadd.f32 0.0, %v480
      %v482 = vpop.f32.mrb[0].mxu0
      %483 = vdwg.mxu0
      %v484 = vmul.f32 %v481, 0.35355338
      %v485 = vsel %vm405, -1e+30, %v484
      %v486 = vsel %vm409, %v485, -inf
      %487 = vmax.xlane.f32.xlu0 %v486
      %v488 = vpop.xlane.xlu0 %487
      %v489 = vsub.f32 %v485, %v488
      %v490 = vmul.f32 %v489, 1.442695
      %v491 = vpow.pop %v490
      %v492 = vsel %vm409, %v491, 0.0
      %493 = vadd.xlane.f32.xlu0 %v492
      %v494 = vpop.xlane.xlu0 %493
      %v495 = vrcp.pop %v494
      %v496 = vmul.f32 %v491, %v495
      %497 = vrot.lane.b32.xlu0 %v401, 64
      %v498 = vpop.permute.xlu0 %497
      %v501 = vsel %vm409, %v496, 0
      %503 = vmatprep.subr.mxu0 0.0
      %504 = vmatpush1.msra.mxu0 %v498
      %505 = vmatprep.subr.mxu0 0.0
      %506 = vmatpush1.msra.mxu0 0.0
      %507 = vmatprep.subr.mxu0 0.0
      %508 = vmatpush1.msra.mxu0 0.0
      %509 = vmatprep.subr.mxu0 0.0
      %510 = vmatpush1.msra.mxu0 0.0
      %511 = vmatprep.subr.mxu0 0.0
      %512 = vmatpush1.msra.mxu0 0.0
      %513 = vmatprep.subr.mxu0 0.0
      %514 = vmatpush1.msra.mxu0 0.0
      %515 = vmatprep.subr.mxu0 0.0
      %516 = vmatpush1.msra.mxu0 0.0
      %517 = vmatprep.subr.mxu0 0.0
      %518 = vmatpush1.msra.mxu0 0.0
      %519 = vmatprep.subr.mxu0 0.0
      %520 = vmatpush1.msra.mxu0 0.0
      %521 = vmatprep.subr.mxu0 0.0
      %522 = vmatpush1.msra.mxu0 0.0
      %523 = vmatprep.subr.mxu0 0.0
      %524 = vmatpush1.msra.mxu0 0.0
      %525 = vmatprep.subr.mxu0 0.0
      %526 = vmatpush1.msra.mxu0 0.0
      %527 = vmatprep.subr.mxu0 0.0
      %528 = vmatpush1.msra.mxu0 0.0
      %529 = vmatprep.subr.mxu0 0.0
      %530 = vmatpush1.msra.mxu0 0.0
      %531 = vmatprep.subr.mxu0 0.0
      %532 = vmatpush1.msra.mxu0 0.0
      %533 = vmatprep.subr.mxu0 0.0
      %534 = vmatpush1.msra.mxu0 0.0
      %535 = vmatprep.subr.mxu0 0.0
      %536 = vmatpush1.msra.mxu0 0.0
      %537 = vmatprep.subr.mxu0 0.0
      %538 = vmatpush1.msra.mxu0 0.0
      %539 = vmatprep.subr.mxu0 0.0
      %540 = vmatpush1.msra.mxu0 0.0
      %541 = vmatprep.subr.mxu0 0.0
      %542 = vmatpush1.msra.mxu0 0.0
      %543 = vmatprep.subr.mxu0 0.0
      %544 = vmatpush1.msra.mxu0 0.0
      %545 = vmatprep.subr.mxu0 0.0
      %546 = vmatpush1.msra.mxu0 0.0
      %547 = vmatprep.subr.mxu0 0.0
      %548 = vmatpush1.msra.mxu0 0.0
      %549 = vmatprep.subr.mxu0 0.0
      %550 = vmatpush1.msra.mxu0 0.0
      %551 = vmatprep.subr.mxu0 0.0
      %552 = vmatpush1.msra.mxu0 0.0
      %553 = vmatprep.subr.mxu0 0.0
      %554 = vmatpush1.msra.mxu0 0.0
      %555 = vmatprep.subr.mxu0 0.0
      %556 = vmatpush1.msra.mxu0 0.0
      %557 = vmatprep.subr.mxu0 0.0
      %558 = vmatpush1.msra.mxu0 0.0
      %559 = vmatprep.subr.mxu0 0.0
      %560 = vmatpush1.msra.mxu0 0.0
      %561 = vmatprep.subr.mxu0 0.0
      %562 = vmatpush1.msra.mxu0 0.0
      %563 = vmatprep.subr.mxu0 0.0
      %564 = vmatpush1.msra.mxu0 0.0
      %565 = vmatprep.subr.mxu0 0.0
      %566 = vmatpush1.msra.mxu0 0.0
      %567 = vmatprep.mubr.f32.mxu0 0.0
      %568 = vmatmul.mubr.f32.gmra.mrb[0].mxu0 %v501
      %v569 = vpop.f32.mrb[0].mxu0
      %v570 = vadd.f32 0.0, %v569
      %v571 = vpop.f32.mrb[0].mxu0
      %572 = vdwg.mxu0
      %573 = vrot.lane.b32.xlu0 %v401, 120
      %v574 = vpop.permute.xlu0 %573
      %575 = vrot.lane.b32.xlu0 %v401, 88
      %v576 = vpop.permute.xlu0 %575
      %v577 = vsel %vm409, %v574, 0
      %v579 = vsel %vm409, %v576, 0
      %581 = vmatprep.subr.mxu0 0.0
      %582 = vmatpush1.xpose.msra.mxu0 %v579
      %583 = vmatprep.subr.mxu0 0.0
      %584 = vmatpush1.xpose.msra.mxu0 0.0
      %585 = vmatprep.subr.mxu0 0.0
      %586 = vmatpush1.xpose.msra.mxu0 0.0
      %587 = vmatprep.subr.mxu0 0.0
      %588 = vmatpush1.xpose.msra.mxu0 0.0
      %589 = vmatprep.subr.mxu0 0.0
      %590 = vmatpush1.xpose.msra.mxu0 0.0
      %591 = vmatprep.subr.mxu0 0.0
      %592 = vmatpush1.xpose.msra.mxu0 0.0
      %593 = vmatprep.subr.mxu0 0.0
      %594 = vmatpush1.xpose.msra.mxu0 0.0
      %595 = vmatprep.subr.mxu0 0.0
      %596 = vmatpush1.xpose.msra.mxu0 0.0
      %597 = vmatprep.subr.mxu0 0.0
      %598 = vmatpush1.xpose.msra.mxu0 0.0
      %599 = vmatprep.subr.mxu0 0.0
      %600 = vmatpush1.xpose.msra.mxu0 0.0
      %601 = vmatprep.subr.mxu0 0.0
      %602 = vmatpush1.xpose.msra.mxu0 0.0
      %603 = vmatprep.subr.mxu0 0.0
      %604 = vmatpush1.xpose.msra.mxu0 0.0
      %605 = vmatprep.subr.mxu0 0.0
      %606 = vmatpush1.xpose.msra.mxu0 0.0
      %607 = vmatprep.subr.mxu0 0.0
      %608 = vmatpush1.xpose.msra.mxu0 0.0
      %609 = vmatprep.subr.mxu0 0.0
      %610 = vmatpush1.xpose.msra.mxu0 0.0
      %611 = vmatprep.subr.mxu0 0.0
      %612 = vmatpush1.xpose.msra.mxu0 0.0
      %613 = vmatprep.subr.mxu0 0.0
      %614 = vmatpush1.xpose.msra.mxu0 0.0
      %615 = vmatprep.subr.mxu0 0.0
      %616 = vmatpush1.xpose.msra.mxu0 0.0
      %617 = vmatprep.subr.mxu0 0.0
      %618 = vmatpush1.xpose.msra.mxu0 0.0
      %619 = vmatprep.subr.mxu0 0.0
      %620 = vmatpush1.xpose.msra.mxu0 0.0
      %621 = vmatprep.subr.mxu0 0.0
      %622 = vmatpush1.xpose.msra.mxu0 0.0
      %623 = vmatprep.subr.mxu0 0.0
      %624 = vmatpush1.xpose.msra.mxu0 0.0
      %625 = vmatprep.subr.mxu0 0.0
      %626 = vmatpush1.xpose.msra.mxu0 0.0
      %627 = vmatprep.subr.mxu0 0.0
      %628 = vmatpush1.xpose.msra.mxu0 0.0
      %629 = vmatprep.subr.mxu0 0.0
      %630 = vmatpush1.xpose.msra.mxu0 0.0
      %631 = vmatprep.subr.mxu0 0.0
      %632 = vmatpush1.xpose.msra.mxu0 0.0
      %633 = vmatprep.subr.mxu0 0.0
      %634 = vmatpush1.xpose.msra.mxu0 0.0
      %635 = vmatprep.subr.mxu0 0.0
      %636 = vmatpush1.xpose.msra.mxu0 0.0
      %637 = vmatprep.subr.mxu0 0.0
      %638 = vmatpush1.xpose.msra.mxu0 0.0
      %639 = vmatprep.subr.mxu0 0.0
      %640 = vmatpush1.xpose.msra.mxu0 0.0
      %641 = vmatprep.subr.mxu0 0.0
      %642 = vmatpush1.xpose.msra.mxu0 0.0
      %643 = vmatprep.subr.mxu0 0.0
      %644 = vmatpush1.xpose.msra.mxu0 0.0
      %645 = vmatprep.mubr.f32.mxu0 0.0
      %646 = vmatmul.mubr.f32.gmra.mrb[0].mxu0 %v577
      %v647 = vpop.f32.mrb[0].mxu0
      %v648 = vadd.f32 0.0, %v647
      %v649 = vpop.f32.mrb[0].mxu0
      %650 = vdwg.mxu0
      %v651 = vmul.f32 %v648, 0.35355338
      %v652 = vsel %vm405, -1e+30, %v651
      %v653 = vsel %vm409, %v652, -inf
      %654 = vmax.xlane.f32.xlu0 %v653
      %v655 = vpop.xlane.xlu0 %654
      %v656 = vsub.f32 %v652, %v655
      %v657 = vmul.f32 %v656, 1.442695
      %v658 = vpow.pop %v657
      %v659 = vsel %vm409, %v658, 0.0
      %660 = vadd.xlane.f32.xlu0 %v659
      %v661 = vpop.xlane.xlu0 %660
      %v662 = vrcp.pop %v661
      %v663 = vmul.f32 %v658, %v662
      %664 = vrot.lane.b32.xlu0 %v401, 56
      %v665 = vpop.permute.xlu0 %664
      %v668 = vsel %vm409, %v663, 0
      %670 = vmatprep.subr.mxu0 0.0
      %671 = vmatpush1.msra.mxu0 %v665
      %672 = vmatprep.subr.mxu0 0.0
      %673 = vmatpush1.msra.mxu0 0.0
      %674 = vmatprep.subr.mxu0 0.0
      %675 = vmatpush1.msra.mxu0 0.0
      %676 = vmatprep.subr.mxu0 0.0
      %677 = vmatpush1.msra.mxu0 0.0
      %678 = vmatprep.subr.mxu0 0.0
      %679 = vmatpush1.msra.mxu0 0.0
      %680 = vmatprep.subr.mxu0 0.0
      %681 = vmatpush1.msra.mxu0 0.0
      %682 = vmatprep.subr.mxu0 0.0
      %683 = vmatpush1.msra.mxu0 0.0
      %684 = vmatprep.subr.mxu0 0.0
      %685 = vmatpush1.msra.mxu0 0.0
      %686 = vmatprep.subr.mxu0 0.0
      %687 = vmatpush1.msra.mxu0 0.0
      %688 = vmatprep.subr.mxu0 0.0
      %689 = vmatpush1.msra.mxu0 0.0
      %690 = vmatprep.subr.mxu0 0.0
      %691 = vmatpush1.msra.mxu0 0.0
      %692 = vmatprep.subr.mxu0 0.0
      %693 = vmatpush1.msra.mxu0 0.0
      %694 = vmatprep.subr.mxu0 0.0
      %695 = vmatpush1.msra.mxu0 0.0
      %696 = vmatprep.subr.mxu0 0.0
      %697 = vmatpush1.msra.mxu0 0.0
      %698 = vmatprep.subr.mxu0 0.0
      %699 = vmatpush1.msra.mxu0 0.0
      %700 = vmatprep.subr.mxu0 0.0
      %701 = vmatpush1.msra.mxu0 0.0
      %702 = vmatprep.subr.mxu0 0.0
      %703 = vmatpush1.msra.mxu0 0.0
      %704 = vmatprep.subr.mxu0 0.0
      %705 = vmatpush1.msra.mxu0 0.0
      %706 = vmatprep.subr.mxu0 0.0
      %707 = vmatpush1.msra.mxu0 0.0
      %708 = vmatprep.subr.mxu0 0.0
      %709 = vmatpush1.msra.mxu0 0.0
      %710 = vmatprep.subr.mxu0 0.0
      %711 = vmatpush1.msra.mxu0 0.0
      %712 = vmatprep.subr.mxu0 0.0
      %713 = vmatpush1.msra.mxu0 0.0
      %714 = vmatprep.subr.mxu0 0.0
      %715 = vmatpush1.msra.mxu0 0.0
      %716 = vmatprep.subr.mxu0 0.0
      %717 = vmatpush1.msra.mxu0 0.0
      %718 = vmatprep.subr.mxu0 0.0
      %719 = vmatpush1.msra.mxu0 0.0
      %720 = vmatprep.subr.mxu0 0.0
      %721 = vmatpush1.msra.mxu0 0.0
      %722 = vmatprep.subr.mxu0 0.0
      %723 = vmatpush1.msra.mxu0 0.0
      %724 = vmatprep.subr.mxu0 0.0
      %725 = vmatpush1.msra.mxu0 0.0
      %726 = vmatprep.subr.mxu0 0.0
      %727 = vmatpush1.msra.mxu0 0.0
      %728 = vmatprep.subr.mxu0 0.0
      %729 = vmatpush1.msra.mxu0 0.0
      %730 = vmatprep.subr.mxu0 0.0
      %731 = vmatpush1.msra.mxu0 0.0
      %732 = vmatprep.subr.mxu0 0.0
      %733 = vmatpush1.msra.mxu0 0.0
      %734 = vmatprep.mubr.f32.mxu0 0.0
      %735 = vmatmul.mubr.f32.gmra.mrb[0].mxu0 %v668
      %v736 = vpop.f32.mrb[0].mxu0
      %v737 = vadd.f32 0.0, %v736
      %v738 = vpop.f32.mrb[0].mxu0
      %739 = vdwg.mxu0
      %740 = vrot.lane.b32.xlu0 %v401, 112
      %v741 = vpop.permute.xlu0 %740
      %742 = vrot.lane.b32.xlu0 %v401, 80
      %v743 = vpop.permute.xlu0 %742
      %v744 = vsel %vm409, %v741, 0
      %v746 = vsel %vm409, %v743, 0
      %748 = vmatprep.subr.mxu0 0.0
      %749 = vmatpush1.xpose.msra.mxu0 %v746
      %750 = vmatprep.subr.mxu0 0.0
      %751 = vmatpush1.xpose.msra.mxu0 0.0
      %752 = vmatprep.subr.mxu0 0.0
      %753 = vmatpush1.xpose.msra.mxu0 0.0
      %754 = vmatprep.subr.mxu0 0.0
      %755 = vmatpush1.xpose.msra.mxu0 0.0
      %756 = vmatprep.subr.mxu0 0.0
      %757 = vmatpush1.xpose.msra.mxu0 0.0
      %758 = vmatprep.subr.mxu0 0.0
      %759 = vmatpush1.xpose.msra.mxu0 0.0
      %760 = vmatprep.subr.mxu0 0.0
      %761 = vmatpush1.xpose.msra.mxu0 0.0
      %762 = vmatprep.subr.mxu0 0.0
      %763 = vmatpush1.xpose.msra.mxu0 0.0
      %764 = vmatprep.subr.mxu0 0.0
      %765 = vmatpush1.xpose.msra.mxu0 0.0
      %766 = vmatprep.subr.mxu0 0.0
      %767 = vmatpush1.xpose.msra.mxu0 0.0
      %768 = vmatprep.subr.mxu0 0.0
      %769 = vmatpush1.xpose.msra.mxu0 0.0
      %770 = vmatprep.subr.mxu0 0.0
      %771 = vmatpush1.xpose.msra.mxu0 0.0
      %772 = vmatprep.subr.mxu0 0.0
      %773 = vmatpush1.xpose.msra.mxu0 0.0
      %774 = vmatprep.subr.mxu0 0.0
      %775 = vmatpush1.xpose.msra.mxu0 0.0
      %776 = vmatprep.subr.mxu0 0.0
      %777 = vmatpush1.xpose.msra.mxu0 0.0
      %778 = vmatprep.subr.mxu0 0.0
      %779 = vmatpush1.xpose.msra.mxu0 0.0
      %780 = vmatprep.subr.mxu0 0.0
      %781 = vmatpush1.xpose.msra.mxu0 0.0
      %782 = vmatprep.subr.mxu0 0.0
      %783 = vmatpush1.xpose.msra.mxu0 0.0
      %784 = vmatprep.subr.mxu0 0.0
      %785 = vmatpush1.xpose.msra.mxu0 0.0
      %786 = vmatprep.subr.mxu0 0.0
      %787 = vmatpush1.xpose.msra.mxu0 0.0
      %788 = vmatprep.subr.mxu0 0.0
      %789 = vmatpush1.xpose.msra.mxu0 0.0
      %790 = vmatprep.subr.mxu0 0.0
      %791 = vmatpush1.xpose.msra.mxu0 0.0
      %792 = vmatprep.subr.mxu0 0.0
      %793 = vmatpush1.xpose.msra.mxu0 0.0
      %794 = vmatprep.subr.mxu0 0.0
      %795 = vmatpush1.xpose.msra.mxu0 0.0
      %796 = vmatprep.subr.mxu0 0.0
      %797 = vmatpush1.xpose.msra.mxu0 0.0
      %798 = vmatprep.subr.mxu0 0.0
      %799 = vmatpush1.xpose.msra.mxu0 0.0
      %800 = vmatprep.subr.mxu0 0.0
      %801 = vmatpush1.xpose.msra.mxu0 0.0
      %802 = vmatprep.subr.mxu0 0.0
      %803 = vmatpush1.xpose.msra.mxu0 0.0
      %804 = vmatprep.subr.mxu0 0.0
      %805 = vmatpush1.xpose.msra.mxu0 0.0
      %806 = vmatprep.subr.mxu0 0.0
      %807 = vmatpush1.xpose.msra.mxu0 0.0
      %808 = vmatprep.subr.mxu0 0.0
      %809 = vmatpush1.xpose.msra.mxu0 0.0
      %810 = vmatprep.subr.mxu0 0.0
      %811 = vmatpush1.xpose.msra.mxu0 0.0
      %812 = vmatprep.mubr.f32.mxu0 0.0
      %813 = vmatmul.mubr.f32.gmra.mrb[0].mxu0 %v744
      %v814 = vpop.f32.mrb[0].mxu0
      %v815 = vadd.f32 0.0, %v814
      %v816 = vpop.f32.mrb[0].mxu0
      %817 = vdwg.mxu0
      %v818 = vmul.f32 %v815, 0.35355338
      %v819 = vsel %vm405, -1e+30, %v818
      %v820 = vsel %vm409, %v819, -inf
      %821 = vmax.xlane.f32.xlu0 %v820
      %v822 = vpop.xlane.xlu0 %821
      %v823 = vsub.f32 %v819, %v822
      %v824 = vmul.f32 %v823, 1.442695
      %v825 = vpow.pop %v824
      %v826 = vsel %vm409, %v825, 0.0
      %827 = vadd.xlane.f32.xlu0 %v826
      %v828 = vpop.xlane.xlu0 %827
      %v829 = vrcp.pop %v828
      %v830 = vmul.f32 %v825, %v829
      %831 = vrot.lane.b32.xlu0 %v401, 48
      %v832 = vpop.permute.xlu0 %831
      %v835 = vsel %vm409, %v830, 0
      %837 = vmatprep.subr.mxu0 0.0
      %838 = vmatpush1.msra.mxu0 %v832
      %839 = vmatprep.subr.mxu0 0.0
      %840 = vmatpush1.msra.mxu0 0.0
      %841 = vmatprep.subr.mxu0 0.0
      %842 = vmatpush1.msra.mxu0 0.0
      %843 = vmatprep.subr.mxu0 0.0
      %844 = vmatpush1.msra.mxu0 0.0
      %845 = vmatprep.subr.mxu0 0.0
      %846 = vmatpush1.msra.mxu0 0.0
      %847 = vmatprep.subr.mxu0 0.0
      %848 = vmatpush1.msra.mxu0 0.0
      %849 = vmatprep.subr.mxu0 0.0
      %850 = vmatpush1.msra.mxu0 0.0
      %851 = vmatprep.subr.mxu0 0.0
      %852 = vmatpush1.msra.mxu0 0.0
      %853 = vmatprep.subr.mxu0 0.0
      %854 = vmatpush1.msra.mxu0 0.0
      %855 = vmatprep.subr.mxu0 0.0
      %856 = vmatpush1.msra.mxu0 0.0
      %857 = vmatprep.subr.mxu0 0.0
      %858 = vmatpush1.msra.mxu0 0.0
      %859 = vmatprep.subr.mxu0 0.0
      %860 = vmatpush1.msra.mxu0 0.0
      %861 = vmatprep.subr.mxu0 0.0
      %862 = vmatpush1.msra.mxu0 0.0
      %863 = vmatprep.subr.mxu0 0.0
      %864 = vmatpush1.msra.mxu0 0.0
      %865 = vmatprep.subr.mxu0 0.0
      %866 = vmatpush1.msra.mxu0 0.0
      %867 = vmatprep.subr.mxu0 0.0
      %868 = vmatpush1.msra.mxu0 0.0
      %869 = vmatprep.subr.mxu0 0.0
      %870 = vmatpush1.msra.mxu0 0.0
      %871 = vmatprep.subr.mxu0 0.0
      %872 = vmatpush1.msra.mxu0 0.0
      %873 = vmatprep.subr.mxu0 0.0
      %874 = vmatpush1.msra.mxu0 0.0
      %875 = vmatprep.subr.mxu0 0.0
      %876 = vmatpush1.msra.mxu0 0.0
      %877 = vmatprep.subr.mxu0 0.0
      %878 = vmatpush1.msra.mxu0 0.0
      %879 = vmatprep.subr.mxu0 0.0
      %880 = vmatpush1.msra.mxu0 0.0
      %881 = vmatprep.subr.mxu0 0.0
      %882 = vmatpush1.msra.mxu0 0.0
      %883 = vmatprep.subr.mxu0 0.0
      %884 = vmatpush1.msra.mxu0 0.0
      %885 = vmatprep.subr.mxu0 0.0
      %886 = vmatpush1.msra.mxu0 0.0
      %887 = vmatprep.subr.mxu0 0.0
      %888 = vmatpush1.msra.mxu0 0.0
      %889 = vmatprep.subr.mxu0 0.0
      %890 = vmatpush1.msra.mxu0 0.0
      %891 = vmatprep.subr.mxu0 0.0
      %892 = vmatpush1.msra.mxu0 0.0
      %893 = vmatprep.subr.mxu0 0.0
      %894 = vmatpush1.msra.mxu0 0.0
      %895 = vmatprep.subr.mxu0 0.0
      %896 = vmatpush1.msra.mxu0 0.0
      %897 = vmatprep.subr.mxu0 0.0
      %898 = vmatpush1.msra.mxu0 0.0
      %899 = vmatprep.subr.mxu0 0.0
      %900 = vmatpush1.msra.mxu0 0.0
      %901 = vmatprep.mubr.f32.mxu0 0.0
      %902 = vmatmul.mubr.f32.gmra.mrb[0].mxu0 %v835
      %v903 = vpop.f32.mrb[0].mxu0
      %v904 = vadd.f32 0.0, %v903
      %v905 = vpop.f32.mrb[0].mxu0
      %906 = vdwg.mxu0
      %907 = vrot.lane.b32.xlu0 %v401, 104
      %v908 = vpop.permute.xlu0 %907
      %909 = vrot.lane.b32.xlu0 %v401, 72
      %v910 = vpop.permute.xlu0 %909
      %v911 = vsel %vm409, %v908, 0
      %v913 = vsel %vm409, %v910, 0
      %915 = vmatprep.subr.mxu0 0.0
      %916 = vmatpush1.xpose.msra.mxu0 %v913
      %917 = vmatprep.subr.mxu0 0.0
      %918 = vmatpush1.xpose.msra.mxu0 0.0
      %919 = vmatprep.subr.mxu0 0.0
      %920 = vmatpush1.xpose.msra.mxu0 0.0
      %921 = vmatprep.subr.mxu0 0.0
      %922 = vmatpush1.xpose.msra.mxu0 0.0
      %923 = vmatprep.subr.mxu0 0.0
      %924 = vmatpush1.xpose.msra.mxu0 0.0
      %925 = vmatprep.subr.mxu0 0.0
      %926 = vmatpush1.xpose.msra.mxu0 0.0
      %927 = vmatprep.subr.mxu0 0.0
      %928 = vmatpush1.xpose.msra.mxu0 0.0
      %929 = vmatprep.subr.mxu0 0.0
      %930 = vmatpush1.xpose.msra.mxu0 0.0
      %931 = vmatprep.subr.mxu0 0.0
      %932 = vmatpush1.xpose.msra.mxu0 0.0
      %933 = vmatprep.subr.mxu0 0.0
      %934 = vmatpush1.xpose.msra.mxu0 0.0
      %935 = vmatprep.subr.mxu0 0.0
      %936 = vmatpush1.xpose.msra.mxu0 0.0
      %937 = vmatprep.subr.mxu0 0.0
      %938 = vmatpush1.xpose.msra.mxu0 0.0
      %939 = vmatprep.subr.mxu0 0.0
      %940 = vmatpush1.xpose.msra.mxu0 0.0
      %941 = vmatprep.subr.mxu0 0.0
      %942 = vmatpush1.xpose.msra.mxu0 0.0
      %943 = vmatprep.subr.mxu0 0.0
      %944 = vmatpush1.xpose.msra.mxu0 0.0
      %945 = vmatprep.subr.mxu0 0.0
      %946 = vmatpush1.xpose.msra.mxu0 0.0
      %947 = vmatprep.subr.mxu0 0.0
      %948 = vmatpush1.xpose.msra.mxu0 0.0
      %949 = vmatprep.subr.mxu0 0.0
      %950 = vmatpush1.xpose.msra.mxu0 0.0
      %951 = vmatprep.subr.mxu0 0.0
      %952 = vmatpush1.xpose.msra.mxu0 0.0
      %953 = vmatprep.subr.mxu0 0.0
      %954 = vmatpush1.xpose.msra.mxu0 0.0
      %955 = vmatprep.subr.mxu0 0.0
      %956 = vmatpush1.xpose.msra.mxu0 0.0
      %957 = vmatprep.subr.mxu0 0.0
      %958 = vmatpush1.xpose.msra.mxu0 0.0
      %959 = vmatprep.subr.mxu0 0.0
      %960 = vmatpush1.xpose.msra.mxu0 0.0
      %961 = vmatprep.subr.mxu0 0.0
      %962 = vmatpush1.xpose.msra.mxu0 0.0
      %963 = vmatprep.subr.mxu0 0.0
      %964 = vmatpush1.xpose.msra.mxu0 0.0
      %965 = vmatprep.subr.mxu0 0.0
      %966 = vmatpush1.xpose.msra.mxu0 0.0
      %967 = vmatprep.subr.mxu0 0.0
      %968 = vmatpush1.xpose.msra.mxu0 0.0
      %969 = vmatprep.subr.mxu0 0.0
      %970 = vmatpush1.xpose.msra.mxu0 0.0
      %971 = vmatprep.subr.mxu0 0.0
      %972 = vmatpush1.xpose.msra.mxu0 0.0
      %973 = vmatprep.subr.mxu0 0.0
      %974 = vmatpush1.xpose.msra.mxu0 0.0
      %975 = vmatprep.subr.mxu0 0.0
      %976 = vmatpush1.xpose.msra.mxu0 0.0
      %977 = vmatprep.subr.mxu0 0.0
      %978 = vmatpush1.xpose.msra.mxu0 0.0
      %979 = vmatprep.mubr.f32.mxu0 0.0
      %980 = vmatmul.mubr.f32.gmra.mrb[0].mxu0 %v911
      %v981 = vpop.f32.mrb[0].mxu0
      %v982 = vadd.f32 0.0, %v981
      %v983 = vpop.f32.mrb[0].mxu0
      %984 = vdwg.mxu0
      %v985 = vmul.f32 %v982, 0.35355338
      %v986 = vsel %vm405, -1e+30, %v985
      %v987 = vsel %vm409, %v986, -inf
      %988 = vmax.xlane.f32.xlu0 %v987
      %v989 = vpop.xlane.xlu0 %988
      %v990 = vsub.f32 %v986, %v989
      %v991 = vmul.f32 %v990, 1.442695
      %v992 = vpow.pop %v991
      %v993 = vsel %vm409, %v992, 0.0
      %994 = vadd.xlane.f32.xlu0 %v993
      %v995 = vpop.xlane.xlu0 %994
      %v996 = vrcp.pop %v995
      %v997 = vmul.f32 %v992, %v996
      %998 = vrot.lane.b32.xlu0 %v401, 40
      %v999 = vpop.permute.xlu0 %998
      %v1002 = vsel %vm409, %v997, 0
      %1004 = vmatprep.subr.mxu0 0.0
      %1005 = vmatpush1.msra.mxu0 %v999
      %1006 = vmatprep.subr.mxu0 0.0
      %1007 = vmatpush1.msra.mxu0 0.0
      %1008 = vmatprep.subr.mxu0 0.0
      %1009 = vmatpush1.msra.mxu0 0.0
      %1010 = vmatprep.subr.mxu0 0.0
      %1011 = vmatpush1.msra.mxu0 0.0
      %1012 = vmatprep.subr.mxu0 0.0
      %1013 = vmatpush1.msra.mxu0 0.0
      %1014 = vmatprep.subr.mxu0 0.0
      %1015 = vmatpush1.msra.mxu0 0.0
      %1016 = vmatprep.subr.mxu0 0.0
      %1017 = vmatpush1.msra.mxu0 0.0
      %1018 = vmatprep.subr.mxu0 0.0
      %1019 = vmatpush1.msra.mxu0 0.0
      %1020 = vmatprep.subr.mxu0 0.0
      %1021 = vmatpush1.msra.mxu0 0.0
      %1022 = vmatprep.subr.mxu0 0.0
      %1023 = vmatpush1.msra.mxu0 0.0
      %1024 = vmatprep.subr.mxu0 0.0
      %1025 = vmatpush1.msra.mxu0 0.0
      %1026 = vmatprep.subr.mxu0 0.0
      %1027 = vmatpush1.msra.mxu0 0.0
      %1028 = vmatprep.subr.mxu0 0.0
      %1029 = vmatpush1.msra.mxu0 0.0
      %1030 = vmatprep.subr.mxu0 0.0
      %1031 = vmatpush1.msra.mxu0 0.0
      %1032 = vmatprep.subr.mxu0 0.0
      %1033 = vmatpush1.msra.mxu0 0.0
      %1034 = vmatprep.subr.mxu0 0.0
      %1035 = vmatpush1.msra.mxu0 0.0
      %1036 = vmatprep.subr.mxu0 0.0
      %1037 = vmatpush1.msra.mxu0 0.0
      %1038 = vmatprep.subr.mxu0 0.0
      %1039 = vmatpush1.msra.mxu0 0.0
      %1040 = vmatprep.subr.mxu0 0.0
      %1041 = vmatpush1.msra.mxu0 0.0
      %1042 = vmatprep.subr.mxu0 0.0
      %1043 = vmatpush1.msra.mxu0 0.0
      %1044 = vmatprep.subr.mxu0 0.0
      %1045 = vmatpush1.msra.mxu0 0.0
      %1046 = vmatprep.subr.mxu0 0.0
      %1047 = vmatpush1.msra.mxu0 0.0
      %1048 = vmatprep.subr.mxu0 0.0
      %1049 = vmatpush1.msra.mxu0 0.0
      %1050 = vmatprep.subr.mxu0 0.0
      %1051 = vmatpush1.msra.mxu0 0.0
      %1052 = vmatprep.subr.mxu0 0.0
      %1053 = vmatpush1.msra.mxu0 0.0
      %1054 = vmatprep.subr.mxu0 0.0
      %1055 = vmatpush1.msra.mxu0 0.0
      %1056 = vmatprep.subr.mxu0 0.0
      %1057 = vmatpush1.msra.mxu0 0.0
      %1058 = vmatprep.subr.mxu0 0.0
      %1059 = vmatpush1.msra.mxu0 0.0
      %1060 = vmatprep.subr.mxu0 0.0
      %1061 = vmatpush1.msra.mxu0 0.0
      %1062 = vmatprep.subr.mxu0 0.0
      %1063 = vmatpush1.msra.mxu0 0.0
      %1064 = vmatprep.subr.mxu0 0.0
      %1065 = vmatpush1.msra.mxu0 0.0
      %1066 = vmatprep.subr.mxu0 0.0
      %1067 = vmatpush1.msra.mxu0 0.0
      %1068 = vmatprep.mubr.f32.mxu0 0.0
      %1069 = vmatmul.mubr.f32.gmra.mrb[0].mxu0 %v1002
      %v1070 = vpop.f32.mrb[0].mxu0
      %v1071 = vadd.f32 0.0, %v1070
      %v1072 = vpop.f32.mrb[0].mxu0
      %1073 = vdwg.mxu0
      %1075 = vrot.lane.b32.xlu0 %v737, 8
      %v1076 = vpop.permute.xlu0 %1075
      %1079 = vrot.lane.b32.xlu0 %v904, 16
      %v1080 = vpop.permute.xlu0 %1079
      %1083 = vrot.lane.b32.xlu0 %v1071, 24
      %v1084 = vpop.permute.xlu0 %1083
      %v1086 = vsel %vm409, %v570, %v1076
      %vm1087 = vcmask 130048
      %v1088 = vsel %vm1087, %v1086, %v1080
      %vm1089 = vcmask 195584
      %v1090 = vsel %vm1089, %v1088, %v1084
      %v1091 = vld [vmem:[%s4] sm:$0xff]
      %v1092 = vld [vmem:[%s4 + $0x8] sm:$0xff]
      %v1093 = vld [vmem:[%s4 + $0x10] sm:$0xff]
      %v1094 = vld [vmem:[%s4 + $0x18] sm:$0xff]
      %v1095 = vld [vmem:[%s5] sm:$0x1]
      %v1097 = vlaneseq
      %v1098 = vshrl.u32 %v1097, 7
      %v1099 = vsub.s32 0, %v1098
      %v1100 = vrot.slane %v1095, %v1099
      %v1103 = vsel %vm330, %v1090, 0
      %1105 = vmatprep.subr.mxu0 0.0
      %1106 = vmatpush1.msra.mxu0 %v1091
      %1107 = vmatprep.subr.mxu0 0.0
      %1108 = vmatpush1.msra.mxu0 %v1092
      %1109 = vmatprep.subr.mxu0 0.0
      %1110 = vmatpush1.msra.mxu0 %v1093
      %1111 = vmatprep.subr.mxu0 0.0
      %1112 = vmatpush1.msra.mxu0 %v1094
      %1113 = vmatprep.subr.mxu0 0.0
      %1114 = vmatpush1.msra.mxu0 0.0
      %1115 = vmatprep.subr.mxu0 0.0
      %1116 = vmatpush1.msra.mxu0 0.0
      %1117 = vmatprep.subr.mxu0 0.0
      %1118 = vmatpush1.msra.mxu0 0.0
      %1119 = vmatprep.subr.mxu0 0.0
      %1120 = vmatpush1.msra.mxu0 0.0
      %1121 = vmatprep.subr.mxu0 0.0
      %1122 = vmatpush1.msra.mxu0 0.0
      %1123 = vmatprep.subr.mxu0 0.0
      %1124 = vmatpush1.msra.mxu0 0.0
      %1125 = vmatprep.subr.mxu0 0.0
      %1126 = vmatpush1.msra.mxu0 0.0
      %1127 = vmatprep.subr.mxu0 0.0
      %1128 = vmatpush1.msra.mxu0 0.0
      %1129 = vmatprep.subr.mxu0 0.0
      %1130 = vmatpush1.msra.mxu0 0.0
      %1131 = vmatprep.subr.mxu0 0.0
      %1132 = vmatpush1.msra.mxu0 0.0
      %1133 = vmatprep.subr.mxu0 0.0
      %1134 = vmatpush1.msra.mxu0 0.0
      %1135 = vmatprep.subr.mxu0 0.0
      %1136 = vmatpush1.msra.mxu0 0.0
      %1137 = vmatprep.subr.mxu0 0.0
      %1138 = vmatpush1.msra.mxu0 0.0
      %1139 = vmatprep.subr.mxu0 0.0
      %1140 = vmatpush1.msra.mxu0 0.0
      %1141 = vmatprep.subr.mxu0 0.0
      %1142 = vmatpush1.msra.mxu0 0.0
      %1143 = vmatprep.subr.mxu0 0.0
      %1144 = vmatpush1.msra.mxu0 0.0
      %1145 = vmatprep.subr.mxu0 0.0
      %1146 = vmatpush1.msra.mxu0 0.0
      %1147 = vmatprep.subr.mxu0 0.0
      %1148 = vmatpush1.msra.mxu0 0.0
      %1149 = vmatprep.subr.mxu0 0.0
      %1150 = vmatpush1.msra.mxu0 0.0
      %1151 = vmatprep.subr.mxu0 0.0
      %1152 = vmatpush1.msra.mxu0 0.0
      %1153 = vmatprep.subr.mxu0 0.0
      %1154 = vmatpush1.msra.mxu0 0.0
      %1155 = vmatprep.subr.mxu0 0.0
      %1156 = vmatpush1.msra.mxu0 0.0
      %1157 = vmatprep.subr.mxu0 0.0
      %1158 = vmatpush1.msra.mxu0 0.0
      %1159 = vmatprep.subr.mxu0 0.0
      %1160 = vmatpush1.msra.mxu0 0.0
      %1161 = vmatprep.subr.mxu0 0.0
      %1162 = vmatpush1.msra.mxu0 0.0
      %1163 = vmatprep.subr.mxu0 0.0
      %1164 = vmatpush1.msra.mxu0 0.0
      %1165 = vmatprep.subr.mxu0 0.0
      %1166 = vmatpush1.msra.mxu0 0.0
      %1167 = vmatprep.subr.mxu0 0.0
      %1168 = vmatpush1.msra.mxu0 0.0
      %1169 = vmatprep.mubr.f32.mxu0 0.0
      %1170 = vmatmul.mubr.f32.gmra.mrb[0].mxu0 %v1103
      %v1171 = vpop.f32.mrb[0].mxu0
      %v1172 = vadd.f32 %v1100, %v1171
      %v1173 = vpop.f32.mrb[0].mxu0
      %1174 = vdwg.mxu0
      %v1175 = vadd.f32 %v318, %v1172
      %v1176 = vsel %vm330, %v1175, 0.0
      %1177 = vadd.xlane.f32.xlu0 %v1176
      %v1178 = vpop.xlane.xlu0 %1177
      %v1179 = vrcp.pop 32.0
      %v1180 = vmul.f32 %v1178, %v1179
      %v1181 = vsub.f32 %v1175, %v1180
      %v1182 = vmul.f32 %v1181, %v1181
      %v1183 = vsel %vm330, %v1182, 0.0
      %1184 = vadd.xlane.f32.xlu0 %v1183
      %v1185 = vpop.xlane.xlu0 %1184
      %v1186 = vmul.f32 %v1185, %v1179
      %v1187 = vadd.f32 %v1186, 1e-05
      %v1188 = vrsqrt.pop %v1187
      %v1189 = vmul.f32 %v1181, %v1188
      %v1190 = vld [vmem:[%s6] sm:$0x1]
      %v1192 = vlaneseq
      %v1193 = vshrl.u32 %v1192, 7
      %v1194 = vsub.s32 0, %v1193
      %v1195 = vrot.slane %v1190, %v1194
      %v1197 = vmul.f32 %v1189, %v1195
      %v1198 = vld [vmem:[%s7] sm:$0x1]
      %v1200 = vlaneseq
      %v1201 = vshrl.u32 %v1200, 7
      %v1202 = vsub.s32 0, %v1201
      %v1203 = vrot.slane %v1198, %v1202
      %v1205 = vadd.f32 %v1197, %v1203
      %1206 = vst.msk [vmem:[%s317] sm:$0xff] %vm330, %v1205
      %p1207 = scmp.lt.s32.totalorder %s19, 1
      %s1208 = scalar_select %p1207, %s19, 1
      %s1209 = smul.addr %s1208, 8
      %s1210 = scalar_lea.vmem %s8, %s1209
      // Predicated region
      $region53: #{encoder_fwd.6} parent=51 // pred_check
        %p1211 = pneg %p215
      $region54: #{encoder_fwd.6} parent=51 // pred_check_branch
        %1213 = sbr.rel (%p1211) target = $region56
      $region55: #{encoder_fwd.6} parent=51 // pred_region
        _
      $region56: #{encoder_fwd.6} parent=51 // pred_fallthru
        _
    $region52: #{encoder_fwd.6} parent=5 // pred_fallthru
      _
    %p1214 = scmp.le.s32.totalorder 2, %s14
    // Predicated region
    $region57: #{encoder_fwd.6} parent=5 // pred_check
      %p1215 = pneg %p1214
    $region58: #{encoder_fwd.6} parent=5 // pred_check_branch
      %1217 = sbr.rel (%p1215) target = $region60
    $region59: #{encoder_fwd.6} parent=5 // pred_region
      %s1218 = ssub.s32 %s14, 2
      // Predicated region
      $region61: #{encoder_fwd.6} parent=59 // pred_check
        %p1219 = pneg %p221
      $region62: #{encoder_fwd.6} parent=59 // pred_check_branch
        %1221 = sbr.rel (%p1219) target = $region64
      $region63: #{encoder_fwd.6} parent=59 // pred_region
        %p1222 = scmp.lt.s32.totalorder %s20, 1
        %s1223 = scalar_select %p1222, %s20, 1
        %s1224 = smul.addr %s1223, 8
        %s1225 = scalar_lea.vmem %s8, %s1224
      $region64: #{encoder_fwd.6} parent=59 // pred_fallthru
        _
    $region60: #{encoder_fwd.6} parent=5 // pred_fallthru
      _
  $region6: #{encoder_fwd.6} parent=0 // loop_footer
    %s18 = sadd.s32 1, %s14
  $region7: #{encoder_fwd.6} parent=0 // loop_footer_branch
    %13 = sbr.rel target = $region3
  $region8: #{encoder_fwd.6} parent=0 // loop_exit
    _

</llo_original>
